<compile_context>
chip_gen: v7x
topology: tpu7x:2x2x1
jax: 0.10.0
libtpu: 0.0.40
codegen_flags: <defaults>
</compile_context>

<pallas_src>
import jax
import jax.numpy as jnp
from jax import lax
from jax.experimental import pallas as pl
from jax.experimental.pallas import tpu as pltpu

# Geometry implied by the module (fc1 expects 5*5*32 features -> 28x28, 1-channel input).
C1, C2 = 16, 32
H_IN = W_IN = 28
HP1 = 13                 # after conv1 (26x26) + 2x2 max pool
H2 = 11                  # conv2 output spatial size
HP2 = 5                  # after 2x2 avg pool
HALF1 = 256              # pooled1 lanes: 13 cols * 16 ch = 208, padded to 256
LANES1 = 1024            # fused conv1 lanes: [even-row|odd-row] x [even-col|odd-col] x 256
K1 = 4 * W_IN            # 112 (4 input rows concatenated along K)
K1PAD = 128              # padded to MXU-friendly depth
LANES2 = 384             # conv2 lanes: 11 cols * 32 ch = 352, padded to 384
K2 = 3 * HALF1           # 768 (three row bands concatenated along K)
KFC1 = HP2 * LANES2      # 1920 (five row-pair blocks concatenated along K)
MAX_BATCH_BLOCK = 32     # samples per grid step (cap keeps VMEM/vreg pressure modest)


# ----------------------------------- kernel ------------------------------------
def fused_lenet_kernel(x_ref, w1_ref, b1_ref, w2_ref, b2_ref, a1_ref,
                       fb1_ref, wfc2_ref, fb2_ref, wfc3_ref, fb3_ref, out_ref):
    # x_ref:   (13*B, 128) f32   conv1 LHS, rows ordered (q-major, sample-minor)
    # w1_ref:  (128, 1024) bf16  fused conv1 weights (3 kernel rows x 2 row parities)
    # w2_ref:  (768, 384)  bf16  fused conv2 weights (3 row bands along K)
    # a1_ref:  (1920, 128) bf16  avgpool + flatten + fc1 folded (per row-pair)
    # out_ref: (B, out_pad) f32  out_pad is a multiple of 128 (dense stores)
    B = out_ref.shape[0]
    bf16 = jnp.bfloat16

    # ---- conv1: one matmul; ReLU; 2x2 max pool = two lane-half maxes ----------
    xb = x_ref[...].astype(bf16)                                        # (13B, 128)
    acc1 = jnp.dot(xb, w1_ref[...], preferred_element_type=jnp.float32)  # (13B, 1024)
    h1 = jnp.maximum(acc1 + b1_ref[...], 0.0)
    rmax = jnp.maximum(h1[:, :LANES1 // 2], h1[:, LANES1 // 2:])        # pool row pairs
    pooled1 = jnp.maximum(rmax[:, :HALF1], rmax[:, HALF1:])             # pool col pairs (13B,256)

    # ---- conv2: K-concatenate the three row bands -> one matmul ---------------
    lhs2 = jnp.concatenate([pooled1[0:10 * B],
                            pooled1[B:11 * B],
                            pooled1[2 * B:12 * B]], axis=1).astype(bf16)  # (10B, 768)
    acc2 = jnp.dot(lhs2, w2_ref[...], preferred_element_type=jnp.float32)  # (10B, 384)
    relu2 = jnp.maximum(acc2 + b2_ref[...], 0.0)

    # ---- avgpool row-pair sums (linear) + folded fc1 as ONE matmul ------------
    parts = [relu2[2 * pr * B:(2 * pr + 1) * B]
             + relu2[(2 * pr + 1) * B:(2 * pr + 2) * B] for pr in range(HP2)]
    lhs3 = jnp.concatenate(parts, axis=1).astype(bf16)                  # (B, 1920)
    h3 = jnp.maximum(jnp.dot(lhs3, a1_ref[...],
                             preferred_element_type=jnp.float32) + fb1_ref[...], 0.0)
    # Dropout(p=0.25) is identity at inference time.
    h4 = jnp.maximum(jnp.dot(h3.astype(bf16), wfc2_ref[...],
                             preferred_element_type=jnp.float32) + fb2_ref[...], 0.0)
    out_ref[...] = (jnp.dot(h4.astype(bf16), wfc3_ref[...],
                            preferred_element_type=jnp.float32) + fb3_ref[...])


# ---------------------- one-time weight layout preparation ----------------------
def prepare_params(params):
    """Convert PyTorch-layout weights into the kernel's fused / padded bf16 layout."""
    (w1, b1, w2, b2, fw1, fb1, fw2, fb2, fw3, fb3) = params
    f32, bf16 = jnp.float32, jnp.bfloat16

    # --- conv1 band matrices W1b[di] (28, 512): lanes = [even cols | odd cols] x 16ch
    k_idx = jnp.arange(H_IN)[:, None]                 # (28, 1)
    lh = jnp.arange(HALF1)[None, :]                   # (1, 256)
    p1 = lh // C1
    c1 = lh % C1
    w1b = []
    for di in range(3):
        wg = w1[:, 0, di, :]                          # (16, 3): [c, dj]
        halves = []
        for parity in (0, 1):
            j = 2 * p1 + parity
            d = k_idx - j                             # (28, 256)
            ok = (d >= 0) & (d <= 2) & (p1 <= HP1 - 1)
            halves.append(jnp.where(ok, wg[c1, jnp.clip(d, 0, 2)], 0.0))
        w1b.append(jnp.concatenate(halves, axis=1).astype(f32))   # (28, 512)
    # fused conv1 RHS: rows 0..27 <- input row 2q, 28..55 <- 2q+1, 56..83 <- 2q+2,
    # 84..111 <- 2q+3; columns 0..511 even output row, 512..1023 odd output row.
    z = jnp.zeros((H_IN, 2 * HALF1), f32)
    col_even = jnp.concatenate([w1b[0], w1b[1], w1b[2], z], axis=0)   # (112, 512)
    col_odd = jnp.concatenate([z, w1b[0], w1b[1], w1b[2]], axis=0)    # (112, 512)
    W1 = jnp.pad(jnp.concatenate([col_even, col_odd], axis=1),
                 ((0, K1PAD - K1), (0, 0))).astype(bf16)              # (128, 1024)
    bh = jnp.where(jnp.arange(HALF1) // C1 <= HP1 - 1,
                   jnp.tile(b1, HALF1 // C1), 0.0)
    b1row = jnp.tile(jnp.concatenate([bh, bh]), 2).reshape(1, LANES1).astype(f32)

    # --- conv2 band matrices (256, 384) per kernel row, stacked along K -> (768, 384)
    L2 = jnp.arange(HALF1)
    p2 = L2 // C1
    c2 = L2 % C1
    j2 = jnp.arange(H2)
    dp = p2[:, None, None] - j2[None, :, None]        # (256, 11, 1)
    ok2 = (dp >= 0) & (dp <= 2) & (p2[:, None, None] <= HP1 - 1)
    dj = jnp.clip(dp, 0, 2)
    o_idx = jnp.arange(C2)
    w2b = []
    for di in range(3):
        wg = w2[:, :, di, :]                          # (32, 16, 3): [o, c, dj]
        vals = wg[o_idx[None, None, :], c2[:, None, None], dj]   # (256, 11, 32)
        band = jnp.where(ok2, vals, 0.0).reshape(HALF1, H2 * C2)
        w2b.append(jnp.pad(band, ((0, 0), (0, LANES2 - H2 * C2))))
    W2 = jnp.concatenate(w2b, axis=0).astype(bf16)                    # (768, 384)
    b2row = jnp.pad(jnp.tile(b2, H2),
                    (0, LANES2 - H2 * C2)).reshape(1, LANES2).astype(f32)

    # --- avgpool + NCHW flatten + fc1 folded PER ROW PAIR (compact): (1920, 128)
    # A1[pr, 32*j2+o, f] = 0.25 * fw1[f, 25*o + 5*pr + (j2//2)]  (j2 <= 9, else 0)
    nf1 = fw1.shape[0]
    fw1_r = fw1.reshape(nf1, C2, HP2, HP2)            # [f, o, pr, pc]
    Lm = jnp.arange(LANES2)
    j2m = Lm // C2
    om = Lm % C2
    ok3 = j2m <= 9
    pc = jnp.clip(j2m // 2, 0, HP2 - 1)
    pr = jnp.arange(HP2)
    vals = fw1_r[jnp.arange(nf1)[None, None, :],
                 om[None, :, None],
                 pr[:, None, None],
                 pc[None, :, None]]                   # (5, 384, 128)
    A1 = jnp.where(ok3[None, :, None], 0.25 * vals, 0.0)
    A1 = A1.reshape(KFC1, nf1).astype(bf16)           # (1920, 128)

    fb1row = fb1.reshape(1, -1).astype(f32)           # (1, 128)
    Wfc2 = jnp.transpose(fw2).astype(bf16)            # (128, 256)
    fb2row = fb2.reshape(1, -1).astype(f32)           # (1, 256)

    num_out = fw3.shape[0]
    out_pad = ((num_out + 127) // 128) * 128          # lane-dense (unmasked) output store
    Wfc3 = jnp.pad(jnp.transpose(fw3), ((0, 0), (0, out_pad - num_out))).astype(bf16)
    fb3row = jnp.pad(fb3, (0, out_pad - num_out)).reshape(1, out_pad).astype(f32)

    return dict(W1=W1, b1=b1row, W2=W2, b2=b2row, A1=A1, fb1=fb1row,
                Wfc2=Wfc2, fb2=fb2row, Wfc3=Wfc3, fb3=fb3row, num_out=num_out)


# ------------------------------------ wrapper -----------------------------------
def _choose_batch_block(n):
    # multiples of 8 sublanes; keep the grid >= 2 steps when possible so both
    # v7x TensorCores get work; cap to bound VMEM / vreg pressure.
    target = max(8, -(-n // 2))
    return min(MAX_BATCH_BLOCK, ((target + 7) // 8) * 8)


def pallas_forward(x_nchw, prep):
    N = x_nchw.shape[0]
    B = _choose_batch_block(N)
    G = -(-N // B)
    Np = G * B
    num_out = prep["num_out"]
    out_pad = prep["Wfc3"].shape[1]

    x = x_nchw.reshape(N, H_IN, W_IN).astype(jnp.float32)
    if Np != N:
        x = jnp.pad(x, ((0, Np - N), (0, 0), (0, 0)))
    # conv1 LHS: row (g, q, b) = [x[b,2q,:] | x[b,2q+1,:] | x[b,2q+2,:] | x[b,2q+3,:]]
    xs = jnp.stack([x[:, k:k + 2 * HP1:2, :] for k in range(4)], axis=2)   # (Np,13,4,28)
    lhs1 = jnp.pad(xs.reshape(Np, HP1, K1), ((0, 0), (0, 0), (0, K1PAD - K1)))
    lhs1 = lhs1.reshape(G, B, HP1, K1PAD).transpose(0, 2, 1, 3).reshape(G * HP1 * B, K1PAD)

    W1, b1r, W2, b2r = prep["W1"], prep["b1"], prep["W2"], prep["b2"]
    A1, fb1r = prep["A1"], prep["fb1"]
    Wfc2, fb2r, Wfc3, fb3r = prep["Wfc2"], prep["fb2"], prep["Wfc3"], prep["fb3"]

    # advisory cost estimate so XLA can schedule the wrapper prep around the call
    flops_blk = 2 * (HP1 * B * K1PAD * LANES1 + 10 * B * K2 * LANES2
                     + B * KFC1 * 128 + B * 128 * 256 + B * 256 * out_pad)
    weight_bytes = sum(int(a.size) * a.dtype.itemsize
                       for a in (W1, b1r, W2, b2r, A1, fb1r, Wfc2, fb2r, Wfc3, fb3r))
    cost = pl.CostEstimate(flops=G * flops_blk, transcendentals=0,
                           bytes_accessed=int(lhs1.size) * 4 + weight_bytes
                           + Np * out_pad * 4)

    rows_blk = HP1 * B
    out = pl.pallas_call(
        fused_lenet_kernel,
        out_shape=jax.ShapeDtypeStruct((Np, out_pad), jnp.float32),
        grid=(G,),
        in_specs=[
            pl.BlockSpec((rows_blk, K1PAD), lambda g: (g, 0)),
            pl.BlockSpec(W1.shape, lambda g: (0, 0)),
            pl.BlockSpec(b1r.shape, lambda g: (0, 0)),
            pl.BlockSpec(W2.shape, lambda g: (0, 0)),
            pl.BlockSpec(b2r.shape, lambda g: (0, 0)),
            pl.BlockSpec(A1.shape, lambda g: (0, 0)),
            pl.BlockSpec(fb1r.shape, lambda g: (0, 0)),
            pl.BlockSpec(Wfc2.shape, lambda g: (0, 0)),
            pl.BlockSpec(fb2r.shape, lambda g: (0, 0)),
            pl.BlockSpec(Wfc3.shape, lambda g: (0, 0)),
            pl.BlockSpec(fb3r.shape, lambda g: (0, 0)),
        ],
        out_specs=pl.BlockSpec((B, out_pad), lambda g: (g, 0)),
        compiler_params=pltpu.CompilerParams(
            dimension_semantics=("parallel",),
            vmem_limit_bytes=32 * 1024 * 1024,
        ),
        cost_estimate=cost,
    )(lhs1, W1, b1r, W2, b2r, A1, fb1r, Wfc2, fb2r, Wfc3, fb3r)
    return out[:N, :num_out]


# ---------------------- pure-JAX reference (for sanity check) --------------------
def reference_forward(x_nchw, params):
    (w1, b1, w2, b2, fw1, fb1, fw2, fb2, fw3, fb3) = params
    dn = ('NCHW', 'OIHW', 'NCHW')
    y = lax.conv_general_dilated(x_nchw, w1, (1, 1), 'VALID', dimension_numbers=dn,
                                 precision=lax.Precision.HIGHEST)
    y = jnp.maximum(y + b1[None, :, None, None], 0.0)
    y = lax.reduce_window(y, jnp.array(-jnp.inf, jnp.float32), lax.max,
                          (1, 1, 2, 2), (1, 1, 2, 2), 'VALID')
    y = lax.conv_general_dilated(y, w2, (1, 1), 'VALID', dimension_numbers=dn,
                                 precision=lax.Precision.HIGHEST)
    y = jnp.maximum(y + b2[None, :, None, None], 0.0)
    y = lax.reduce_window(y, jnp.array(0.0, jnp.float32), lax.add,
                          (1, 1, 2, 2), (1, 1, 2, 2), 'VALID') * 0.25
    y = y.reshape(y.shape[0], -1)
    y = jnp.maximum(jnp.dot(y, fw1.T, precision=lax.Precision.HIGHEST) + fb1, 0.0)
    y = jnp.maximum(jnp.dot(y, fw2.T, precision=lax.Precision.HIGHEST) + fb2, 0.0)
    return jnp.dot(y, fw3.T, precision=lax.Precision.HIGHEST) + fb3


def init_params(key, num_output):
    ks = jax.random.split(key, 10)

    def n(k, shape, scale):
        return (scale * jax.random.normal(k, shape)).astype(jnp.float32)

    w1 = n(ks[0], (16, 1, 3, 3), 1.0 / 3.0)           # fan_in = 1*3*3
    b1 = n(ks[1], (16,), 0.1)
    w2 = n(ks[2], (32, 16, 3, 3), 1.0 / 12.0)         # fan_in = 16*3*3
    b2 = n(ks[3], (32,), 0.1)
    fw1 = n(ks[4], (128, 800), 800 ** -0.5)
    fb1 = n(ks[5], (128,), 0.1)
    fw2 = n(ks[6], (256, 128), 128 ** -0.5)
    fb2 = n(ks[7], (256,), 0.1)
    fw3 = n(ks[8], (num_output, 256), 256 ** -0.5)
    fb3 = n(ks[9], (num_output,), 0.1)
    return (w1, b1, w2, b2, fw1, fb1, fw2, fb2, fw3, fb3)


if __name__ == "__main__":
    num_output = 10
    key = jax.random.PRNGKey(0)
    k_x, k_p = jax.random.split(key)
    # fc1 expects 5*5*32 features => 28x28 single-channel input (MNIST-like).
    # Batch 16 => two blocks of 8 => a 2-step "parallel" grid (both v7x TCs busy).
    x = jax.random.normal(k_x, (16, 1, 28, 28), dtype=jnp.float32)
    params = init_params(k_p, num_output)
    prep = prepare_params(params)          # one-time weight layout conversion

    out = jax.block_until_ready(pallas_forward(x, prep))
    assert out.shape == (16, num_output) and out.dtype == jnp.float32

    ref = jax.block_until_ready(reference_forward(x, params))
    max_diff = float(jnp.max(jnp.abs(out - ref)))
    # bf16 matmul operands (f32 accumulate) over 5 layers: allow a bf16-level tolerance.
    assert max_diff < 3e-2, f"mismatch vs reference: {max_diff}"

    print("KERNEL_OK")
</pallas_src>

<mosaic_0001>
module attributes {stable_mosaic.version = 11 : i64} {
  func.func @fused_lenet_kernel(%arg0: i32, %arg1: memref<104x128xf32, #tpu.memory_space<vmem>>, %arg2: memref<128x1024xbf16, #tpu.memory_space<vmem>>, %arg3: memref<1x1024xf32, #tpu.memory_space<vmem>>, %arg4: memref<768x384xbf16, #tpu.memory_space<vmem>>, %arg5: memref<1x384xf32, #tpu.memory_space<vmem>>, %arg6: memref<1920x128xbf16, #tpu.memory_space<vmem>>, %arg7: memref<1x128xf32, #tpu.memory_space<vmem>>, %arg8: memref<128x256xbf16, #tpu.memory_space<vmem>>, %arg9: memref<1x256xf32, #tpu.memory_space<vmem>>, %arg10: memref<256x128xbf16, #tpu.memory_space<vmem>>, %arg11: memref<1x128xf32, #tpu.memory_space<vmem>>, %arg12: memref<8x128xf32, #tpu.memory_space<vmem>>) attributes {dimension_semantics = [#tpu.dimension_semantics<parallel>], iteration_bounds = array<i64: 2>, scalar_prefetch = 0 : i64, scratch_operands = 0 : i64, tpu.core_type = #tpu.core_type<tc>, window_params = [{transform_indices = @transform_0, window_bounds = array<i64: 104, 128>}, {pipeline_mode = #tpu.pipeline_mode<synchronous>, transform_indices = @transform_1, window_bounds = array<i64: 128, 1024>}, {pipeline_mode = #tpu.pipeline_mode<synchronous>, transform_indices = @transform_2, window_bounds = array<i64: 1, 1024>}, {pipeline_mode = #tpu.pipeline_mode<synchronous>, transform_indices = @transform_3, window_bounds = array<i64: 768, 384>}, {pipeline_mode = #tpu.pipeline_mode<synchronous>, transform_indices = @transform_4, window_bounds = array<i64: 1, 384>}, {pipeline_mode = #tpu.pipeline_mode<synchronous>, transform_indices = @transform_5, window_bounds = array<i64: 1920, 128>}, {pipeline_mode = #tpu.pipeline_mode<synchronous>, transform_indices = @transform_6, window_bounds = array<i64: 1, 128>}, {pipeline_mode = #tpu.pipeline_mode<synchronous>, transform_indices = @transform_7, window_bounds = array<i64: 128, 256>}, {pipeline_mode = #tpu.pipeline_mode<synchronous>, transform_indices = @transform_8, window_bounds = array<i64: 1, 256>}, {pipeline_mode = #tpu.pipeline_mode<synchronous>, transform_indices = @transform_9, window_bounds = array<i64: 256, 128>}, {pipeline_mode = #tpu.pipeline_mode<synchronous>, transform_indices = @transform_10, window_bounds = array<i64: 1, 128>}, {transform_indices = @transform_11, window_bounds = array<i64: 8, 128>}]} {
    %c0 = arith.constant 0 : index
    %c0_0 = arith.constant 0 : index
    %0 = vector.load %arg1[%c0, %c0_0] : memref<104x128xf32, #tpu.memory_space<vmem>>, vector<104x128xf32>
    %1 = arith.truncf %0 : vector<104x128xf32> to vector<104x128xbf16>
    %c0_1 = arith.constant 0 : index
    %c0_2 = arith.constant 0 : index
    %2 = vector.load %arg2[%c0_1, %c0_2] : memref<128x1024xbf16, #tpu.memory_space<vmem>>, vector<128x1024xbf16>
    %cst = arith.constant dense<0.000000e+00> : vector<104x1024xf32>
    %3 = tpu.matmul %1, %2, %cst {dimension_numbers = #tpu.dot_dimension_numbers<[1], [0], [0], [1], [0, 0, 1, 1], [], []>} : vector<104x128xbf16>, vector<128x1024xbf16>, vector<104x1024xf32> -> vector<104x1024xf32>
    %c0_3 = arith.constant 0 : index
    %c0_4 = arith.constant 0 : index
    %4 = vector.load %arg3[%c0_3, %c0_4] : memref<1x1024xf32, #tpu.memory_space<vmem>>, vector<1x1024xf32>
    %5 = vector.broadcast %4 : vector<1x1024xf32> to vector<104x1024xf32>
    %6 = arith.addf %3, %5 : vector<104x1024xf32>
    %cst_5 = arith.constant 0.000000e+00 : f32
    %7 = vector.broadcast %cst_5 : f32 to vector<104x1024xf32>
    %8 = arith.maximumf %6, %7 : vector<104x1024xf32>
    %9 = vector.extract_strided_slice %8 {offsets = [0, 0], sizes = [104, 512], strides = [1, 1]} : vector<104x1024xf32> to vector<104x512xf32>
    %10 = vector.extract_strided_slice %8 {offsets = [0, 512], sizes = [104, 512], strides = [1, 1]} : vector<104x1024xf32> to vector<104x512xf32>
    %11 = arith.maximumf %9, %10 : vector<104x512xf32>
    %12 = vector.extract_strided_slice %11 {offsets = [0, 0], sizes = [104, 256], strides = [1, 1]} : vector<104x512xf32> to vector<104x256xf32>
    %13 = vector.extract_strided_slice %11 {offsets = [0, 256], sizes = [104, 256], strides = [1, 1]} : vector<104x512xf32> to vector<104x256xf32>
    %14 = arith.maximumf %12, %13 : vector<104x256xf32>
    %15 = vector.extract_strided_slice %14 {offsets = [0, 0], sizes = [80, 256], strides = [1, 1]} : vector<104x256xf32> to vector<80x256xf32>
    %16 = vector.extract_strided_slice %14 {offsets = [8, 0], sizes = [80, 256], strides = [1, 1]} : vector<104x256xf32> to vector<80x256xf32>
    %17 = vector.extract_strided_slice %14 {offsets = [16, 0], sizes = [80, 256], strides = [1, 1]} : vector<104x256xf32> to vector<80x256xf32>
    %18 = tpu.concatenate %15, %16, %17 in 1 : vector<80x256xf32>, vector<80x256xf32>, vector<80x256xf32> -> vector<80x768xf32>
    %19 = arith.truncf %18 : vector<80x768xf32> to vector<80x768xbf16>
    %c0_6 = arith.constant 0 : index
    %c0_7 = arith.constant 0 : index
    %20 = vector.load %arg4[%c0_6, %c0_7] : memref<768x384xbf16, #tpu.memory_space<vmem>>, vector<768x384xbf16>
    %cst_8 = arith.constant dense<0.000000e+00> : vector<80x384xf32>
    %21 = tpu.matmul %19, %20, %cst_8 {dimension_numbers = #tpu.dot_dimension_numbers<[1], [0], [0], [1], [0, 0, 1, 1], [], []>} : vector<80x768xbf16>, vector<768x384xbf16>, vector<80x384xf32> -> vector<80x384xf32>
    %c0_9 = arith.constant 0 : index
    %c0_10 = arith.constant 0 : index
    %22 = vector.load %arg5[%c0_9, %c0_10] : memref<1x384xf32, #tpu.memory_space<vmem>>, vector<1x384xf32>
    %23 = vector.broadcast %22 : vector<1x384xf32> to vector<80x384xf32>
    %24 = arith.addf %21, %23 : vector<80x384xf32>
    %cst_11 = arith.constant 0.000000e+00 : f32
    %25 = vector.broadcast %cst_11 : f32 to vector<80x384xf32>
    %26 = arith.maximumf %24, %25 : vector<80x384xf32>
    %27 = vector.extract_strided_slice %26 {offsets = [0, 0], sizes = [8, 384], strides = [1, 1]} : vector<80x384xf32> to vector<8x384xf32>
    %28 = vector.extract_strided_slice %26 {offsets = [8, 0], sizes = [8, 384], strides = [1, 1]} : vector<80x384xf32> to vector<8x384xf32>
    %29 = arith.addf %27, %28 : vector<8x384xf32>
    %30 = vector.extract_strided_slice %26 {offsets = [16, 0], sizes = [8, 384], strides = [1, 1]} : vector<80x384xf32> to vector<8x384xf32>
    %31 = vector.extract_strided_slice %26 {offsets = [24, 0], sizes = [8, 384], strides = [1, 1]} : vector<80x384xf32> to vector<8x384xf32>
    %32 = arith.addf %30, %31 : vector<8x384xf32>
    %33 = vector.extract_strided_slice %26 {offsets = [32, 0], sizes = [8, 384], strides = [1, 1]} : vector<80x384xf32> to vector<8x384xf32>
    %34 = vector.extract_strided_slice %26 {offsets = [40, 0], sizes = [8, 384], strides = [1, 1]} : vector<80x384xf32> to vector<8x384xf32>
    %35 = arith.addf %33, %34 : vector<8x384xf32>
    %36 = vector.extract_strided_slice %26 {offsets = [48, 0], sizes = [8, 384], strides = [1, 1]} : vector<80x384xf32> to vector<8x384xf32>
    %37 = vector.extract_strided_slice %26 {offsets = [56, 0], sizes = [8, 384], strides = [1, 1]} : vector<80x384xf32> to vector<8x384xf32>
    %38 = arith.addf %36, %37 : vector<8x384xf32>
    %39 = vector.extract_strided_slice %26 {offsets = [64, 0], sizes = [8, 384], strides = [1, 1]} : vector<80x384xf32> to vector<8x384xf32>
    %40 = vector.extract_strided_slice %26 {offsets = [72, 0], sizes = [8, 384], strides = [1, 1]} : vector<80x384xf32> to vector<8x384xf32>
    %41 = arith.addf %39, %40 : vector<8x384xf32>
    %42 = tpu.concatenate %29, %32, %35, %38, %41 in 1 : vector<8x384xf32>, vector<8x384xf32>, vector<8x384xf32>, vector<8x384xf32>, vector<8x384xf32> -> vector<8x1920xf32>
    %43 = arith.truncf %42 : vector<8x1920xf32> to vector<8x1920xbf16>
    %c0_12 = arith.constant 0 : index
    %c0_13 = arith.constant 0 : index
    %44 = vector.load %arg6[%c0_12, %c0_13] : memref<1920x128xbf16, #tpu.memory_space<vmem>>, vector<1920x128xbf16>
    %cst_14 = arith.constant dense<0.000000e+00> : vector<8x128xf32>
    %45 = tpu.matmul %43, %44, %cst_14 {dimension_numbers = #tpu.dot_dimension_numbers<[1], [0], [0], [1], [0, 0, 1, 1], [], []>} : vector<8x1920xbf16>, vector<1920x128xbf16>, vector<8x128xf32> -> vector<8x128xf32>
    %c0_15 = arith.constant 0 : index
    %c0_16 = arith.constant 0 : index
    %46 = vector.load %arg7[%c0_15, %c0_16] : memref<1x128xf32, #tpu.memory_space<vmem>>, vector<1x128xf32>
    %47 = vector.broadcast %46 : vector<1x128xf32> to vector<8x128xf32>
    %48 = arith.addf %45, %47 : vector<8x128xf32>
    %cst_17 = arith.constant 0.000000e+00 : f32
    %49 = vector.broadcast %cst_17 : f32 to vector<8x128xf32>
    %50 = arith.maximumf %48, %49 : vector<8x128xf32>
    %51 = arith.truncf %50 : vector<8x128xf32> to vector<8x128xbf16>
    %c0_18 = arith.constant 0 : index
    %c0_19 = arith.constant 0 : index
    %52 = vector.load %arg8[%c0_18, %c0_19] : memref<128x256xbf16, #tpu.memory_space<vmem>>, vector<128x256xbf16>
    %cst_20 = arith.constant dense<0.000000e+00> : vector<8x256xf32>
    %53 = tpu.matmul %51, %52, %cst_20 {dimension_numbers = #tpu.dot_dimension_numbers<[1], [0], [0], [1], [0, 0, 1, 1], [], []>} : vector<8x128xbf16>, vector<128x256xbf16>, vector<8x256xf32> -> vector<8x256xf32>
    %c0_21 = arith.constant 0 : index
    %c0_22 = arith.constant 0 : index
    %54 = vector.load %arg9[%c0_21, %c0_22] : memref<1x256xf32, #tpu.memory_space<vmem>>, vector<1x256xf32>
    %55 = vector.broadcast %54 : vector<1x256xf32> to vector<8x256xf32>
    %56 = arith.addf %53, %55 : vector<8x256xf32>
    %cst_23 = arith.constant 0.000000e+00 : f32
    %57 = vector.broadcast %cst_23 : f32 to vector<8x256xf32>
    %58 = arith.maximumf %56, %57 : vector<8x256xf32>
    %59 = arith.truncf %58 : vector<8x256xf32> to vector<8x256xbf16>
    %c0_24 = arith.constant 0 : index
    %c0_25 = arith.constant 0 : index
    %60 = vector.load %arg10[%c0_24, %c0_25] : memref<256x128xbf16, #tpu.memory_space<vmem>>, vector<256x128xbf16>
    %cst_26 = arith.constant dense<0.000000e+00> : vector<8x128xf32>
    %61 = tpu.matmul %59, %60, %cst_26 {dimension_numbers = #tpu.dot_dimension_numbers<[1], [0], [0], [1], [0, 0, 1, 1], [], []>} : vector<8x256xbf16>, vector<256x128xbf16>, vector<8x128xf32> -> vector<8x128xf32>
    %c0_27 = arith.constant 0 : index
    %c0_28 = arith.constant 0 : index
    %62 = vector.load %arg11[%c0_27, %c0_28] : memref<1x128xf32, #tpu.memory_space<vmem>>, vector<1x128xf32>
    %63 = vector.broadcast %62 : vector<1x128xf32> to vector<8x128xf32>
    %64 = arith.addf %61, %63 : vector<8x128xf32>
    %c0_29 = arith.constant 0 : index
    %c0_30 = arith.constant 0 : index
    %65 = vector.load %arg12[%c0_29, %c0_30] : memref<8x128xf32, #tpu.memory_space<vmem>>, vector<8x128xf32>
    tpu.vector_store %arg12[%c0_29, %c0_30], %64 {strides = array<i32>} : memref<8x128xf32, #tpu.memory_space<vmem>>, vector<8x128xf32>,
    return
  }
  func.func @transform_0(%arg0: i32) -> (i32, i32) {
    %c0_i32 = arith.constant 0 : i32
    %c0_i32_0 = arith.constant 0 : i32
    return %arg0, %c0_i32 : i32, i32
  }
  func.func @transform_1(%arg0: i32) -> (i32, i32) {
    %c0_i32 = arith.constant 0 : i32
    %c0_i32_0 = arith.constant 0 : i32
    %c0_i32_1 = arith.constant 0 : i32
    return %c0_i32, %c0_i32_0 : i32, i32
  }
  func.func @transform_2(%arg0: i32) -> (i32, i32) {
    %c0_i32 = arith.constant 0 : i32
    %c0_i32_0 = arith.constant 0 : i32
    %c0_i32_1 = arith.constant 0 : i32
    return %c0_i32, %c0_i32_0 : i32, i32
  }
  func.func @transform_3(%arg0: i32) -> (i32, i32) {
    %c0_i32 = arith.constant 0 : i32
    %c0_i32_0 = arith.constant 0 : i32
    %c0_i32_1 = arith.constant 0 : i32
    return %c0_i32, %c0_i32_0 : i32, i32
  }
  func.func @transform_4(%arg0: i32) -> (i32, i32) {
    %c0_i32 = arith.constant 0 : i32
    %c0_i32_0 = arith.constant 0 : i32
    %c0_i32_1 = arith.constant 0 : i32
    return %c0_i32, %c0_i32_0 : i32, i32
  }
  func.func @transform_5(%arg0: i32) -> (i32, i32) {
    %c0_i32 = arith.constant 0 : i32
    %c0_i32_0 = arith.constant 0 : i32
    %c0_i32_1 = arith.constant 0 : i32
    return %c0_i32, %c0_i32_0 : i32, i32
  }
  func.func @transform_6(%arg0: i32) -> (i32, i32) {
    %c0_i32 = arith.constant 0 : i32
    %c0_i32_0 = arith.constant 0 : i32
    %c0_i32_1 = arith.constant 0 : i32
    return %c0_i32, %c0_i32_0 : i32, i32
  }
  func.func @transform_7(%arg0: i32) -> (i32, i32) {
    %c0_i32 = arith.constant 0 : i32
    %c0_i32_0 = arith.constant 0 : i32
    %c0_i32_1 = arith.constant 0 : i32
    return %c0_i32, %c0_i32_0 : i32, i32
  }
  func.func @transform_8(%arg0: i32) -> (i32, i32) {
    %c0_i32 = arith.constant 0 : i32
    %c0_i32_0 = arith.constant 0 : i32
    %c0_i32_1 = arith.constant 0 : i32
    return %c0_i32, %c0_i32_0 : i32, i32
  }
  func.func @transform_9(%arg0: i32) -> (i32, i32) {
    %c0_i32 = arith.constant 0 : i32
    %c0_i32_0 = arith.constant 0 : i32
    %c0_i32_1 = arith.constant 0 : i32
    return %c0_i32, %c0_i32_0 : i32, i32
  }
  func.func @transform_10(%arg0: i32) -> (i32, i32) {
    %c0_i32 = arith.constant 0 : i32
    %c0_i32_0 = arith.constant 0 : i32
    %c0_i32_1 = arith.constant 0 : i32
    return %c0_i32, %c0_i32_0 : i32, i32
  }
  func.func @transform_11(%arg0: i32) -> (i32, i32) {
    %c0_i32 = arith.constant 0 : i32
    %c0_i32_0 = arith.constant 0 : i32
    return %arg0, %c0_i32 : i32, i32
  }
}

</mosaic_0001>

<llo_original>
// kernel: tpu_custom_call.1
$region0: #{tpu_custom_call.1}
  #allocation0 [shape = 'u32[]', space=smem, size = 0x4, offset = 0x4, fixed_abs, tag = 'smem constant byte address 0x4 - core index']
  #allocation1 [shape = 'u32[144,128]{1,0:T(1,128)}', space=vmem, size = 0x12000, scoped, tag = 'internal scratch']
  %s0 = inlined_call_operand.hbm [shape: f32[208,128], index: 0, kind: input, shape index: {}]
  %s1 = inlined_call_operand.hbm [shape: bf16[128,1024], index: 1, kind: input, shape index: {}]
  %s2 = inlined_call_operand.hbm [shape: f32[1,1024], index: 2, kind: input, shape index: {}]
  %s3 = inlined_call_operand.hbm [shape: bf16[768,384], index: 3, kind: input, shape index: {}]
  %s4 = inlined_call_operand.vmem [shape: f32[1,384], index: 4, kind: input, shape index: {}]
  %s5 = inlined_call_operand.hbm [shape: bf16[1920,128], index: 5, kind: input, shape index: {}]
  %s6 = inlined_call_operand.vmem [shape: f32[1,128], index: 6, kind: input, shape index: {}]
  %s7 = inlined_call_operand.hbm [shape: bf16[128,256], index: 7, kind: input, shape index: {}]
  %s8 = inlined_call_operand.vmem [shape: f32[1,256], index: 8, kind: input, shape index: {}]
  %s9 = inlined_call_operand.hbm [shape: bf16[256,128], index: 9, kind: input, shape index: {}]
  %s10 = inlined_call_operand.vmem [shape: f32[1,128], index: 10, kind: input, shape index: {}]
  %s11 = inlined_call_operand.hbm [shape: f32[16,128], index: 11, kind: output, shape index: {}]
  %s12 = sld [smem:[#allocation0]]
  $region105: #{tpu_custom_call.1} parent=0
    _
  %s14 = ssub.s32 1, %s12
  %s15 = scalar_select 0, %s14, %s12
  $region1: #{tpu_custom_call.1} parent=0
    #allocation2 [shape = 'u8[106496]{0}', space=vmem, size = 0x1a000, scoped, tag = 'input window, operand 0']
    #allocation3 [shape = 's32[2]{0}', space=sflag, size = 0x8, scoped, tag = 'scoped memory for tpu_custom_call.1']
    #allocation4 [shape = 's32[2]{0}', space=sflag, size = 0x8, scoped, tag = 'scoped memory for tpu_custom_call.1']
    #allocation5 [shape = 'u8[262144]{0}', space=vmem, size = 0x40000, scoped, tag = 'input window, operand 1, single buffered']
    #allocation6 [shape = 's32[1]{0}', space=sflag, size = 0x4, scoped, tag = 'scoped memory for tpu_custom_call.1']
    #allocation7 [shape = 'u8[4096]{0}', space=vmem, size = 0x1000, scoped, tag = 'input window, operand 2, single buffered']
    #allocation8 [shape = 'u8[589824]{0}', space=vmem, size = 0x90000, scoped, tag = 'input window, operand 3, single buffered']
    #allocation9 [shape = 's32[1]{0}', space=sflag, size = 0x4, scoped, tag = 'scoped memory for tpu_custom_call.1']
    #allocation10 [shape = 'u8[491520]{0}', space=vmem, size = 0x78000, scoped, tag = 'input window, operand 5, single buffered']
    #allocation11 [shape = 'u8[65536]{0}', space=vmem, size = 0x10000, scoped, tag = 'input window, operand 7, single buffered']
    #allocation12 [shape = 's32[1]{0}', space=sflag, size = 0x4, scoped, tag = 'scoped memory for tpu_custom_call.1']
    #allocation13 [shape = 'u8[65536]{0}', space=vmem, size = 0x10000, scoped, tag = 'input window, operand 9, single buffered']
    #allocation14 [shape = 'u8[8192]{0}', space=vmem, size = 0x2000, scoped, tag = 'output window, operand 0']
    %16 = vsyncpa [#allocation3], 0
    %s17 = scalar_lea.sflag [#allocation3], 1
    %18 = vsyncpa %s17, 0
    %19 = vsyncpa [#allocation6], 0
    %20 = vsyncpa [#allocation9], 0
    %21 = vsyncpa [#allocation12], 0
    %22 = vsyncpa [#allocation4], 0
    %s23 = scalar_lea.sflag [#allocation4], 1
    %24 = vsyncpa %s23, 0
    loop: start=0, step=1, limit=4
    $region2: #{tpu_custom_call.1} parent=1 // loop_pre_header
      _
    $region3: #{tpu_custom_call.1} parent=1 // loop_header
      %s26 = sphi 0, %s30
      %p27 = scmp.ge.s32.totalorder %s26, 4
      %s36 = sphi 0, %s38
      %s39 = sphi 0, %s36
      %s40 = sphi 0, %s39
      %s56 = sphi 0, %s40
      %s60 = sphi 0, %s60
      %s62 = sphi 0, %s60
      %s63 = sphi 0, %s62
      %s77 = sphi 0, %s63
      %s81 = sphi 0, %s81
      %s83 = sphi 0, %s81
      %s84 = sphi 0, %s83
      %s98 = sphi 0, %s84
      %s102 = sphi 0, %s102
      %s104 = sphi 0, %s102
      %s105 = sphi 0, %s104
      %s119 = sphi 0, %s105
      %s123 = sphi 0, %s123
      %s125 = sphi 0, %s123
      %s126 = sphi 0, %s125
      %s140 = sphi 0, %s126
      %s144 = sphi 0, %s144
      %s146 = sphi 0, %s144
      %s147 = sphi 0, %s146
      %s161 = sphi 0, %s147
      %s165 = sphi 0, %s165
      %s167 = sphi 0, %s165
      %s168 = sphi 0, %s167
      %s182 = sphi 0, %s168
      %s186 = sphi 0, %s186
      %s188 = sphi 0, %s186
      %s189 = sphi 0, %s188
      %s203 = sphi 0, %s189
      %s207 = sphi 0, %s207
      %s209 = sphi 0, %s207
      %s210 = sphi 0, %s209
      %s224 = sphi 0, %s210
      %s228 = sphi 0, %s228
      %s230 = sphi 0, %s228
      %s231 = sphi 0, %s230
      %s245 = sphi 0, %s231
      %s249 = sphi 0, %s249
      %s251 = sphi 0, %s249
      %s252 = sphi 0, %s251
      %s266 = sphi 0, %s252
      %s272 = sphi 0, %s274
      %s275 = sphi 0, %s272
      %s276 = sphi 0, %s275
      %s292 = sphi 0, %s276
    $region4: #{tpu_custom_call.1} parent=1 // loop_header_branch
      %29 = sbr.rel (%p27) target = $region8
    $region5: #{tpu_custom_call.1} parent=1 // loop_body
      %s31 = ssub.s32 %s26, 1
      %s32 = ssub.s32 %s26, 2
      %s33 = sadd.s32 %s26, 1
      %s34 = ssub.s32 %s26, %s33
      %p35 = scmp.eq.s32.totalorder %s34, 0
      %s37 = sadd.s32 %s36, 1
      %s38 = scalar_select %p35, %s36, %s37
      %p41 = pneg %p35
      %p42 = scmp.eq.s32.totalorder %s26, 1
      %p43 = por %p41, %p42
      %p44 = scmp.ne.s32.totalorder %s36, %s39
      %p45 = scmp.eq.s32.totalorder %s26, 0
      %p46 = por %p44, %p45
      %p47 = scmp.ne.s32.totalorder %s36, %s39
      %p48 = scmp.eq.s32.totalorder %s31, 1
      %p49 = por %p47, %p48
      %p50 = scmp.ne.s32.totalorder %s39, %s40
      %p51 = scmp.eq.s32.totalorder %s31, 0
      %p52 = por %p50, %p51
      %p53 = scmp.ne.s32.totalorder %s39, %s40
      %p54 = scmp.eq.s32.totalorder %s32, 1
      %p55 = por %p53, %p54
      %p57 = scmp.ne.s32.totalorder %s40, %s56
      %p58 = scmp.eq.s32.totalorder %s32, 0
      %p59 = por %p57, %p58
      %s61 = sadd.s32 %s60, 1
      %p64 = scmp.eq.s32.totalorder %s26, 1
      %p65 = scmp.ne.s32.totalorder %s60, %s62
      %p66 = scmp.eq.s32.totalorder %s26, 0
      %p67 = por %p65, %p66
      %p68 = scmp.ne.s32.totalorder %s60, %s62
      %p69 = scmp.eq.s32.totalorder %s31, 1
      %p70 = por %p68, %p69
      %p71 = scmp.ne.s32.totalorder %s62, %s63
      %p72 = scmp.eq.s32.totalorder %s31, 0
      %p73 = por %p71, %p72
      %p74 = scmp.ne.s32.totalorder %s62, %s63
      %p75 = scmp.eq.s32.totalorder %s32, 1
      %p76 = por %p74, %p75
      %p78 = scmp.ne.s32.totalorder %s63, %s77
      %p79 = scmp.eq.s32.totalorder %s32, 0
      %p80 = por %p78, %p79
      %s82 = sadd.s32 %s81, 1
      %p85 = scmp.eq.s32.totalorder %s26, 1
      %p86 = scmp.ne.s32.totalorder %s81, %s83
      %p87 = scmp.eq.s32.totalorder %s26, 0
      %p88 = por %p86, %p87
      %p89 = scmp.ne.s32.totalorder %s81, %s83
      %p90 = scmp.eq.s32.totalorder %s31, 1
      %p91 = por %p89, %p90
      %p92 = scmp.ne.s32.totalorder %s83, %s84
      %p93 = scmp.eq.s32.totalorder %s31, 0
      %p94 = por %p92, %p93
      %p95 = scmp.ne.s32.totalorder %s83, %s84
      %p96 = scmp.eq.s32.totalorder %s32, 1
      %p97 = por %p95, %p96
      %p99 = scmp.ne.s32.totalorder %s84, %s98
      %p100 = scmp.eq.s32.totalorder %s32, 0
      %p101 = por %p99, %p100
      %s103 = sadd.s32 %s102, 1
      %p106 = scmp.eq.s32.totalorder %s26, 1
      %p107 = scmp.ne.s32.totalorder %s102, %s104
      %p108 = scmp.eq.s32.totalorder %s26, 0
      %p109 = por %p107, %p108
      %p110 = scmp.ne.s32.totalorder %s102, %s104
      %p111 = scmp.eq.s32.totalorder %s31, 1
      %p112 = por %p110, %p111
      %p113 = scmp.ne.s32.totalorder %s104, %s105
      %p114 = scmp.eq.s32.totalorder %s31, 0
      %p115 = por %p113, %p114
      %p116 = scmp.ne.s32.totalorder %s104, %s105
      %p117 = scmp.eq.s32.totalorder %s32, 1
      %p118 = por %p116, %p117
      %p120 = scmp.ne.s32.totalorder %s105, %s119
      %p121 = scmp.eq.s32.totalorder %s32, 0
      %p122 = por %p120, %p121
      %s124 = sadd.s32 %s123, 1
      %p127 = scmp.eq.s32.totalorder %s26, 1
      %p128 = scmp.ne.s32.totalorder %s123, %s125
      %p129 = scmp.eq.s32.totalorder %s26, 0
      %p130 = por %p128, %p129
      %p131 = scmp.ne.s32.totalorder %s123, %s125
      %p132 = scmp.eq.s32.totalorder %s31, 1
      %p133 = por %p131, %p132
      %p134 = scmp.ne.s32.totalorder %s125, %s126
      %p135 = scmp.eq.s32.totalorder %s31, 0
      %p136 = por %p134, %p135
      %p137 = scmp.ne.s32.totalorder %s125, %s126
      %p138 = scmp.eq.s32.totalorder %s32, 1
      %p139 = por %p137, %p138
      %p141 = scmp.ne.s32.totalorder %s126, %s140
      %p142 = scmp.eq.s32.totalorder %s32, 0
      %p143 = por %p141, %p142
      %s145 = sadd.s32 %s144, 1
      %p148 = scmp.eq.s32.totalorder %s26, 1
      %p149 = scmp.ne.s32.totalorder %s144, %s146
      %p150 = scmp.eq.s32.totalorder %s26, 0
      %p151 = por %p149, %p150
      %p152 = scmp.ne.s32.totalorder %s144, %s146
      %p153 = scmp.eq.s32.totalorder %s31, 1
      %p154 = por %p152, %p153
      %p155 = scmp.ne.s32.totalorder %s146, %s147
      %p156 = scmp.eq.s32.totalorder %s31, 0
      %p157 = por %p155, %p156
      %p158 = scmp.ne.s32.totalorder %s146, %s147
      %p159 = scmp.eq.s32.totalorder %s32, 1
      %p160 = por %p158, %p159
      %p162 = scmp.ne.s32.totalorder %s147, %s161
      %p163 = scmp.eq.s32.totalorder %s32, 0
      %p164 = por %p162, %p163
      %s166 = sadd.s32 %s165, 1
      %p169 = scmp.eq.s32.totalorder %s26, 1
      %p170 = scmp.ne.s32.totalorder %s165, %s167
      %p171 = scmp.eq.s32.totalorder %s26, 0
      %p172 = por %p170, %p171
      %p173 = scmp.ne.s32.totalorder %s165, %s167
      %p174 = scmp.eq.s32.totalorder %s31, 1
      %p175 = por %p173, %p174
      %p176 = scmp.ne.s32.totalorder %s167, %s168
      %p177 = scmp.eq.s32.totalorder %s31, 0
      %p178 = por %p176, %p177
      %p179 = scmp.ne.s32.totalorder %s167, %s168
      %p180 = scmp.eq.s32.totalorder %s32, 1
      %p181 = por %p179, %p180
      %p183 = scmp.ne.s32.totalorder %s168, %s182
      %p184 = scmp.eq.s32.totalorder %s32, 0
      %p185 = por %p183, %p184
      %s187 = sadd.s32 %s186, 1
      %p190 = scmp.eq.s32.totalorder %s26, 1
      %p191 = scmp.ne.s32.totalorder %s186, %s188
      %p192 = scmp.eq.s32.totalorder %s26, 0
      %p193 = por %p191, %p192
      %p194 = scmp.ne.s32.totalorder %s186, %s188
      %p195 = scmp.eq.s32.totalorder %s31, 1
      %p196 = por %p194, %p195
      %p197 = scmp.ne.s32.totalorder %s188, %s189
      %p198 = scmp.eq.s32.totalorder %s31, 0
      %p199 = por %p197, %p198
      %p200 = scmp.ne.s32.totalorder %s188, %s189
      %p201 = scmp.eq.s32.totalorder %s32, 1
      %p202 = por %p200, %p201
      %p204 = scmp.ne.s32.totalorder %s189, %s203
      %p205 = scmp.eq.s32.totalorder %s32, 0
      %p206 = por %p204, %p205
      %s208 = sadd.s32 %s207, 1
      %p211 = scmp.eq.s32.totalorder %s26, 1
      %p212 = scmp.ne.s32.totalorder %s207, %s209
      %p213 = scmp.eq.s32.totalorder %s26, 0
      %p214 = por %p212, %p213
      %p215 = scmp.ne.s32.totalorder %s207, %s209
      %p216 = scmp.eq.s32.totalorder %s31, 1
      %p217 = por %p215, %p216
      %p218 = scmp.ne.s32.totalorder %s209, %s210
      %p219 = scmp.eq.s32.totalorder %s31, 0
      %p220 = por %p218, %p219
      %p221 = scmp.ne.s32.totalorder %s209, %s210
      %p222 = scmp.eq.s32.totalorder %s32, 1
      %p223 = por %p221, %p222
      %p225 = scmp.ne.s32.totalorder %s210, %s224
      %p226 = scmp.eq.s32.totalorder %s32, 0
      %p227 = por %p225, %p226
      %s229 = sadd.s32 %s228, 1
      %p232 = scmp.eq.s32.totalorder %s26, 1
      %p233 = scmp.ne.s32.totalorder %s228, %s230
      %p234 = scmp.eq.s32.totalorder %s26, 0
      %p235 = por %p233, %p234
      %p236 = scmp.ne.s32.totalorder %s228, %s230
      %p237 = scmp.eq.s32.totalorder %s31, 1
      %p238 = por %p236, %p237
      %p239 = scmp.ne.s32.totalorder %s230, %s231
      %p240 = scmp.eq.s32.totalorder %s31, 0
      %p241 = por %p239, %p240
      %p242 = scmp.ne.s32.totalorder %s230, %s231
      %p243 = scmp.eq.s32.totalorder %s32, 1
      %p244 = por %p242, %p243
      %p246 = scmp.ne.s32.totalorder %s231, %s245
      %p247 = scmp.eq.s32.totalorder %s32, 0
      %p248 = por %p246, %p247
      %s250 = sadd.s32 %s249, 1
      %p253 = scmp.eq.s32.totalorder %s26, 1
      %p254 = scmp.ne.s32.totalorder %s249, %s251
      %p255 = scmp.eq.s32.totalorder %s26, 0
      %p256 = por %p254, %p255
      %p257 = scmp.ne.s32.totalorder %s249, %s251
      %p258 = scmp.eq.s32.totalorder %s31, 1
      %p259 = por %p257, %p258
      %p260 = scmp.ne.s32.totalorder %s251, %s252
      %p261 = scmp.eq.s32.totalorder %s31, 0
      %p262 = por %p260, %p261
      %p263 = scmp.ne.s32.totalorder %s251, %s252
      %p264 = scmp.eq.s32.totalorder %s32, 1
      %p265 = por %p263, %p264
      %p267 = scmp.ne.s32.totalorder %s252, %s266
      %p268 = scmp.eq.s32.totalorder %s32, 0
      %p269 = por %p267, %p268
      %s270 = ssub.s32 %s26, %s33
      %p271 = scmp.eq.s32.totalorder %s270, 0
      %s273 = sadd.s32 %s272, 1
      %s274 = scalar_select %p271, %s272, %s273
      %p277 = pneg %p271
      %p278 = scmp.eq.s32.totalorder %s26, 1
      %p279 = por %p277, %p278
      %p280 = scmp.ne.s32.totalorder %s272, %s275
      %p281 = scmp.eq.s32.totalorder %s26, 0
      %p282 = por %p280, %p281
      %p283 = scmp.ne.s32.totalorder %s272, %s275
      %p284 = scmp.eq.s32.totalorder %s31, 1
      %p285 = por %p283, %p284
      %p286 = scmp.ne.s32.totalorder %s275, %s276
      %p287 = scmp.eq.s32.totalorder %s31, 0
      %p288 = por %p286, %p287
      %p289 = scmp.ne.s32.totalorder %s275, %s276
      %p290 = scmp.eq.s32.totalorder %s32, 1
      %p291 = por %p289, %p290
      %p293 = scmp.ne.s32.totalorder %s276, %s292
      %p294 = scmp.eq.s32.totalorder %s32, 0
      %p295 = por %p293, %p294
      %p296 = scmp.le.s32.totalorder 1, %s26
      %p297 = scmp.lt.s32.totalorder %s26, 3
      %p298 = pnand %p296, %p297
      %p299 = pneg %p298
      // Predicated region
      $region9: #{tpu_custom_call.1} parent=5 // pred_check
        _
      $region10: #{tpu_custom_call.1} parent=5 // pred_check_branch
        %301 = sbr.rel (%p298) target = $region12
      $region11: #{tpu_custom_call.1} parent=5 // pred_region
        %s302 = ssub.s32 %s26, 1
        // Predicated region
        $region13: #{tpu_custom_call.1} parent=11 // pred_check
          %p303 = pneg %p73
        $region14: #{tpu_custom_call.1} parent=11 // pred_check_branch
          %305 = sbr.rel (%p303) target = $region16
        $region15: #{tpu_custom_call.1} parent=11 // pred_region
          %s307 = ssub.s32 8192, 8192
          %308 = vsyncadd [#allocation6], %s307
          %s309 = sshll.u32 [#allocation5], 4
          %s310 = int_to_ptr.vmem [resolvable:$true] %s309
          %315 = dma.hbm_to_vmem [thread:$0]  %s1, 8192, %s310, [#allocation6], 512, 512, 32
        $region16: #{tpu_custom_call.1} parent=11 // pred_fallthru
          _
        // Predicated region
        $region17: #{tpu_custom_call.1} parent=11 // pred_check
          %p316 = pneg %p94
        $region18: #{tpu_custom_call.1} parent=11 // pred_check_branch
          %318 = sbr.rel (%p316) target = $region20
        $region19: #{tpu_custom_call.1} parent=11 // pred_region
          %s320 = ssub.s32 128, 128
          %321 = vsyncadd [#allocation6], %s320
          %s323 = sshll.u32 [#allocation7], 4
          %s324 = int_to_ptr.vmem [resolvable:$true] %s323
          %326 = dma.hbm_to_vmem [thread:$0]  %s2, 128, %s324, [#allocation6]
        $region20: #{tpu_custom_call.1} parent=11 // pred_fallthru
          _
        // Predicated region
        $region21: #{tpu_custom_call.1} parent=11 // pred_check
          %p327 = pneg %p115
        $region22: #{tpu_custom_call.1} parent=11 // pred_check_branch
          %329 = sbr.rel (%p327) target = $region24
        $region23: #{tpu_custom_call.1} parent=11 // pred_region
          %s331 = ssub.s32 18432, 18432
          %332 = vsyncadd [#allocation9], %s331
          %s333 = sshll.u32 [#allocation8], 4
          %s334 = int_to_ptr.vmem [resolvable:$true] %s333
          %339 = dma.hbm_to_vmem [thread:$0]  %s3, 18432, %s334, [#allocation9], 192, 192, 12
        $region24: #{tpu_custom_call.1} parent=11 // pred_fallthru
          _
        // Predicated region
        $region25: #{tpu_custom_call.1} parent=11 // pred_check
          %p340 = pneg %p136
        $region26: #{tpu_custom_call.1} parent=11 // pred_check_branch
          %342 = sbr.rel (%p340) target = $region28
        $region27: #{tpu_custom_call.1} parent=11 // pred_region
          _
        $region28: #{tpu_custom_call.1} parent=11 // pred_fallthru
          _
        // Predicated region
        $region29: #{tpu_custom_call.1} parent=11 // pred_check
          %p343 = pneg %p157
        $region30: #{tpu_custom_call.1} parent=11 // pred_check_branch
          %345 = sbr.rel (%p343) target = $region32
        $region31: #{tpu_custom_call.1} parent=11 // pred_region
          %s347 = ssub.s32 15360, 15360
          %348 = vsyncadd [#allocation9], %s347
          %s349 = sshll.u32 [#allocation10], 4
          %s350 = int_to_ptr.vmem [resolvable:$true] %s349
          %355 = dma.hbm_to_vmem [thread:$0]  %s5, 15360, %s350, [#allocation9], 64, 64, 4
        $region32: #{tpu_custom_call.1} parent=11 // pred_fallthru
          _
        // Predicated region
        $region33: #{tpu_custom_call.1} parent=11 // pred_check
          %p356 = pneg %p178
        $region34: #{tpu_custom_call.1} parent=11 // pred_check_branch
          %358 = sbr.rel (%p356) target = $region36
        $region35: #{tpu_custom_call.1} parent=11 // pred_region
          _
        $region36: #{tpu_custom_call.1} parent=11 // pred_fallthru
          _
        // Predicated region
        $region37: #{tpu_custom_call.1} parent=11 // pred_check
          %p359 = pneg %p199
        $region38: #{tpu_custom_call.1} parent=11 // pred_check_branch
          %361 = sbr.rel (%p359) target = $region40
        $region39: #{tpu_custom_call.1} parent=11 // pred_region
          %s363 = ssub.s32 2048, 2048
          %364 = vsyncadd [#allocation12], %s363
          %s365 = sshll.u32 [#allocation11], 4
          %s366 = int_to_ptr.vmem [resolvable:$true] %s365
          %371 = dma.hbm_to_vmem [thread:$0]  %s7, 2048, %s366, [#allocation12], 128, 128, 8
        $region40: #{tpu_custom_call.1} parent=11 // pred_fallthru
          _
        // Predicated region
        $region41: #{tpu_custom_call.1} parent=11 // pred_check
          %p372 = pneg %p220
        $region42: #{tpu_custom_call.1} parent=11 // pred_check_branch
          %374 = sbr.rel (%p372) target = $region44
        $region43: #{tpu_custom_call.1} parent=11 // pred_region
          _
        $region44: #{tpu_custom_call.1} parent=11 // pred_fallthru
          _
        // Predicated region
        $region45: #{tpu_custom_call.1} parent=11 // pred_check
          %p375 = pneg %p241
        $region46: #{tpu_custom_call.1} parent=11 // pred_check_branch
          %377 = sbr.rel (%p375) target = $region48
        $region47: #{tpu_custom_call.1} parent=11 // pred_region
          %s379 = ssub.s32 2048, 2048
          %380 = vsyncadd [#allocation12], %s379
          %s381 = sshll.u32 [#allocation13], 4
          %s382 = int_to_ptr.vmem [resolvable:$true] %s381
          %387 = dma.hbm_to_vmem [thread:$0]  %s9, 2048, %s382, [#allocation12], 64, 64, 4
        $region48: #{tpu_custom_call.1} parent=11 // pred_fallthru
          _
        // Predicated region
        $region49: #{tpu_custom_call.1} parent=11 // pred_check
          %p388 = pneg %p262
        $region50: #{tpu_custom_call.1} parent=11 // pred_check_branch
          %390 = sbr.rel (%p388) target = $region52
        $region51: #{tpu_custom_call.1} parent=11 // pred_region
          _
        $region52: #{tpu_custom_call.1} parent=11 // pred_fallthru
          _
      $region12: #{tpu_custom_call.1} parent=5 // pred_fallthru
        _
      %p391 = scmp.lt.s32.totalorder %s26, 2
      // Predicated region
      $region53: #{tpu_custom_call.1} parent=5 // pred_check
        %p392 = pneg %p391
      $region54: #{tpu_custom_call.1} parent=5 // pred_check_branch
        %394 = sbr.rel (%p392) target = $region56
      $region55: #{tpu_custom_call.1} parent=5 // pred_region
        // Predicated region
        $region57: #{tpu_custom_call.1} parent=55 // pred_check
          %p395 = pneg %p46
        $region58: #{tpu_custom_call.1} parent=55 // pred_check_branch
          %397 = sbr.rel (%p395) target = $region60
        $region59: #{tpu_custom_call.1} parent=55 // pred_region
          %s398 = sand.u32 %s36, 1
          %s399 = scalar_lea.sflag [#allocation3], %s398
          %s400 = sand.u32 %s36, 1
          %s401 = smul.addr %s400, 104
          %s402 = scalar_lea.vmem [#allocation2], %s401
          %s403 = smul.u32 13, %s26
          %s405 = ssub.s32 1664, 1664
          %406 = vsyncadd %s399, %s405
          %s407 = smul.addr %s403, 128
          %s408 = scalar_lea.hbm %s0, %s407
          %s409 = sshll.u32 %s402, 4
          %s410 = int_to_ptr.vmem [resolvable:$true] %s409
          %415 = dma.hbm_to_vmem [thread:$0]  %s408, 1664, %s410, %s399, 128, 128, 8
        $region60: #{tpu_custom_call.1} parent=55 // pred_fallthru
          _
      $region56: #{tpu_custom_call.1} parent=5 // pred_fallthru
        _
      %p416 = scmp.le.s32.totalorder 1, %s26
      %p417 = scmp.lt.s32.totalorder %s26, 3
      %p418 = pnand %p416, %p417
      %p419 = pneg %p418
      // Predicated region
      $region61: #{tpu_custom_call.1} parent=5 // pred_check
        _
      $region62: #{tpu_custom_call.1} parent=5 // pred_check_branch
        %421 = sbr.rel (%p418) target = $region64
      $region63: #{tpu_custom_call.1} parent=5 // pred_region
        %s422 = ssub.s32 %s26, 1
        %s423 = sand.u32 %s39, 1
        %s424 = scalar_lea.sflag [#allocation3], %s423
        %s425 = sand.u32 %s39, 1
        %s426 = smul.addr %s425, 104
        %s427 = scalar_lea.vmem [#allocation2], %s426
        // Predicated region
        $region65: #{tpu_custom_call.1} parent=63 // pred_check
          %p428 = pneg %p52
        $region66: #{tpu_custom_call.1} parent=63 // pred_check_branch
          %430 = sbr.rel (%p428) target = $region68
        $region67: #{tpu_custom_call.1} parent=63 // pred_region
          %431 = dma.done %s424, 1664
        $region68: #{tpu_custom_call.1} parent=63 // pred_fallthru
          _
        // Predicated region
        $region69: #{tpu_custom_call.1} parent=63 // pred_check
          %p432 = pneg %p73
        $region70: #{tpu_custom_call.1} parent=63 // pred_check_branch
          %434 = sbr.rel (%p432) target = $region72
        $region71: #{tpu_custom_call.1} parent=63 // pred_region
          %435 = dma.done [#allocation6], 8192
        $region72: #{tpu_custom_call.1} parent=63 // pred_fallthru
          _
        // Predicated region
        $region73: #{tpu_custom_call.1} parent=63 // pred_check
          %p436 = pneg %p94
        $region74: #{tpu_custom_call.1} parent=63 // pred_check_branch
          %438 = sbr.rel (%p436) target = $region76
        $region75: #{tpu_custom_call.1} parent=63 // pred_region
          %439 = dma.done [#allocation6], 128
        $region76: #{tpu_custom_call.1} parent=63 // pred_fallthru
          _
        // Predicated region
        $region77: #{tpu_custom_call.1} parent=63 // pred_check
          %p440 = pneg %p115
        $region78: #{tpu_custom_call.1} parent=63 // pred_check_branch
          %442 = sbr.rel (%p440) target = $region80
        $region79: #{tpu_custom_call.1} parent=63 // pred_region
          %443 = dma.done [#allocation9], 18432
        $region80: #{tpu_custom_call.1} parent=63 // pred_fallthru
          _
        // Predicated region
        $region81: #{tpu_custom_call.1} parent=63 // pred_check
          %p444 = pneg %p157
        $region82: #{tpu_custom_call.1} parent=63 // pred_check_branch
          %446 = sbr.rel (%p444) target = $region84
        $region83: #{tpu_custom_call.1} parent=63 // pred_region
          %447 = dma.done [#allocation9], 15360
        $region84: #{tpu_custom_call.1} parent=63 // pred_fallthru
          _
        // Predicated region
        $region85: #{tpu_custom_call.1} parent=63 // pred_check
          %p448 = pneg %p199
        $region86: #{tpu_custom_call.1} parent=63 // pred_check_branch
          %450 = sbr.rel (%p448) target = $region88
        $region87: #{tpu_custom_call.1} parent=63 // pred_region
          %451 = dma.done [#allocation12], 2048
        $region88: #{tpu_custom_call.1} parent=63 // pred_fallthru
          _
        // Predicated region
        $region89: #{tpu_custom_call.1} parent=63 // pred_check
          %p452 = pneg %p241
        $region90: #{tpu_custom_call.1} parent=63 // pred_check_branch
          %454 = sbr.rel (%p452) target = $region92
        $region91: #{tpu_custom_call.1} parent=63 // pred_region
          %455 = dma.done [#allocation12], 2048
        $region92: #{tpu_custom_call.1} parent=63 // pred_fallthru
          _
        %s456 = sand.u32 %s39, 1
        %s457 = scalar_lea.sflag [#allocation3], %s456
        %s458 = sand.u32 %s39, 1
        %s459 = smul.addr %s458, 104
        %s460 = scalar_lea.vmem [#allocation2], %s459
        %p461 = pneg %p52
        %p462 = pneg %p49
        %p463 = pneg %p73
        %p464 = pneg %p70
        %p465 = pneg %p94
        %p466 = pneg %p91
        %p467 = pneg %p115
        %p468 = pneg %p112
        %p469 = pneg %p136
        %p470 = pneg %p133
        %p471 = pneg %p157
        %p472 = pneg %p154
        %p473 = pneg %p178
        %p474 = pneg %p175
        %p475 = pneg %p199
        %p476 = pneg %p196
        %p477 = pneg %p220
        %p478 = pneg %p217
        %p479 = pneg %p241
        %p480 = pneg %p238
        %p481 = pneg %p262
        %p482 = pneg %p259
        %p483 = pneg %p288
        %p484 = pneg %p285
        %s485 = sand.u32 %s275, 1
        %s486 = scalar_lea.sflag [#allocation4], %s485
        %s487 = sand.u32 %s275, 1
        %s488 = smul.addr %s487, 8
        %s489 = scalar_lea.vmem [#allocation14], %s488
        %s490 = smul.u32 13, %s31
        %v492 = vld [vmem:[%s427] sm:$0xff]
        %v493 = vld [vmem:[%s427 + $0x8] sm:$0xff]
        %v494 = vld [vmem:[%s427 + $0x10] sm:$0xff]
        %v495 = vld [vmem:[%s427 + $0x18] sm:$0xff]
        %v496 = vld [vmem:[%s427 + $0x20] sm:$0xff]
        %v497 = vld [vmem:[%s427 + $0x28] sm:$0xff]
        %v498 = vld [vmem:[%s427 + $0x30] sm:$0xff]
        %v499 = vld [vmem:[%s427 + $0x38] sm:$0xff]
        %v500 = vld [vmem:[%s427 + $0x40] sm:$0xff]
        %v501 = vld [vmem:[%s427 + $0x48] sm:$0xff]
        %v502 = vld [vmem:[%s427 + $0x50] sm:$0xff]
        %v503 = vld [vmem:[%s427 + $0x58] sm:$0xff]
        %v504 = vld [vmem:[%s427 + $0x60] sm:$0xff]
        %v505 = vpack.c.bf16 %v493, %v492
        %v506 = vpack.c.bf16 %v495, %v494
        %v507 = vpack.c.bf16 %v497, %v496
        %v508 = vpack.c.bf16 %v499, %v498
        %v509 = vpack.c.bf16 %v501, %v500
        %v510 = vpack.c.bf16 %v503, %v502
        %v511 = vpack.c.bf16 %v504, %v504
        %v512 = vld [vmem:[#allocation5] sm:$0xff]
        %v513 = vld [vmem:[#allocation5 + $0x8] sm:$0xff]
        %v514 = vld [vmem:[#allocation5 + $0x10] sm:$0xff]
        %v515 = vld [vmem:[#allocation5 + $0x18] sm:$0xff]
        %v516 = vld [vmem:[#allocation5 + $0x20] sm:$0xff]
        %v517 = vld [vmem:[#allocation5 + $0x28] sm:$0xff]
        %v518 = vld [vmem:[#allocation5 + $0x30] sm:$0xff]
        %v519 = vld [vmem:[#allocation5 + $0x38] sm:$0xff]
        %v520 = vld [vmem:[#allocation5 + $0x40] sm:$0xff]
        %v521 = vld [vmem:[#allocation5 + $0x48] sm:$0xff]
        %v522 = vld [vmem:[#allocation5 + $0x50] sm:$0xff]
        %v523 = vld [vmem:[#allocation5 + $0x58] sm:$0xff]
        %v524 = vld [vmem:[#allocation5 + $0x60] sm:$0xff]
        %v525 = vld [vmem:[#allocation5 + $0x68] sm:$0xff]
        %v526 = vld [vmem:[#allocation5 + $0x70] sm:$0xff]
        %v527 = vld [vmem:[#allocation5 + $0x78] sm:$0xff]
        %v528 = vld [vmem:[#allocation5 + $0x80] sm:$0xff]
        %v529 = vld [vmem:[#allocation5 + $0x88] sm:$0xff]
        %v530 = vld [vmem:[#allocation5 + $0x90] sm:$0xff]
        %v531 = vld [vmem:[#allocation5 + $0x98] sm:$0xff]
        %v532 = vld [vmem:[#allocation5 + $0xa0] sm:$0xff]
        %v533 = vld [vmem:[#allocation5 + $0xa8] sm:$0xff]
        %v534 = vld [vmem:[#allocation5 + $0xb0] sm:$0xff]
        %v535 = vld [vmem:[#allocation5 + $0xb8] sm:$0xff]
        %v536 = vld [vmem:[#allocation5 + $0xc0] sm:$0xff]
        %v537 = vld [vmem:[#allocation5 + $0xc8] sm:$0xff]
        %v538 = vld [vmem:[#allocation5 + $0xd0] sm:$0xff]
        %v539 = vld [vmem:[#allocation5 + $0xd8] sm:$0xff]
        %v540 = vld [vmem:[#allocation5 + $0xe0] sm:$0xff]
        %v541 = vld [vmem:[#allocation5 + $0xe8] sm:$0xff]
        %v542 = vld [vmem:[#allocation5 + $0xf0] sm:$0xff]
        %v543 = vld [vmem:[#allocation5 + $0xf8] sm:$0xff]
        %v544 = vld [vmem:[#allocation5 + $0x100] sm:$0xff]
        %v545 = vld [vmem:[#allocation5 + $0x108] sm:$0xff]
        %v546 = vld [vmem:[#allocation5 + $0x110] sm:$0xff]
        %v547 = vld [vmem:[#allocation5 + $0x118] sm:$0xff]
        %v548 = vld [vmem:[#allocation5 + $0x120] sm:$0xff]
        %v549 = vld [vmem:[#allocation5 + $0x128] sm:$0xff]
        %v550 = vld [vmem:[#allocation5 + $0x130] sm:$0xff]
        %v551 = vld [vmem:[#allocation5 + $0x138] sm:$0xff]
        %v552 = vld [vmem:[#allocation5 + $0x140] sm:$0xff]
        %v553 = vld [vmem:[#allocation5 + $0x148] sm:$0xff]
        %v554 = vld [vmem:[#allocation5 + $0x150] sm:$0xff]
        %v555 = vld [vmem:[#allocation5 + $0x158] sm:$0xff]
        %v556 = vld [vmem:[#allocation5 + $0x160] sm:$0xff]
        %v557 = vld [vmem:[#allocation5 + $0x168] sm:$0xff]
        %v558 = vld [vmem:[#allocation5 + $0x170] sm:$0xff]
        %v559 = vld [vmem:[#allocation5 + $0x178] sm:$0xff]
        %v560 = vld [vmem:[#allocation5 + $0x180] sm:$0xff]
        %v561 = vld [vmem:[#allocation5 + $0x188] sm:$0xff]
        %v562 = vld [vmem:[#allocation5 + $0x190] sm:$0xff]
        %v563 = vld [vmem:[#allocation5 + $0x198] sm:$0xff]
        %v564 = vld [vmem:[#allocation5 + $0x1a0] sm:$0xff]
        %v565 = vld [vmem:[#allocation5 + $0x1a8] sm:$0xff]
        %v566 = vld [vmem:[#allocation5 + $0x1b0] sm:$0xff]
        %v567 = vld [vmem:[#allocation5 + $0x1b8] sm:$0xff]
        %v568 = vld [vmem:[#allocation5 + $0x1c0] sm:$0xff]
        %v569 = vld [vmem:[#allocation5 + $0x1c8] sm:$0xff]
        %v570 = vld [vmem:[#allocation5 + $0x1d0] sm:$0xff]
        %v571 = vld [vmem:[#allocation5 + $0x1d8] sm:$0xff]
        %v572 = vld [vmem:[#allocation5 + $0x1e0] sm:$0xff]
        %v573 = vld [vmem:[#allocation5 + $0x1e8] sm:$0xff]
        %v574 = vld [vmem:[#allocation5 + $0x1f0] sm:$0xff]
        %v575 = vld [vmem:[#allocation5 + $0x1f8] sm:$0xff]
        %v576 = vld [vmem:[#allocation7] sm:$0xff]
        %v578 = vlaneseq
        %v579 = vshrl.u32 %v578, 7
        %v580 = vsub.s32 0, %v579
        %v581 = vrot.slane %v576, %v580
        %v582 = vlaneseq
        %v583 = vshrl.u32 %v582, 7
        %v584 = vsub.s32 1, %v583
        %v585 = vrot.slane %v576, %v584
        %v586 = vlaneseq
        %v587 = vshrl.u32 %v586, 7
        %v588 = vsub.s32 2, %v587
        %v589 = vrot.slane %v576, %v588
        %v590 = vlaneseq
        %v591 = vshrl.u32 %v590, 7
        %v592 = vsub.s32 3, %v591
        %v593 = vrot.slane %v576, %v592
        %v594 = vlaneseq
        %v595 = vshrl.u32 %v594, 7
        %v596 = vsub.s32 4, %v595
        %v597 = vrot.slane %v576, %v596
        %v598 = vlaneseq
        %v599 = vshrl.u32 %v598, 7
        %v600 = vsub.s32 5, %v599
        %v601 = vrot.slane %v576, %v600
        %v602 = vlaneseq
        %v603 = vshrl.u32 %v602, 7
        %v604 = vsub.s32 6, %v603
        %v605 = vrot.slane %v576, %v604
        %v606 = vlaneseq
        %v607 = vshrl.u32 %v606, 7
        %v608 = vsub.s32 7, %v607
        %v609 = vrot.slane %v576, %v608
        %v682 = vunpack.c.l.b16 %v512
        %v683 = vunpack.c.h.b16 %v512
        %v684 = vunpack.c.l.b16 %v513
        %v685 = vunpack.c.h.b16 %v513
        %v686 = vunpack.c.l.b16 %v514
        %v687 = vunpack.c.h.b16 %v514
        %v688 = vunpack.c.l.b16 %v515
        %v689 = vunpack.c.h.b16 %v515
        %v690 = vunpack.c.l.b16 %v516
        %v691 = vunpack.c.h.b16 %v516
        %v692 = vunpack.c.l.b16 %v517
        %v693 = vunpack.c.h.b16 %v517
        %v694 = vunpack.c.l.b16 %v518
        %v695 = vunpack.c.h.b16 %v518
        %v696 = vunpack.c.l.b16 %v519
        %v697 = vunpack.c.h.b16 %v519
        %v698 = vunpack.c.l.b16 %v520
        %v699 = vunpack.c.h.b16 %v520
        %v700 = vunpack.c.l.b16 %v521
        %v701 = vunpack.c.h.b16 %v521
        %v702 = vunpack.c.l.b16 %v522
        %v703 = vunpack.c.h.b16 %v522
        %v704 = vunpack.c.l.b16 %v523
        %v705 = vunpack.c.h.b16 %v523
        %v706 = vunpack.c.l.b16 %v524
        %v707 = vunpack.c.h.b16 %v524
        %v708 = vunpack.c.l.b16 %v525
        %v709 = vunpack.c.h.b16 %v525
        %v710 = vunpack.c.l.b16 %v526
        %v711 = vunpack.c.h.b16 %v526
        %v712 = vunpack.c.l.b16 %v527
        %v713 = vunpack.c.h.b16 %v527
        %v714 = vunpack.c.l.b16 %v528
        %v715 = vunpack.c.h.b16 %v528
        %v716 = vunpack.c.l.b16 %v529
        %v717 = vunpack.c.h.b16 %v529
        %v718 = vunpack.c.l.b16 %v530
        %v719 = vunpack.c.h.b16 %v530
        %v720 = vunpack.c.l.b16 %v531
        %v721 = vunpack.c.h.b16 %v531
        %v722 = vunpack.c.l.b16 %v532
        %v723 = vunpack.c.h.b16 %v532
        %v724 = vunpack.c.l.b16 %v533
        %v725 = vunpack.c.h.b16 %v533
        %v726 = vunpack.c.l.b16 %v534
        %v727 = vunpack.c.h.b16 %v534
        %v728 = vunpack.c.l.b16 %v535
        %v729 = vunpack.c.h.b16 %v535
        %v730 = vunpack.c.l.b16 %v536
        %v731 = vunpack.c.h.b16 %v536
        %v732 = vunpack.c.l.b16 %v537
        %v733 = vunpack.c.h.b16 %v537
        %v734 = vunpack.c.l.b16 %v538
        %v735 = vunpack.c.h.b16 %v538
        %v736 = vunpack.c.l.b16 %v539
        %v737 = vunpack.c.h.b16 %v539
        %v738 = vunpack.c.l.b16 %v540
        %v739 = vunpack.c.h.b16 %v540
        %v740 = vunpack.c.l.b16 %v541
        %v741 = vunpack.c.h.b16 %v541
        %v742 = vunpack.c.l.b16 %v542
        %v743 = vunpack.c.h.b16 %v542
        %v744 = vunpack.c.l.b16 %v543
        %v745 = vunpack.c.h.b16 %v543
        %v746 = vunpack.c.l.b16 %v544
        %v747 = vunpack.c.h.b16 %v544
        %v748 = vunpack.c.l.b16 %v545
        %v749 = vunpack.c.h.b16 %v545
        %v750 = vunpack.c.l.b16 %v546
        %v751 = vunpack.c.h.b16 %v546
        %v752 = vunpack.c.l.b16 %v547
        %v753 = vunpack.c.h.b16 %v547
        %v754 = vunpack.c.l.b16 %v548
        %v755 = vunpack.c.h.b16 %v548
        %v756 = vunpack.c.l.b16 %v549
        %v757 = vunpack.c.h.b16 %v549
        %v758 = vunpack.c.l.b16 %v550
        %v759 = vunpack.c.h.b16 %v550
        %v760 = vunpack.c.l.b16 %v551
        %v761 = vunpack.c.h.b16 %v551
        %v762 = vunpack.c.l.b16 %v552
        %v763 = vunpack.c.h.b16 %v552
        %v764 = vunpack.c.l.b16 %v553
        %v765 = vunpack.c.h.b16 %v553
        %v766 = vunpack.c.l.b16 %v554
        %v767 = vunpack.c.h.b16 %v554
        %v768 = vunpack.c.l.b16 %v555
        %v769 = vunpack.c.h.b16 %v555
        %v770 = vunpack.c.l.b16 %v556
        %v771 = vunpack.c.h.b16 %v556
        %v772 = vunpack.c.l.b16 %v557
        %v773 = vunpack.c.h.b16 %v557
        %v774 = vunpack.c.l.b16 %v558
        %v775 = vunpack.c.h.b16 %v558
        %v776 = vunpack.c.l.b16 %v559
        %v777 = vunpack.c.h.b16 %v559
        %v778 = vunpack.c.l.b16 %v560
        %v779 = vunpack.c.h.b16 %v560
        %v780 = vunpack.c.l.b16 %v561
        %v781 = vunpack.c.h.b16 %v561
        %v782 = vunpack.c.l.b16 %v562
        %v783 = vunpack.c.h.b16 %v562
        %v784 = vunpack.c.l.b16 %v563
        %v785 = vunpack.c.h.b16 %v563
        %v786 = vunpack.c.l.b16 %v564
        %v787 = vunpack.c.h.b16 %v564
        %v788 = vunpack.c.l.b16 %v565
        %v789 = vunpack.c.h.b16 %v565
        %v790 = vunpack.c.l.b16 %v566
        %v791 = vunpack.c.h.b16 %v566
        %v792 = vunpack.c.l.b16 %v567
        %v793 = vunpack.c.h.b16 %v567
        %v794 = vunpack.c.l.b16 %v568
        %v795 = vunpack.c.h.b16 %v568
        %v796 = vunpack.c.l.b16 %v569
        %v797 = vunpack.c.h.b16 %v569
        %v798 = vunpack.c.l.b16 %v570
        %v799 = vunpack.c.h.b16 %v570
        %v800 = vunpack.c.l.b16 %v571
        %v801 = vunpack.c.h.b16 %v571
        %v802 = vunpack.c.l.b16 %v572
        %v803 = vunpack.c.h.b16 %v572
        %v804 = vunpack.c.l.b16 %v573
        %v805 = vunpack.c.h.b16 %v573
        %v806 = vunpack.c.l.b16 %v574
        %v807 = vunpack.c.h.b16 %v574
        %v808 = vunpack.c.l.b16 %v575
        %v809 = vunpack.c.h.b16 %v575
        %v810 = vpack.c.b16 %v690, %v682
        %v811 = vpack.c.b16 %v691, %v683
        %v812 = vpack.c.b16 %v692, %v684
        %v813 = vpack.c.b16 %v693, %v685
        %v814 = vpack.c.b16 %v694, %v686
        %v815 = vpack.c.b16 %v695, %v687
        %v816 = vpack.c.b16 %v696, %v688
        %v817 = vpack.c.b16 %v697, %v689
        %v818 = vpack.c.b16 %v706, %v698
        %v819 = vpack.c.b16 %v707, %v699
        %v820 = vpack.c.b16 %v708, %v700
        %v821 = vpack.c.b16 %v709, %v701
        %v822 = vpack.c.b16 %v710, %v702
        %v823 = vpack.c.b16 %v711, %v703
        %v824 = vpack.c.b16 %v712, %v704
        %v825 = vpack.c.b16 %v713, %v705
        %v826 = vpack.c.b16 %v722, %v714
        %v827 = vpack.c.b16 %v723, %v715
        %v828 = vpack.c.b16 %v724, %v716
        %v829 = vpack.c.b16 %v725, %v717
        %v830 = vpack.c.b16 %v726, %v718
        %v831 = vpack.c.b16 %v727, %v719
        %v832 = vpack.c.b16 %v728, %v720
        %v833 = vpack.c.b16 %v729, %v721
        %v834 = vpack.c.b16 %v738, %v730
        %v835 = vpack.c.b16 %v739, %v731
        %v836 = vpack.c.b16 %v740, %v732
        %v837 = vpack.c.b16 %v741, %v733
        %v838 = vpack.c.b16 %v742, %v734
        %v839 = vpack.c.b16 %v743, %v735
        %v840 = vpack.c.b16 %v744, %v736
        %v841 = vpack.c.b16 %v745, %v737
        %v842 = vpack.c.b16 %v754, %v746
        %v843 = vpack.c.b16 %v755, %v747
        %v844 = vpack.c.b16 %v756, %v748
        %v845 = vpack.c.b16 %v757, %v749
        %v846 = vpack.c.b16 %v758, %v750
        %v847 = vpack.c.b16 %v759, %v751
        %v848 = vpack.c.b16 %v760, %v752
        %v849 = vpack.c.b16 %v761, %v753
        %v850 = vpack.c.b16 %v770, %v762
        %v851 = vpack.c.b16 %v771, %v763
        %v852 = vpack.c.b16 %v772, %v764
        %v853 = vpack.c.b16 %v773, %v765
        %v854 = vpack.c.b16 %v774, %v766
        %v855 = vpack.c.b16 %v775, %v767
        %v856 = vpack.c.b16 %v776, %v768
        %v857 = vpack.c.b16 %v777, %v769
        %v858 = vpack.c.b16 %v786, %v778
        %v859 = vpack.c.b16 %v787, %v779
        %v860 = vpack.c.b16 %v788, %v780
        %v861 = vpack.c.b16 %v789, %v781
        %v862 = vpack.c.b16 %v790, %v782
        %v863 = vpack.c.b16 %v791, %v783
        %v864 = vpack.c.b16 %v792, %v784
        %v865 = vpack.c.b16 %v793, %v785
        %v866 = vpack.c.b16 %v802, %v794
        %v867 = vpack.c.b16 %v803, %v795
        %v868 = vpack.c.b16 %v804, %v796
        %v869 = vpack.c.b16 %v805, %v797
        %v870 = vpack.c.b16 %v806, %v798
        %v871 = vpack.c.b16 %v807, %v799
        %v872 = vpack.c.b16 %v808, %v800
        %v873 = vpack.c.b16 %v809, %v801
        %938 = vmatprep.subr.bf16.mxu0 %v811
        %939 = vmatpush1.bf16.msra.mxu0 %v810
        %940 = vmatprep.subr.bf16.mxu0 %v819
        %941 = vmatpush1.bf16.msra.mxu0 %v818
        %942 = vmatprep.subr.bf16.mxu0 %v827
        %943 = vmatpush1.bf16.msra.mxu0 %v826
        %944 = vmatprep.subr.bf16.mxu0 %v835
        %945 = vmatpush1.bf16.msra.mxu0 %v834
        %946 = vmatprep.subr.bf16.mxu0 %v843
        %947 = vmatpush1.bf16.msra.mxu0 %v842
        %948 = vmatprep.subr.bf16.mxu0 %v851
        %949 = vmatpush1.bf16.msra.mxu0 %v850
        %950 = vmatprep.subr.bf16.mxu0 %v859
        %951 = vmatpush1.bf16.msra.mxu0 %v858
        %952 = vmatprep.subr.bf16.mxu0 %v867
        %953 = vmatpush1.bf16.msra.mxu0 %v866
        %954 = vmatprep.subr.bf16.mxu0 0
        %955 = vmatpush1.bf16.msra.mxu0 0
        %956 = vmatprep.subr.bf16.mxu0 0
        %957 = vmatpush1.bf16.msra.mxu0 0
        %958 = vmatprep.subr.bf16.mxu0 0
        %959 = vmatpush1.bf16.msra.mxu0 0
        %960 = vmatprep.subr.bf16.mxu0 0
        %961 = vmatpush1.bf16.msra.mxu0 0
        %962 = vmatprep.subr.bf16.mxu0 0
        %963 = vmatpush1.bf16.msra.mxu0 0
        %964 = vmatprep.subr.bf16.mxu0 0
        %965 = vmatpush1.bf16.msra.mxu0 0
        %966 = vmatprep.subr.bf16.mxu0 0
        %967 = vmatpush1.bf16.msra.mxu0 0
        %968 = vmatprep.subr.bf16.mxu0 0
        %969 = vmatpush1.bf16.msra.mxu0 0
        %970 = vmatprep.mubr.bf16.mxu0 0
        %971 = vmatmul.mubr.bf16.gmra.mrb[0].mxu0 %v505
        %v972 = vpop.f32.mrb[0].mxu0
        %v973 = vadd.f32 %v581, %v972
        %v974 = vpop.f32.mrb[0].mxu0
        %v975 = vadd.f32 %v585, %v974
        %v976 = vpop.f32.mrb[0].mxu0
        %v977 = vadd.f32 %v581, %v976
        %v978 = vpop.f32.mrb[0].mxu0
        %v979 = vadd.f32 %v585, %v978
        %980 = vmatprep.mubr.bf16.mxu0 0
        %981 = vmatmul.mubr.bf16.gmra.mrb[0].mxu0 %v506
        %v982 = vpop.f32.mrb[0].mxu0
        %v983 = vadd.f32 %v581, %v982
        %v984 = vpop.f32.mrb[0].mxu0
        %v985 = vadd.f32 %v585, %v984
        %v986 = vpop.f32.mrb[0].mxu0
        %v987 = vadd.f32 %v581, %v986
        %v988 = vpop.f32.mrb[0].mxu0
        %v989 = vadd.f32 %v585, %v988
        %990 = vmatprep.mubr.bf16.mxu0 0
        %991 = vmatmul.mubr.bf16.gmra.mrb[0].mxu0 %v507
        %v992 = vpop.f32.mrb[0].mxu0
        %v993 = vadd.f32 %v581, %v992
        %v994 = vpop.f32.mrb[0].mxu0
        %v995 = vadd.f32 %v585, %v994
        %v996 = vpop.f32.mrb[0].mxu0
        %v997 = vadd.f32 %v581, %v996
        %v998 = vpop.f32.mrb[0].mxu0
        %v999 = vadd.f32 %v585, %v998
        %1000 = vmatprep.mubr.bf16.mxu0 0
        %1001 = vmatmul.mubr.bf16.gmra.mrb[0].mxu0 %v508
        %v1002 = vpop.f32.mrb[0].mxu0
        %v1003 = vadd.f32 %v581, %v1002
        %v1004 = vpop.f32.mrb[0].mxu0
        %v1005 = vadd.f32 %v585, %v1004
        %v1006 = vpop.f32.mrb[0].mxu0
        %v1007 = vadd.f32 %v581, %v1006
        %v1008 = vpop.f32.mrb[0].mxu0
        %v1009 = vadd.f32 %v585, %v1008
        %1010 = vmatprep.mubr.bf16.mxu0 0
        %1011 = vmatmul.mubr.bf16.gmra.mrb[0].mxu0 %v509
        %v1012 = vpop.f32.mrb[0].mxu0
        %v1013 = vadd.f32 %v581, %v1012
        %v1014 = vpop.f32.mrb[0].mxu0
        %v1015 = vadd.f32 %v585, %v1014
        %v1016 = vpop.f32.mrb[0].mxu0
        %v1017 = vadd.f32 %v581, %v1016
        %v1018 = vpop.f32.mrb[0].mxu0
        %v1019 = vadd.f32 %v585, %v1018
        %1020 = vmatprep.mubr.bf16.mxu0 0
        %1021 = vmatmul.mubr.bf16.gmra.mrb[0].mxu0 %v510
        %v1022 = vpop.f32.mrb[0].mxu0
        %v1023 = vadd.f32 %v581, %v1022
        %v1024 = vpop.f32.mrb[0].mxu0
        %v1025 = vadd.f32 %v585, %v1024
        %v1026 = vpop.f32.mrb[0].mxu0
        %v1027 = vadd.f32 %v581, %v1026
        %v1028 = vpop.f32.mrb[0].mxu0
        %v1029 = vadd.f32 %v585, %v1028
        %1030 = vmatprep.mubr.bf16.mxu0 0
        %1031 = vmatmul.mubr.bf16.gmra.mrb[0].mxu0 %v511
        %v1032 = vpop.f32.mrb[0].mxu0
        %v1033 = vpop.f32.mrb[0].mxu0
        %v1034 = vpop.f32.mrb[0].mxu0
        %v1035 = vpop.f32.mrb[0].mxu0
        %1036 = vdwg.mxu0
        %1037 = vmatprep.subr.bf16.mxu0 %v813
        %1038 = vmatpush1.bf16.msra.mxu0 %v812
        %1039 = vmatprep.subr.bf16.mxu0 %v821
        %1040 = vmatpush1.bf16.msra.mxu0 %v820
        %1041 = vmatprep.subr.bf16.mxu0 %v829
        %1042 = vmatpush1.bf16.msra.mxu0 %v828
        %1043 = vmatprep.subr.bf16.mxu0 %v837
        %1044 = vmatpush1.bf16.msra.mxu0 %v836
        %1045 = vmatprep.subr.bf16.mxu0 %v845
        %1046 = vmatpush1.bf16.msra.mxu0 %v844
        %1047 = vmatprep.subr.bf16.mxu0 %v853
        %1048 = vmatpush1.bf16.msra.mxu0 %v852
        %1049 = vmatprep.subr.bf16.mxu0 %v861
        %1050 = vmatpush1.bf16.msra.mxu0 %v860
        %1051 = vmatprep.subr.bf16.mxu0 %v869
        %1052 = vmatpush1.bf16.msra.mxu0 %v868
        %1053 = vmatprep.subr.bf16.mxu0 0
        %1054 = vmatpush1.bf16.msra.mxu0 0
        %1055 = vmatprep.subr.bf16.mxu0 0
        %1056 = vmatpush1.bf16.msra.mxu0 0
        %1057 = vmatprep.subr.bf16.mxu0 0
        %1058 = vmatpush1.bf16.msra.mxu0 0
        %1059 = vmatprep.subr.bf16.mxu0 0
        %1060 = vmatpush1.bf16.msra.mxu0 0
        %1061 = vmatprep.subr.bf16.mxu0 0
        %1062 = vmatpush1.bf16.msra.mxu0 0
        %1063 = vmatprep.subr.bf16.mxu0 0
        %1064 = vmatpush1.bf16.msra.mxu0 0
        %1065 = vmatprep.subr.bf16.mxu0 0
        %1066 = vmatpush1.bf16.msra.mxu0 0
        %1067 = vmatprep.subr.bf16.mxu0 0
        %1068 = vmatpush1.bf16.msra.mxu0 0
        %1069 = vmatprep.mubr.bf16.mxu0 0
        %1070 = vmatmul.mubr.bf16.gmra.mrb[0].mxu0 %v505
        %v1071 = vpop.f32.mrb[0].mxu0
        %v1072 = vadd.f32 %v589, %v1071
        %v1073 = vpop.f32.mrb[0].mxu0
        %v1074 = vadd.f32 %v593, %v1073
        %v1075 = vpop.f32.mrb[0].mxu0
        %v1076 = vadd.f32 %v589, %v1075
        %v1077 = vpop.f32.mrb[0].mxu0
        %v1078 = vadd.f32 %v593, %v1077
        %1079 = vmatprep.mubr.bf16.mxu0 0
        %1080 = vmatmul.mubr.bf16.gmra.mrb[0].mxu0 %v506
        %v1081 = vpop.f32.mrb[0].mxu0
        %v1082 = vadd.f32 %v589, %v1081
        %v1083 = vpop.f32.mrb[0].mxu0
        %v1084 = vadd.f32 %v593, %v1083
        %v1085 = vpop.f32.mrb[0].mxu0
        %v1086 = vadd.f32 %v589, %v1085
        %v1087 = vpop.f32.mrb[0].mxu0
        %v1088 = vadd.f32 %v593, %v1087
        %1089 = vmatprep.mubr.bf16.mxu0 0
        %1090 = vmatmul.mubr.bf16.gmra.mrb[0].mxu0 %v507
        %v1091 = vpop.f32.mrb[0].mxu0
        %v1092 = vadd.f32 %v589, %v1091
        %v1093 = vpop.f32.mrb[0].mxu0
        %v1094 = vadd.f32 %v593, %v1093
        %v1095 = vpop.f32.mrb[0].mxu0
        %v1096 = vadd.f32 %v589, %v1095
        %v1097 = vpop.f32.mrb[0].mxu0
        %v1098 = vadd.f32 %v593, %v1097
        %1099 = vmatprep.mubr.bf16.mxu0 0
        %1100 = vmatmul.mubr.bf16.gmra.mrb[0].mxu0 %v508
        %v1101 = vpop.f32.mrb[0].mxu0
        %v1102 = vadd.f32 %v589, %v1101
        %v1103 = vpop.f32.mrb[0].mxu0
        %v1104 = vadd.f32 %v593, %v1103
        %v1105 = vpop.f32.mrb[0].mxu0
        %v1106 = vadd.f32 %v589, %v1105
        %v1107 = vpop.f32.mrb[0].mxu0
        %v1108 = vadd.f32 %v593, %v1107
        %1109 = vmatprep.mubr.bf16.mxu0 0
        %1110 = vmatmul.mubr.bf16.gmra.mrb[0].mxu0 %v509
        %v1111 = vpop.f32.mrb[0].mxu0
        %v1112 = vadd.f32 %v589, %v1111
        %v1113 = vpop.f32.mrb[0].mxu0
        %v1114 = vadd.f32 %v593, %v1113
        %v1115 = vpop.f32.mrb[0].mxu0
        %v1116 = vadd.f32 %v589, %v1115
        %v1117 = vpop.f32.mrb[0].mxu0
        %v1118 = vadd.f32 %v593, %v1117
        %1119 = vmatprep.mubr.bf16.mxu0 0
        %1120 = vmatmul.mubr.bf16.gmra.mrb[0].mxu0 %v510
        %v1121 = vpop.f32.mrb[0].mxu0
        %v1122 = vadd.f32 %v589, %v1121
        %v1123 = vpop.f32.mrb[0].mxu0
        %v1124 = vadd.f32 %v593, %v1123
        %v1125 = vpop.f32.mrb[0].mxu0
        %v1126 = vadd.f32 %v589, %v1125
        %v1127 = vpop.f32.mrb[0].mxu0
        %v1128 = vadd.f32 %v593, %v1127
        %1129 = vmatprep.mubr.bf16.mxu0 0
        %1130 = vmatmul.mubr.bf16.gmra.mrb[0].mxu0 %v511
        %v1131 = vpop.f32.mrb[0].mxu0
        %v1132 = vpop.f32.mrb[0].mxu0
        %v1133 = vpop.f32.mrb[0].mxu0
        %v1134 = vpop.f32.mrb[0].mxu0
        %1135 = vdwg.mxu0
        %1136 = vmatprep.subr.bf16.mxu0 %v815
        %1137 = vmatpush1.bf16.msra.mxu0 %v814
        %1138 = vmatprep.subr.bf16.mxu0 %v823
        %1139 = vmatpush1.bf16.msra.mxu0 %v822
        %1140 = vmatprep.subr.bf16.mxu0 %v831
        %1141 = vmatpush1.bf16.msra.mxu0 %v830
        %1142 = vmatprep.subr.bf16.mxu0 %v839
        %1143 = vmatpush1.bf16.msra.mxu0 %v838
        %1144 = vmatprep.subr.bf16.mxu0 %v847
        %1145 = vmatpush1.bf16.msra.mxu0 %v846
        %1146 = vmatprep.subr.bf16.mxu0 %v855
        %1147 = vmatpush1.bf16.msra.mxu0 %v854
        %1148 = vmatprep.subr.bf16.mxu0 %v863
        %1149 = vmatpush1.bf16.msra.mxu0 %v862
        %1150 = vmatprep.subr.bf16.mxu0 %v871
        %1151 = vmatpush1.bf16.msra.mxu0 %v870
        %1152 = vmatprep.subr.bf16.mxu0 0
        %1153 = vmatpush1.bf16.msra.mxu0 0
        %1154 = vmatprep.subr.bf16.mxu0 0
        %1155 = vmatpush1.bf16.msra.mxu0 0
        %1156 = vmatprep.subr.bf16.mxu0 0
        %1157 = vmatpush1.bf16.msra.mxu0 0
        %1158 = vmatprep.subr.bf16.mxu0 0
        %1159 = vmatpush1.bf16.msra.mxu0 0
        %1160 = vmatprep.subr.bf16.mxu0 0
        %1161 = vmatpush1.bf16.msra.mxu0 0
        %1162 = vmatprep.subr.bf16.mxu0 0
        %1163 = vmatpush1.bf16.msra.mxu0 0
        %1164 = vmatprep.subr.bf16.mxu0 0
        %1165 = vmatpush1.bf16.msra.mxu0 0
        %1166 = vmatprep.subr.bf16.mxu0 0
        %1167 = vmatpush1.bf16.msra.mxu0 0
        %1168 = vmatprep.mubr.bf16.mxu0 0
        %1169 = vmatmul.mubr.bf16.gmra.mrb[0].mxu0 %v505
        %v1170 = vpop.f32.mrb[0].mxu0
        %v1171 = vadd.f32 %v597, %v1170
        %v1172 = vpop.f32.mrb[0].mxu0
        %v1173 = vadd.f32 %v601, %v1172
        %v1174 = vpop.f32.mrb[0].mxu0
        %v1175 = vadd.f32 %v597, %v1174
        %v1176 = vpop.f32.mrb[0].mxu0
        %v1177 = vadd.f32 %v601, %v1176
        %1178 = vmatprep.mubr.bf16.mxu0 0
        %1179 = vmatmul.mubr.bf16.gmra.mrb[0].mxu0 %v506
        %v1180 = vpop.f32.mrb[0].mxu0
        %v1181 = vadd.f32 %v597, %v1180
        %v1182 = vpop.f32.mrb[0].mxu0
        %v1183 = vadd.f32 %v601, %v1182
        %v1184 = vpop.f32.mrb[0].mxu0
        %v1185 = vadd.f32 %v597, %v1184
        %v1186 = vpop.f32.mrb[0].mxu0
        %v1187 = vadd.f32 %v601, %v1186
        %1188 = vmatprep.mubr.bf16.mxu0 0
        %1189 = vmatmul.mubr.bf16.gmra.mrb[0].mxu0 %v507
        %v1190 = vpop.f32.mrb[0].mxu0
        %v1191 = vadd.f32 %v597, %v1190
        %v1192 = vpop.f32.mrb[0].mxu0
        %v1193 = vadd.f32 %v601, %v1192
        %v1194 = vpop.f32.mrb[0].mxu0
        %v1195 = vadd.f32 %v597, %v1194
        %v1196 = vpop.f32.mrb[0].mxu0
        %v1197 = vadd.f32 %v601, %v1196
        %1198 = vmatprep.mubr.bf16.mxu0 0
        %1199 = vmatmul.mubr.bf16.gmra.mrb[0].mxu0 %v508
        %v1200 = vpop.f32.mrb[0].mxu0
        %v1201 = vadd.f32 %v597, %v1200
        %v1202 = vpop.f32.mrb[0].mxu0
        %v1203 = vadd.f32 %v601, %v1202
        %v1204 = vpop.f32.mrb[0].mxu0
        %v1205 = vadd.f32 %v597, %v1204
        %v1206 = vpop.f32.mrb[0].mxu0
        %v1207 = vadd.f32 %v601, %v1206
        %1208 = vmatprep.mubr.bf16.mxu0 0
        %1209 = vmatmul.mubr.bf16.gmra.mrb[0].mxu0 %v509
        %v1210 = vpop.f32.mrb[0].mxu0
        %v1211 = vadd.f32 %v597, %v1210
        %v1212 = vpop.f32.mrb[0].mxu0
        %v1213 = vadd.f32 %v601, %v1212
        %v1214 = vpop.f32.mrb[0].mxu0
        %v1215 = vadd.f32 %v597, %v1214
        %v1216 = vpop.f32.mrb[0].mxu0
        %v1217 = vadd.f32 %v601, %v1216
        %1218 = vmatprep.mubr.bf16.mxu0 0
        %1219 = vmatmul.mubr.bf16.gmra.mrb[0].mxu0 %v510
        %v1220 = vpop.f32.mrb[0].mxu0
        %v1221 = vadd.f32 %v597, %v1220
        %v1222 = vpop.f32.mrb[0].mxu0
        %v1223 = vadd.f32 %v601, %v1222
        %v1224 = vpop.f32.mrb[0].mxu0
        %v1225 = vadd.f32 %v597, %v1224
        %v1226 = vpop.f32.mrb[0].mxu0
        %v1227 = vadd.f32 %v601, %v1226
        %1228 = vmatprep.mubr.bf16.mxu0 0
        %1229 = vmatmul.mubr.bf16.gmra.mrb[0].mxu0 %v511
        %v1230 = vpop.f32.mrb[0].mxu0
        %v1231 = vpop.f32.mrb[0].mxu0
        %v1232 = vpop.f32.mrb[0].mxu0
        %v1233 = vpop.f32.mrb[0].mxu0
        %1234 = vdwg.mxu0
        %1235 = vmatprep.subr.bf16.mxu0 %v817
        %1236 = vmatpush1.bf16.msra.mxu0 %v816
        %1237 = vmatprep.subr.bf16.mxu0 %v825
        %1238 = vmatpush1.bf16.msra.mxu0 %v824
        %1239 = vmatprep.subr.bf16.mxu0 %v833
        %1240 = vmatpush1.bf16.msra.mxu0 %v832
        %1241 = vmatprep.subr.bf16.mxu0 %v841
        %1242 = vmatpush1.bf16.msra.mxu0 %v840
        %1243 = vmatprep.subr.bf16.mxu0 %v849
        %1244 = vmatpush1.bf16.msra.mxu0 %v848
        %1245 = vmatprep.subr.bf16.mxu0 %v857
        %1246 = vmatpush1.bf16.msra.mxu0 %v856
        %1247 = vmatprep.subr.bf16.mxu0 %v865
        %1248 = vmatpush1.bf16.msra.mxu0 %v864
        %1249 = vmatprep.subr.bf16.mxu0 %v873
        %1250 = vmatpush1.bf16.msra.mxu0 %v872
        %1251 = vmatprep.subr.bf16.mxu0 0
        %1252 = vmatpush1.bf16.msra.mxu0 0
        %1253 = vmatprep.subr.bf16.mxu0 0
        %1254 = vmatpush1.bf16.msra.mxu0 0
        %1255 = vmatprep.subr.bf16.mxu0 0
        %1256 = vmatpush1.bf16.msra.mxu0 0
        %1257 = vmatprep.subr.bf16.mxu0 0
        %1258 = vmatpush1.bf16.msra.mxu0 0
        %1259 = vmatprep.subr.bf16.mxu0 0
        %1260 = vmatpush1.bf16.msra.mxu0 0
        %1261 = vmatprep.subr.bf16.mxu0 0
        %1262 = vmatpush1.bf16.msra.mxu0 0
        %1263 = vmatprep.subr.bf16.mxu0 0
        %1264 = vmatpush1.bf16.msra.mxu0 0
        %1265 = vmatprep.subr.bf16.mxu0 0
        %1266 = vmatpush1.bf16.msra.mxu0 0
        %1267 = vmatprep.mubr.bf16.mxu0 0
        %1268 = vmatmul.mubr.bf16.gmra.mrb[0].mxu0 %v505
        %v1269 = vpop.f32.mrb[0].mxu0
        %v1270 = vadd.f32 %v605, %v1269
        %v1271 = vpop.f32.mrb[0].mxu0
        %v1272 = vadd.f32 %v609, %v1271
        %v1273 = vpop.f32.mrb[0].mxu0
        %v1274 = vadd.f32 %v605, %v1273
        %v1275 = vpop.f32.mrb[0].mxu0
        %v1276 = vadd.f32 %v609, %v1275
        %1277 = vmatprep.mubr.bf16.mxu0 0
        %1278 = vmatmul.mubr.bf16.gmra.mrb[0].mxu0 %v506
        %v1279 = vpop.f32.mrb[0].mxu0
        %v1280 = vadd.f32 %v605, %v1279
        %v1281 = vpop.f32.mrb[0].mxu0
        %v1282 = vadd.f32 %v609, %v1281
        %v1283 = vpop.f32.mrb[0].mxu0
        %v1284 = vadd.f32 %v605, %v1283
        %v1285 = vpop.f32.mrb[0].mxu0
        %v1286 = vadd.f32 %v609, %v1285
        %1287 = vmatprep.mubr.bf16.mxu0 0
        %1288 = vmatmul.mubr.bf16.gmra.mrb[0].mxu0 %v507
        %v1289 = vpop.f32.mrb[0].mxu0
        %v1290 = vadd.f32 %v605, %v1289
        %v1291 = vpop.f32.mrb[0].mxu0
        %v1292 = vadd.f32 %v609, %v1291
        %v1293 = vpop.f32.mrb[0].mxu0
        %v1294 = vadd.f32 %v605, %v1293
        %v1295 = vpop.f32.mrb[0].mxu0
        %v1296 = vadd.f32 %v609, %v1295
        %1297 = vmatprep.mubr.bf16.mxu0 0
        %1298 = vmatmul.mubr.bf16.gmra.mrb[0].mxu0 %v508
        %v1299 = vpop.f32.mrb[0].mxu0
        %v1300 = vadd.f32 %v605, %v1299
        %v1301 = vpop.f32.mrb[0].mxu0
        %v1302 = vadd.f32 %v609, %v1301
        %v1303 = vpop.f32.mrb[0].mxu0
        %v1304 = vadd.f32 %v605, %v1303
        %v1305 = vpop.f32.mrb[0].mxu0
        %v1306 = vadd.f32 %v609, %v1305
        %1307 = vmatprep.mubr.bf16.mxu0 0
        %1308 = vmatmul.mubr.bf16.gmra.mrb[0].mxu0 %v509
        %v1309 = vpop.f32.mrb[0].mxu0
        %v1310 = vadd.f32 %v605, %v1309
        %v1311 = vpop.f32.mrb[0].mxu0
        %v1312 = vadd.f32 %v609, %v1311
        %v1313 = vpop.f32.mrb[0].mxu0
        %v1314 = vadd.f32 %v605, %v1313
        %v1315 = vpop.f32.mrb[0].mxu0
        %v1316 = vadd.f32 %v609, %v1315
        %1317 = vmatprep.mubr.bf16.mxu0 0
        %1318 = vmatmul.mubr.bf16.gmra.mrb[0].mxu0 %v510
        %v1319 = vpop.f32.mrb[0].mxu0
        %v1320 = vadd.f32 %v605, %v1319
        %v1321 = vpop.f32.mrb[0].mxu0
        %v1322 = vadd.f32 %v609, %v1321
        %v1323 = vpop.f32.mrb[0].mxu0
        %v1324 = vadd.f32 %v605, %v1323
        %v1325 = vpop.f32.mrb[0].mxu0
        %v1326 = vadd.f32 %v609, %v1325
        %1327 = vmatprep.mubr.bf16.mxu0 0
        %1328 = vmatmul.mubr.bf16.gmra.mrb[0].mxu0 %v511
        %v1329 = vpop.f32.mrb[0].mxu0
        %v1330 = vpop.f32.mrb[0].mxu0
        %v1331 = vpop.f32.mrb[0].mxu0
        %v1332 = vpop.f32.mrb[0].mxu0
        %1333 = vdwg.mxu0
        %v1334 = vmax.f32 %v973, 0.0
        %v1335 = vmax.f32 %v975, 0.0
        %v1336 = vmax.f32 %v1072, 0.0
        %v1337 = vmax.f32 %v1074, 0.0
        %v1338 = vmax.f32 %v1171, 0.0
        %v1339 = vmax.f32 %v1173, 0.0
        %v1340 = vmax.f32 %v1270, 0.0
        %v1341 = vmax.f32 %v1272, 0.0
        %v1342 = vmax.f32 %v977, 0.0
        %v1343 = vmax.f32 %v979, 0.0
        %v1344 = vmax.f32 %v1076, 0.0
        %v1345 = vmax.f32 %v1078, 0.0
        %v1346 = vmax.f32 %v1175, 0.0
        %v1347 = vmax.f32 %v1177, 0.0
        %v1348 = vmax.f32 %v1274, 0.0
        %v1349 = vmax.f32 %v1276, 0.0
        %v1350 = vmax.f32 %v983, 0.0
        %v1351 = vmax.f32 %v985, 0.0
        %v1352 = vmax.f32 %v1082, 0.0
        %v1353 = vmax.f32 %v1084, 0.0
        %v1354 = vmax.f32 %v1181, 0.0
        %v1355 = vmax.f32 %v1183, 0.0
        %v1356 = vmax.f32 %v1280, 0.0
        %v1357 = vmax.f32 %v1282, 0.0
        %v1358 = vmax.f32 %v987, 0.0
        %v1359 = vmax.f32 %v989, 0.0
        %v1360 = vmax.f32 %v1086, 0.0
        %v1361 = vmax.f32 %v1088, 0.0
        %v1362 = vmax.f32 %v1185, 0.0
        %v1363 = vmax.f32 %v1187, 0.0
        %v1364 = vmax.f32 %v1284, 0.0
        %v1365 = vmax.f32 %v1286, 0.0
        %v1366 = vmax.f32 %v993, 0.0
        %v1367 = vmax.f32 %v995, 0.0
        %v1368 = vmax.f32 %v1092, 0.0
        %v1369 = vmax.f32 %v1094, 0.0
        %v1370 = vmax.f32 %v1191, 0.0
        %v1371 = vmax.f32 %v1193, 0.0
        %v1372 = vmax.f32 %v1290, 0.0
        %v1373 = vmax.f32 %v1292, 0.0
        %v1374 = vmax.f32 %v997, 0.0
        %v1375 = vmax.f32 %v999, 0.0
        %v1376 = vmax.f32 %v1096, 0.0
        %v1377 = vmax.f32 %v1098, 0.0
        %v1378 = vmax.f32 %v1195, 0.0
        %v1379 = vmax.f32 %v1197, 0.0
        %v1380 = vmax.f32 %v1294, 0.0
        %v1381 = vmax.f32 %v1296, 0.0
        %v1382 = vmax.f32 %v1003, 0.0
        %v1383 = vmax.f32 %v1005, 0.0
        %v1384 = vmax.f32 %v1102, 0.0
        %v1385 = vmax.f32 %v1104, 0.0
        %v1386 = vmax.f32 %v1201, 0.0
        %v1387 = vmax.f32 %v1203, 0.0
        %v1388 = vmax.f32 %v1300, 0.0
        %v1389 = vmax.f32 %v1302, 0.0
        %v1390 = vmax.f32 %v1007, 0.0
        %v1391 = vmax.f32 %v1009, 0.0
        %v1392 = vmax.f32 %v1106, 0.0
        %v1393 = vmax.f32 %v1108, 0.0
        %v1394 = vmax.f32 %v1205, 0.0
        %v1395 = vmax.f32 %v1207, 0.0
        %v1396 = vmax.f32 %v1304, 0.0
        %v1397 = vmax.f32 %v1306, 0.0
        %v1398 = vmax.f32 %v1013, 0.0
        %v1399 = vmax.f32 %v1015, 0.0
        %v1400 = vmax.f32 %v1112, 0.0
        %v1401 = vmax.f32 %v1114, 0.0
        %v1402 = vmax.f32 %v1211, 0.0
        %v1403 = vmax.f32 %v1213, 0.0
        %v1404 = vmax.f32 %v1310, 0.0
        %v1405 = vmax.f32 %v1312, 0.0
        %v1406 = vmax.f32 %v1017, 0.0
        %v1407 = vmax.f32 %v1019, 0.0
        %v1408 = vmax.f32 %v1116, 0.0
        %v1409 = vmax.f32 %v1118, 0.0
        %v1410 = vmax.f32 %v1215, 0.0
        %v1411 = vmax.f32 %v1217, 0.0
        %v1412 = vmax.f32 %v1314, 0.0
        %v1413 = vmax.f32 %v1316, 0.0
        %v1414 = vmax.f32 %v1023, 0.0
        %v1415 = vmax.f32 %v1025, 0.0
        %v1416 = vmax.f32 %v1122, 0.0
        %v1417 = vmax.f32 %v1124, 0.0
        %v1418 = vmax.f32 %v1221, 0.0
        %v1419 = vmax.f32 %v1223, 0.0
        %v1420 = vmax.f32 %v1320, 0.0
        %v1421 = vmax.f32 %v1322, 0.0
        %v1422 = vmax.f32 %v1027, 0.0
        %v1423 = vmax.f32 %v1029, 0.0
        %v1424 = vmax.f32 %v1126, 0.0
        %v1425 = vmax.f32 %v1128, 0.0
        %v1426 = vmax.f32 %v1225, 0.0
        %v1427 = vmax.f32 %v1227, 0.0
        %v1428 = vmax.f32 %v1324, 0.0
        %v1429 = vmax.f32 %v1326, 0.0
        %v1430 = vmax.f32 %v1334, %v1338
        %v1431 = vmax.f32 %v1335, %v1339
        %v1432 = vmax.f32 %v1336, %v1340
        %v1433 = vmax.f32 %v1337, %v1341
        %v1434 = vmax.f32 %v1342, %v1346
        %v1435 = vmax.f32 %v1343, %v1347
        %v1436 = vmax.f32 %v1344, %v1348
        %v1437 = vmax.f32 %v1345, %v1349
        %v1438 = vmax.f32 %v1350, %v1354
        %v1439 = vmax.f32 %v1351, %v1355
        %v1440 = vmax.f32 %v1352, %v1356
        %v1441 = vmax.f32 %v1353, %v1357
        %v1442 = vmax.f32 %v1358, %v1362
        %v1443 = vmax.f32 %v1359, %v1363
        %v1444 = vmax.f32 %v1360, %v1364
        %v1445 = vmax.f32 %v1361, %v1365
        %v1446 = vmax.f32 %v1366, %v1370
        %v1447 = vmax.f32 %v1367, %v1371
        %v1448 = vmax.f32 %v1368, %v1372
        %v1449 = vmax.f32 %v1369, %v1373
        %v1450 = vmax.f32 %v1374, %v1378
        %v1451 = vmax.f32 %v1375, %v1379
        %v1452 = vmax.f32 %v1376, %v1380
        %v1453 = vmax.f32 %v1377, %v1381
        %v1454 = vmax.f32 %v1382, %v1386
        %v1455 = vmax.f32 %v1383, %v1387
        %v1456 = vmax.f32 %v1384, %v1388
        %v1457 = vmax.f32 %v1385, %v1389
        %v1458 = vmax.f32 %v1390, %v1394
        %v1459 = vmax.f32 %v1391, %v1395
        %v1460 = vmax.f32 %v1392, %v1396
        %v1461 = vmax.f32 %v1393, %v1397
        %v1462 = vmax.f32 %v1398, %v1402
        %v1463 = vmax.f32 %v1399, %v1403
        %v1464 = vmax.f32 %v1400, %v1404
        %v1465 = vmax.f32 %v1401, %v1405
        %v1466 = vmax.f32 %v1406, %v1410
        %v1467 = vmax.f32 %v1407, %v1411
        %v1468 = vmax.f32 %v1408, %v1412
        %v1469 = vmax.f32 %v1409, %v1413
        %v1470 = vmax.f32 %v1414, %v1418
        %v1471 = vmax.f32 %v1415, %v1419
        %v1472 = vmax.f32 %v1416, %v1420
        %v1473 = vmax.f32 %v1417, %v1421
        %v1474 = vmax.f32 %v1422, %v1426
        %v1475 = vmax.f32 %v1423, %v1427
        %v1476 = vmax.f32 %v1424, %v1428
        %v1477 = vmax.f32 %v1425, %v1429
        %v1478 = vmax.f32 %v1430, %v1432
        %v1479 = vmax.f32 %v1431, %v1433
        %v1480 = vmax.f32 %v1434, %v1436
        %v1481 = vmax.f32 %v1435, %v1437
        %v1482 = vmax.f32 %v1438, %v1440
        %v1483 = vmax.f32 %v1439, %v1441
        %v1484 = vmax.f32 %v1442, %v1444
        %v1485 = vmax.f32 %v1443, %v1445
        %v1486 = vmax.f32 %v1446, %v1448
        %v1487 = vmax.f32 %v1447, %v1449
        %v1488 = vmax.f32 %v1450, %v1452
        %v1489 = vmax.f32 %v1451, %v1453
        %v1490 = vmax.f32 %v1454, %v1456
        %v1491 = vmax.f32 %v1455, %v1457
        %v1492 = vmax.f32 %v1458, %v1460
        %v1493 = vmax.f32 %v1459, %v1461
        %v1494 = vmax.f32 %v1462, %v1464
        %v1495 = vmax.f32 %v1463, %v1465
        %v1496 = vmax.f32 %v1466, %v1468
        %v1497 = vmax.f32 %v1467, %v1469
        %v1498 = vmax.f32 %v1470, %v1472
        %v1499 = vmax.f32 %v1471, %v1473
        %v1500 = vmax.f32 %v1474, %v1476
        %v1501 = vmax.f32 %v1475, %v1477
        %v1502 = vpack.c.bf16 %v1480, %v1478
        %v1503 = vpack.c.bf16 %v1481, %v1479
        %v1504 = vpack.c.bf16 %v1482, %v1480
        %v1505 = vpack.c.bf16 %v1483, %v1481
        %v1506 = vpack.c.bf16 %v1484, %v1482
        %v1507 = vpack.c.bf16 %v1485, %v1483
        %v1508 = vpack.c.bf16 %v1486, %v1484
        %v1509 = vpack.c.bf16 %v1487, %v1485
        %v1510 = vpack.c.bf16 %v1488, %v1486
        %v1511 = vpack.c.bf16 %v1489, %v1487
        %v1512 = vpack.c.bf16 %v1490, %v1488
        %v1513 = vpack.c.bf16 %v1491, %v1489
        %v1514 = vpack.c.bf16 %v1492, %v1490
        %v1515 = vpack.c.bf16 %v1493, %v1491
        %v1516 = vpack.c.bf16 %v1494, %v1492
        %v1517 = vpack.c.bf16 %v1495, %v1493
        %v1518 = vpack.c.bf16 %v1496, %v1494
        %v1519 = vpack.c.bf16 %v1497, %v1495
        %v1520 = vpack.c.bf16 %v1498, %v1496
        %v1521 = vpack.c.bf16 %v1499, %v1497
        %v1522 = vpack.c.bf16 %v1500, %v1498
        %v1523 = vpack.c.bf16 %v1501, %v1499
        %v1524 = vld [vmem:[#allocation8] sm:$0xff]
        %v1525 = vld [vmem:[#allocation8 + $0x8] sm:$0xf]
        %v1526 = vld [vmem:[#allocation8 + $0xc] sm:$0xff]
        %v1527 = vld [vmem:[#allocation8 + $0x14] sm:$0xf]
        %v1528 = vld [vmem:[#allocation8 + $0x18] sm:$0xff]
        %v1529 = vld [vmem:[#allocation8 + $0x20] sm:$0xf]
        %v1530 = vld [vmem:[#allocation8 + $0x24] sm:$0xff]
        %v1531 = vld [vmem:[#allocation8 + $0x2c] sm:$0xf]
        %v1532 = vld [vmem:[#allocation8 + $0x30] sm:$0xff]
        %v1533 = vld [vmem:[#allocation8 + $0x38] sm:$0xf]
        %v1534 = vld [vmem:[#allocation8 + $0x3c] sm:$0xff]
        %v1535 = vld [vmem:[#allocation8 + $0x44] sm:$0xf]
        %v1536 = vld [vmem:[#allocation8 + $0x48] sm:$0xff]
        %v1537 = vld [vmem:[#allocation8 + $0x50] sm:$0xf]
        %v1538 = vld [vmem:[#allocation8 + $0x54] sm:$0xff]
        %v1539 = vld [vmem:[#allocation8 + $0x5c] sm:$0xf]
        %v1540 = vld [vmem:[#allocation8 + $0x60] sm:$0xff]
        %v1541 = vld [vmem:[#allocation8 + $0x68] sm:$0xf]
        %v1542 = vld [vmem:[#allocation8 + $0x6c] sm:$0xff]
        %v1543 = vld [vmem:[#allocation8 + $0x74] sm:$0xf]
        %v1544 = vld [vmem:[#allocation8 + $0x78] sm:$0xff]
        %v1545 = vld [vmem:[#allocation8 + $0x80] sm:$0xf]
        %v1546 = vld [vmem:[#allocation8 + $0x84] sm:$0xff]
        %v1547 = vld [vmem:[#allocation8 + $0x8c] sm:$0xf]
        %v1548 = vld [vmem:[#allocation8 + $0x90] sm:$0xff]
        %v1549 = vld [vmem:[#allocation8 + $0x98] sm:$0xf]
        %v1550 = vld [vmem:[#allocation8 + $0x9c] sm:$0xff]
        %v1551 = vld [vmem:[#allocation8 + $0xa4] sm:$0xf]
        %v1552 = vld [vmem:[#allocation8 + $0xa8] sm:$0xff]
        %v1553 = vld [vmem:[#allocation8 + $0xb0] sm:$0xf]
        %v1554 = vld [vmem:[#allocation8 + $0xb4] sm:$0xff]
        %v1555 = vld [vmem:[#allocation8 + $0xbc] sm:$0xf]
        %v1556 = vld [vmem:[#allocation8 + $0xc0] sm:$0xff]
        %v1557 = vld [vmem:[#allocation8 + $0xc8] sm:$0xf]
        %v1558 = vld [vmem:[#allocation8 + $0xcc] sm:$0xff]
        %v1559 = vld [vmem:[#allocation8 + $0xd4] sm:$0xf]
        %v1560 = vld [vmem:[#allocation8 + $0xd8] sm:$0xff]
        %v1561 = vld [vmem:[#allocation8 + $0xe0] sm:$0xf]
        %v1562 = vld [vmem:[#allocation8 + $0xe4] sm:$0xff]
        %v1563 = vld [vmem:[#allocation8 + $0xec] sm:$0xf]
        %v1564 = vld [vmem:[#allocation8 + $0xf0] sm:$0xff]
        %v1565 = vld [vmem:[#allocation8 + $0xf8] sm:$0xf]
        %v1566 = vld [vmem:[#allocation8 + $0xfc] sm:$0xff]
        %v1567 = vld [vmem:[#allocation8 + $0x104] sm:$0xf]
        %v1568 = vld [vmem:[#allocation8 + $0x108] sm:$0xff]
        %v1569 = vld [vmem:[#allocation8 + $0x110] sm:$0xf]
        %v1570 = vld [vmem:[#allocation8 + $0x114] sm:$0xff]
        %v1571 = vld [vmem:[#allocation8 + $0x11c] sm:$0xf]
        %v1572 = vld [vmem:[#allocation8 + $0x120] sm:$0xff]
        %v1573 = vld [vmem:[#allocation8 + $0x128] sm:$0xf]
        %v1574 = vld [vmem:[#allocation8 + $0x12c] sm:$0xff]
        %v1575 = vld [vmem:[#allocation8 + $0x134] sm:$0xf]
        %v1576 = vld [vmem:[#allocation8 + $0x138] sm:$0xff]
        %v1577 = vld [vmem:[#allocation8 + $0x140] sm:$0xf]
        %v1578 = vld [vmem:[#allocation8 + $0x144] sm:$0xff]
        %v1579 = vld [vmem:[#allocation8 + $0x14c] sm:$0xf]
        %v1580 = vld [vmem:[#allocation8 + $0x150] sm:$0xff]
        %v1581 = vld [vmem:[#allocation8 + $0x158] sm:$0xf]
        %v1582 = vld [vmem:[#allocation8 + $0x15c] sm:$0xff]
        %v1583 = vld [vmem:[#allocation8 + $0x164] sm:$0xf]
        %v1584 = vld [vmem:[#allocation8 + $0x168] sm:$0xff]
        %v1585 = vld [vmem:[#allocation8 + $0x170] sm:$0xf]
        %v1586 = vld [vmem:[#allocation8 + $0x174] sm:$0xff]
        %v1587 = vld [vmem:[#allocation8 + $0x17c] sm:$0xf]
        %v1588 = vld [vmem:[#allocation8 + $0x180] sm:$0xff]
        %v1589 = vld [vmem:[#allocation8 + $0x188] sm:$0xf]
        %v1590 = vld [vmem:[#allocation8 + $0x18c] sm:$0xff]
        %v1591 = vld [vmem:[#allocation8 + $0x194] sm:$0xf]
        %v1592 = vld [vmem:[#allocation8 + $0x198] sm:$0xff]
        %v1593 = vld [vmem:[#allocation8 + $0x1a0] sm:$0xf]
        %v1594 = vld [vmem:[#allocation8 + $0x1a4] sm:$0xff]
        %v1595 = vld [vmem:[#allocation8 + $0x1ac] sm:$0xf]
        %v1596 = vld [vmem:[#allocation8 + $0x1b0] sm:$0xff]
        %v1597 = vld [vmem:[#allocation8 + $0x1b8] sm:$0xf]
        %v1598 = vld [vmem:[#allocation8 + $0x1bc] sm:$0xff]
        %v1599 = vld [vmem:[#allocation8 + $0x1c4] sm:$0xf]
        %v1600 = vld [vmem:[#allocation8 + $0x1c8] sm:$0xff]
        %v1601 = vld [vmem:[#allocation8 + $0x1d0] sm:$0xf]
        %v1602 = vld [vmem:[#allocation8 + $0x1d4] sm:$0xff]
        %v1603 = vld [vmem:[#allocation8 + $0x1dc] sm:$0xf]
        %v1604 = vld [vmem:[#allocation8 + $0x1e0] sm:$0xff]
        %v1605 = vld [vmem:[#allocation8 + $0x1e8] sm:$0xf]
        %v1606 = vld [vmem:[#allocation8 + $0x1ec] sm:$0xff]
        %v1607 = vld [vmem:[#allocation8 + $0x1f4] sm:$0xf]
        %v1608 = vld [vmem:[#allocation8 + $0x1f8] sm:$0xff]
        %v1609 = vld [vmem:[#allocation8 + $0x200] sm:$0xf]
        %v1610 = vld [vmem:[#allocation8 + $0x204] sm:$0xff]
        %v1611 = vld [vmem:[#allocation8 + $0x20c] sm:$0xf]
        %v1612 = vld [vmem:[#allocation8 + $0x210] sm:$0xff]
        %v1613 = vld [vmem:[#allocation8 + $0x218] sm:$0xf]
        %v1614 = vld [vmem:[#allocation8 + $0x21c] sm:$0xff]
        %v1615 = vld [vmem:[#allocation8 + $0x224] sm:$0xf]
        %v1616 = vld [vmem:[#allocation8 + $0x228] sm:$0xff]
        %v1617 = vld [vmem:[#allocation8 + $0x230] sm:$0xf]
        %v1618 = vld [vmem:[#allocation8 + $0x234] sm:$0xff]
        %v1619 = vld [vmem:[#allocation8 + $0x23c] sm:$0xf]
        %v1620 = vld [vmem:[#allocation8 + $0x240] sm:$0xff]
        %v1621 = vld [vmem:[#allocation8 + $0x248] sm:$0xf]
        %v1622 = vld [vmem:[#allocation8 + $0x24c] sm:$0xff]
        %v1623 = vld [vmem:[#allocation8 + $0x254] sm:$0xf]
        %v1624 = vld [vmem:[#allocation8 + $0x258] sm:$0xff]
        %v1625 = vld [vmem:[#allocation8 + $0x260] sm:$0xf]
        %v1626 = vld [vmem:[#allocation8 + $0x264] sm:$0xff]
        %v1627 = vld [vmem:[#allocation8 + $0x26c] sm:$0xf]
        %v1628 = vld [vmem:[#allocation8 + $0x270] sm:$0xff]
        %v1629 = vld [vmem:[#allocation8 + $0x278] sm:$0xf]
        %v1630 = vld [vmem:[#allocation8 + $0x27c] sm:$0xff]
        %v1631 = vld [vmem:[#allocation8 + $0x284] sm:$0xf]
        %v1632 = vld [vmem:[#allocation8 + $0x288] sm:$0xff]
        %v1633 = vld [vmem:[#allocation8 + $0x290] sm:$0xf]
        %v1634 = vld [vmem:[#allocation8 + $0x294] sm:$0xff]
        %v1635 = vld [vmem:[#allocation8 + $0x29c] sm:$0xf]
        %v1636 = vld [vmem:[#allocation8 + $0x2a0] sm:$0xff]
        %v1637 = vld [vmem:[#allocation8 + $0x2a8] sm:$0xf]
        %v1638 = vld [vmem:[#allocation8 + $0x2ac] sm:$0xff]
        %v1639 = vld [vmem:[#allocation8 + $0x2b4] sm:$0xf]
        %v1640 = vld [vmem:[#allocation8 + $0x2b8] sm:$0xff]
        %v1641 = vld [vmem:[#allocation8 + $0x2c0] sm:$0xf]
        %v1642 = vld [vmem:[#allocation8 + $0x2c4] sm:$0xff]
        %v1643 = vld [vmem:[#allocation8 + $0x2cc] sm:$0xf]
        %v1644 = vld [vmem:[#allocation8 + $0x2d0] sm:$0xff]
        %v1645 = vld [vmem:[#allocation8 + $0x2d8] sm:$0xf]
        %v1646 = vld [vmem:[#allocation8 + $0x2dc] sm:$0xff]
        %v1647 = vld [vmem:[#allocation8 + $0x2e4] sm:$0xf]
        %v1648 = vld [vmem:[#allocation8 + $0x2e8] sm:$0xff]
        %v1649 = vld [vmem:[#allocation8 + $0x2f0] sm:$0xf]
        %v1650 = vld [vmem:[#allocation8 + $0x2f4] sm:$0xff]
        %v1651 = vld [vmem:[#allocation8 + $0x2fc] sm:$0xf]
        %v1652 = vld [vmem:[#allocation8 + $0x300] sm:$0xff]
        %v1653 = vld [vmem:[#allocation8 + $0x308] sm:$0xf]
        %v1654 = vld [vmem:[#allocation8 + $0x30c] sm:$0xff]
        %v1655 = vld [vmem:[#allocation8 + $0x314] sm:$0xf]
        %v1656 = vld [vmem:[#allocation8 + $0x318] sm:$0xff]
        %v1657 = vld [vmem:[#allocation8 + $0x320] sm:$0xf]
        %v1658 = vld [vmem:[#allocation8 + $0x324] sm:$0xff]
        %v1659 = vld [vmem:[#allocation8 + $0x32c] sm:$0xf]
        %v1660 = vld [vmem:[#allocation8 + $0x330] sm:$0xff]
        %v1661 = vld [vmem:[#allocation8 + $0x338] sm:$0xf]
        %v1662 = vld [vmem:[#allocation8 + $0x33c] sm:$0xff]
        %v1663 = vld [vmem:[#allocation8 + $0x344] sm:$0xf]
        %v1664 = vld [vmem:[#allocation8 + $0x348] sm:$0xff]
        %v1665 = vld [vmem:[#allocation8 + $0x350] sm:$0xf]
        %v1666 = vld [vmem:[#allocation8 + $0x354] sm:$0xff]
        %v1667 = vld [vmem:[#allocation8 + $0x35c] sm:$0xf]
        %v1668 = vld [vmem:[#allocation8 + $0x360] sm:$0xff]
        %v1669 = vld [vmem:[#allocation8 + $0x368] sm:$0xf]
        %v1670 = vld [vmem:[#allocation8 + $0x36c] sm:$0xff]
        %v1671 = vld [vmem:[#allocation8 + $0x374] sm:$0xf]
        %v1672 = vld [vmem:[#allocation8 + $0x378] sm:$0xff]
        %v1673 = vld [vmem:[#allocation8 + $0x380] sm:$0xf]
        %v1674 = vld [vmem:[#allocation8 + $0x384] sm:$0xff]
        %v1675 = vld [vmem:[#allocation8 + $0x38c] sm:$0xf]
        %v1676 = vld [vmem:[#allocation8 + $0x390] sm:$0xff]
        %v1677 = vld [vmem:[#allocation8 + $0x398] sm:$0xf]
        %v1678 = vld [vmem:[#allocation8 + $0x39c] sm:$0xff]
        %v1679 = vld [vmem:[#allocation8 + $0x3a4] sm:$0xf]
        %v1680 = vld [vmem:[#allocation8 + $0x3a8] sm:$0xff]
        %v1681 = vld [vmem:[#allocation8 + $0x3b0] sm:$0xf]
        %v1682 = vld [vmem:[#allocation8 + $0x3b4] sm:$0xff]
        %v1683 = vld [vmem:[#allocation8 + $0x3bc] sm:$0xf]
        %v1684 = vld [vmem:[#allocation8 + $0x3c0] sm:$0xff]
        %v1685 = vld [vmem:[#allocation8 + $0x3c8] sm:$0xf]
        %v1686 = vld [vmem:[#allocation8 + $0x3cc] sm:$0xff]
        %v1687 = vld [vmem:[#allocation8 + $0x3d4] sm:$0xf]
        %v1688 = vld [vmem:[#allocation8 + $0x3d8] sm:$0xff]
        %v1689 = vld [vmem:[#allocation8 + $0x3e0] sm:$0xf]
        %v1690 = vld [vmem:[#allocation8 + $0x3e4] sm:$0xff]
        %v1691 = vld [vmem:[#allocation8 + $0x3ec] sm:$0xf]
        %v1692 = vld [vmem:[#allocation8 + $0x3f0] sm:$0xff]
        %v1693 = vld [vmem:[#allocation8 + $0x3f8] sm:$0xf]
        %v1694 = vld [vmem:[#allocation8 + $0x3fc] sm:$0xff]
        %v1695 = vld [vmem:[#allocation8 + $0x404] sm:$0xf]
        %v1696 = vld [vmem:[#allocation8 + $0x408] sm:$0xff]
        %v1697 = vld [vmem:[#allocation8 + $0x410] sm:$0xf]
        %v1698 = vld [vmem:[#allocation8 + $0x414] sm:$0xff]
        %v1699 = vld [vmem:[#allocation8 + $0x41c] sm:$0xf]
        %v1700 = vld [vmem:[#allocation8 + $0x420] sm:$0xff]
        %v1701 = vld [vmem:[#allocation8 + $0x428] sm:$0xf]
        %v1702 = vld [vmem:[#allocation8 + $0x42c] sm:$0xff]
        %v1703 = vld [vmem:[#allocation8 + $0x434] sm:$0xf]
        %v1704 = vld [vmem:[#allocation8 + $0x438] sm:$0xff]
        %v1705 = vld [vmem:[#allocation8 + $0x440] sm:$0xf]
        %v1706 = vld [vmem:[#allocation8 + $0x444] sm:$0xff]
        %v1707 = vld [vmem:[#allocation8 + $0x44c] sm:$0xf]
        %v1708 = vld [vmem:[#allocation8 + $0x450] sm:$0xff]
        %v1709 = vld [vmem:[#allocation8 + $0x458] sm:$0xf]
        %v1710 = vld [vmem:[#allocation8 + $0x45c] sm:$0xff]
        %v1711 = vld [vmem:[#allocation8 + $0x464] sm:$0xf]
        %v1712 = vld [vmem:[#allocation8 + $0x468] sm:$0xff]
        %v1713 = vld [vmem:[#allocation8 + $0x470] sm:$0xf]
        %v1714 = vld [vmem:[#allocation8 + $0x474] sm:$0xff]
        %v1715 = vld [vmem:[#allocation8 + $0x47c] sm:$0xf]
        %v1716 = vld [vmem:[%s4] sm:$0x7]
        %v1718 = vlaneseq
        %v1719 = vshrl.u32 %v1718, 7
        %v1720 = vsub.s32 0, %v1719
        %v1721 = vrot.slane %v1716, %v1720
        %v1722 = vlaneseq
        %v1723 = vshrl.u32 %v1722, 7
        %v1724 = vsub.s32 1, %v1723
        %v1725 = vrot.slane %v1716, %v1724
        %v1726 = vlaneseq
        %v1727 = vshrl.u32 %v1726, 7
        %v1728 = vsub.s32 2, %v1727
        %v1729 = vrot.slane %v1716, %v1728
        %v1925 = vunpack.c.l.b16 %v1524
        %v1926 = vunpack.c.h.b16 %v1524
        %v1927 = vunpack.c.l.b16 %v1525
        %v1928 = vunpack.c.l.b16 %v1526
        %v1929 = vunpack.c.h.b16 %v1526
        %v1930 = vunpack.c.l.b16 %v1527
        %v1931 = vunpack.c.l.b16 %v1528
        %v1932 = vunpack.c.h.b16 %v1528
        %v1933 = vunpack.c.l.b16 %v1529
        %v1934 = vunpack.c.l.b16 %v1530
        %v1935 = vunpack.c.h.b16 %v1530
        %v1936 = vunpack.c.l.b16 %v1531
        %v1937 = vunpack.c.l.b16 %v1532
        %v1938 = vunpack.c.h.b16 %v1532
        %v1939 = vunpack.c.l.b16 %v1533
        %v1940 = vunpack.c.l.b16 %v1534
        %v1941 = vunpack.c.h.b16 %v1534
        %v1942 = vunpack.c.l.b16 %v1535
        %v1943 = vunpack.c.l.b16 %v1536
        %v1944 = vunpack.c.h.b16 %v1536
        %v1945 = vunpack.c.l.b16 %v1537
        %v1946 = vunpack.c.l.b16 %v1538
        %v1947 = vunpack.c.h.b16 %v1538
        %v1948 = vunpack.c.l.b16 %v1539
        %v1949 = vunpack.c.l.b16 %v1540
        %v1950 = vunpack.c.h.b16 %v1540
        %v1951 = vunpack.c.l.b16 %v1541
        %v1952 = vunpack.c.l.b16 %v1542
        %v1953 = vunpack.c.h.b16 %v1542
        %v1954 = vunpack.c.l.b16 %v1543
        %v1955 = vunpack.c.l.b16 %v1544
        %v1956 = vunpack.c.h.b16 %v1544
        %v1957 = vunpack.c.l.b16 %v1545
        %v1958 = vunpack.c.l.b16 %v1546
        %v1959 = vunpack.c.h.b16 %v1546
        %v1960 = vunpack.c.l.b16 %v1547
        %v1961 = vunpack.c.l.b16 %v1548
        %v1962 = vunpack.c.h.b16 %v1548
        %v1963 = vunpack.c.l.b16 %v1549
        %v1964 = vunpack.c.l.b16 %v1550
        %v1965 = vunpack.c.h.b16 %v1550
        %v1966 = vunpack.c.l.b16 %v1551
        %v1967 = vunpack.c.l.b16 %v1552
        %v1968 = vunpack.c.h.b16 %v1552
        %v1969 = vunpack.c.l.b16 %v1553
        %v1970 = vunpack.c.l.b16 %v1554
        %v1971 = vunpack.c.h.b16 %v1554
        %v1972 = vunpack.c.l.b16 %v1555
        %v1973 = vunpack.c.l.b16 %v1556
        %v1974 = vunpack.c.h.b16 %v1556
        %v1975 = vunpack.c.l.b16 %v1557
        %v1976 = vunpack.c.l.b16 %v1558
        %v1977 = vunpack.c.h.b16 %v1558
        %v1978 = vunpack.c.l.b16 %v1559
        %v1979 = vunpack.c.l.b16 %v1560
        %v1980 = vunpack.c.h.b16 %v1560
        %v1981 = vunpack.c.l.b16 %v1561
        %v1982 = vunpack.c.l.b16 %v1562
        %v1983 = vunpack.c.h.b16 %v1562
        %v1984 = vunpack.c.l.b16 %v1563
        %v1985 = vunpack.c.l.b16 %v1564
        %v1986 = vunpack.c.h.b16 %v1564
        %v1987 = vunpack.c.l.b16 %v1565
        %v1988 = vunpack.c.l.b16 %v1566
        %v1989 = vunpack.c.h.b16 %v1566
        %v1990 = vunpack.c.l.b16 %v1567
        %v1991 = vunpack.c.l.b16 %v1568
        %v1992 = vunpack.c.h.b16 %v1568
        %v1993 = vunpack.c.l.b16 %v1569
        %v1994 = vunpack.c.l.b16 %v1570
        %v1995 = vunpack.c.h.b16 %v1570
        %v1996 = vunpack.c.l.b16 %v1571
        %v1997 = vunpack.c.l.b16 %v1572
        %v1998 = vunpack.c.h.b16 %v1572
        %v1999 = vunpack.c.l.b16 %v1573
        %v2000 = vunpack.c.l.b16 %v1574
        %v2001 = vunpack.c.h.b16 %v1574
        %v2002 = vunpack.c.l.b16 %v1575
        %v2003 = vunpack.c.l.b16 %v1576
        %v2004 = vunpack.c.h.b16 %v1576
        %v2005 = vunpack.c.l.b16 %v1577
        %v2006 = vunpack.c.l.b16 %v1578
        %v2007 = vunpack.c.h.b16 %v1578
        %v2008 = vunpack.c.l.b16 %v1579
        %v2009 = vunpack.c.l.b16 %v1580
        %v2010 = vunpack.c.h.b16 %v1580
        %v2011 = vunpack.c.l.b16 %v1581
        %v2012 = vunpack.c.l.b16 %v1582
        %v2013 = vunpack.c.h.b16 %v1582
        %v2014 = vunpack.c.l.b16 %v1583
        %v2015 = vunpack.c.l.b16 %v1584
        %v2016 = vunpack.c.h.b16 %v1584
        %v2017 = vunpack.c.l.b16 %v1585
        %v2018 = vunpack.c.l.b16 %v1586
        %v2019 = vunpack.c.h.b16 %v1586
        %v2020 = vunpack.c.l.b16 %v1587
        %v2021 = vunpack.c.l.b16 %v1588
        %v2022 = vunpack.c.h.b16 %v1588
        %v2023 = vunpack.c.l.b16 %v1589
        %v2024 = vunpack.c.l.b16 %v1590
        %v2025 = vunpack.c.h.b16 %v1590
        %v2026 = vunpack.c.l.b16 %v1591
        %v2027 = vunpack.c.l.b16 %v1592
        %v2028 = vunpack.c.h.b16 %v1592
        %v2029 = vunpack.c.l.b16 %v1593
        %v2030 = vunpack.c.l.b16 %v1594
        %v2031 = vunpack.c.h.b16 %v1594
        %v2032 = vunpack.c.l.b16 %v1595
        %v2033 = vunpack.c.l.b16 %v1596
        %v2034 = vunpack.c.h.b16 %v1596
        %v2035 = vunpack.c.l.b16 %v1597
        %v2036 = vunpack.c.l.b16 %v1598
        %v2037 = vunpack.c.h.b16 %v1598
        %v2038 = vunpack.c.l.b16 %v1599
        %v2039 = vunpack.c.l.b16 %v1600
        %v2040 = vunpack.c.h.b16 %v1600
        %v2041 = vunpack.c.l.b16 %v1601
        %v2042 = vunpack.c.l.b16 %v1602
        %v2043 = vunpack.c.h.b16 %v1602
        %v2044 = vunpack.c.l.b16 %v1603
        %v2045 = vunpack.c.l.b16 %v1604
        %v2046 = vunpack.c.h.b16 %v1604
        %v2047 = vunpack.c.l.b16 %v1605
        %v2048 = vunpack.c.l.b16 %v1606
        %v2049 = vunpack.c.h.b16 %v1606
        %v2050 = vunpack.c.l.b16 %v1607
        %v2051 = vunpack.c.l.b16 %v1608
        %v2052 = vunpack.c.h.b16 %v1608
        %v2053 = vunpack.c.l.b16 %v1609
        %v2054 = vunpack.c.l.b16 %v1610
        %v2055 = vunpack.c.h.b16 %v1610
        %v2056 = vunpack.c.l.b16 %v1611
        %v2057 = vunpack.c.l.b16 %v1612
        %v2058 = vunpack.c.h.b16 %v1612
        %v2059 = vunpack.c.l.b16 %v1613
        %v2060 = vunpack.c.l.b16 %v1614
        %v2061 = vunpack.c.h.b16 %v1614
        %v2062 = vunpack.c.l.b16 %v1615
        %v2063 = vunpack.c.l.b16 %v1616
        %v2064 = vunpack.c.h.b16 %v1616
        %v2065 = vunpack.c.l.b16 %v1617
        %v2066 = vunpack.c.l.b16 %v1618
        %v2067 = vunpack.c.h.b16 %v1618
        %v2068 = vunpack.c.l.b16 %v1619
        %v2069 = vunpack.c.l.b16 %v1620
        %v2070 = vunpack.c.h.b16 %v1620
        %v2071 = vunpack.c.l.b16 %v1621
        %v2072 = vunpack.c.l.b16 %v1622
        %v2073 = vunpack.c.h.b16 %v1622
        %v2074 = vunpack.c.l.b16 %v1623
        %v2075 = vunpack.c.l.b16 %v1624
        %v2076 = vunpack.c.h.b16 %v1624
        %v2077 = vunpack.c.l.b16 %v1625
        %v2078 = vunpack.c.l.b16 %v1626
        %v2079 = vunpack.c.h.b16 %v1626
        %v2080 = vunpack.c.l.b16 %v1627
        %v2081 = vunpack.c.l.b16 %v1628
        %v2082 = vunpack.c.h.b16 %v1628
        %v2083 = vunpack.c.l.b16 %v1629
        %v2084 = vunpack.c.l.b16 %v1630
        %v2085 = vunpack.c.h.b16 %v1630
        %v2086 = vunpack.c.l.b16 %v1631
        %v2087 = vunpack.c.l.b16 %v1632
        %v2088 = vunpack.c.h.b16 %v1632
        %v2089 = vunpack.c.l.b16 %v1633
        %v2090 = vunpack.c.l.b16 %v1634
        %v2091 = vunpack.c.h.b16 %v1634
        %v2092 = vunpack.c.l.b16 %v1635
        %v2093 = vunpack.c.l.b16 %v1636
        %v2094 = vunpack.c.h.b16 %v1636
        %v2095 = vunpack.c.l.b16 %v1637
        %v2096 = vunpack.c.l.b16 %v1638
        %v2097 = vunpack.c.h.b16 %v1638
        %v2098 = vunpack.c.l.b16 %v1639
        %v2099 = vunpack.c.l.b16 %v1640
        %v2100 = vunpack.c.h.b16 %v1640
        %v2101 = vunpack.c.l.b16 %v1641
        %v2102 = vunpack.c.l.b16 %v1642
        %v2103 = vunpack.c.h.b16 %v1642
        %v2104 = vunpack.c.l.b16 %v1643
        %v2105 = vunpack.c.l.b16 %v1644
        %v2106 = vunpack.c.h.b16 %v1644
        %v2107 = vunpack.c.l.b16 %v1645
        %v2108 = vunpack.c.l.b16 %v1646
        %v2109 = vunpack.c.h.b16 %v1646
        %v2110 = vunpack.c.l.b16 %v1647
        %v2111 = vunpack.c.l.b16 %v1648
        %v2112 = vunpack.c.h.b16 %v1648
        %v2113 = vunpack.c.l.b16 %v1649
        %v2114 = vunpack.c.l.b16 %v1650
        %v2115 = vunpack.c.h.b16 %v1650
        %v2116 = vunpack.c.l.b16 %v1651
        %v2117 = vunpack.c.l.b16 %v1652
        %v2118 = vunpack.c.h.b16 %v1652
        %v2119 = vunpack.c.l.b16 %v1653
        %v2120 = vunpack.c.l.b16 %v1654
        %v2121 = vunpack.c.h.b16 %v1654
        %v2122 = vunpack.c.l.b16 %v1655
        %v2123 = vunpack.c.l.b16 %v1656
        %v2124 = vunpack.c.h.b16 %v1656
        %v2125 = vunpack.c.l.b16 %v1657
        %v2126 = vunpack.c.l.b16 %v1658
        %v2127 = vunpack.c.h.b16 %v1658
        %v2128 = vunpack.c.l.b16 %v1659
        %v2129 = vunpack.c.l.b16 %v1660
        %v2130 = vunpack.c.h.b16 %v1660
        %v2131 = vunpack.c.l.b16 %v1661
        %v2132 = vunpack.c.l.b16 %v1662
        %v2133 = vunpack.c.h.b16 %v1662
        %v2134 = vunpack.c.l.b16 %v1663
        %v2135 = vunpack.c.l.b16 %v1664
        %v2136 = vunpack.c.h.b16 %v1664
        %v2137 = vunpack.c.l.b16 %v1665
        %v2138 = vunpack.c.l.b16 %v1666
        %v2139 = vunpack.c.h.b16 %v1666
        %v2140 = vunpack.c.l.b16 %v1667
        %v2141 = vunpack.c.l.b16 %v1668
        %v2142 = vunpack.c.h.b16 %v1668
        %v2143 = vunpack.c.l.b16 %v1669
        %v2144 = vunpack.c.l.b16 %v1670
        %v2145 = vunpack.c.h.b16 %v1670
        %v2146 = vunpack.c.l.b16 %v1671
        %v2147 = vunpack.c.l.b16 %v1672
        %v2148 = vunpack.c.h.b16 %v1672
        %v2149 = vunpack.c.l.b16 %v1673
        %v2150 = vunpack.c.l.b16 %v1674
        %v2151 = vunpack.c.h.b16 %v1674
        %v2152 = vunpack.c.l.b16 %v1675
        %v2153 = vunpack.c.l.b16 %v1676
        %v2154 = vunpack.c.h.b16 %v1676
        %v2155 = vunpack.c.l.b16 %v1677
        %v2156 = vunpack.c.l.b16 %v1678
        %v2157 = vunpack.c.h.b16 %v1678
        %v2158 = vunpack.c.l.b16 %v1679
        %v2159 = vunpack.c.l.b16 %v1680
        %v2160 = vunpack.c.h.b16 %v1680
        %v2161 = vunpack.c.l.b16 %v1681
        %v2162 = vunpack.c.l.b16 %v1682
        %v2163 = vunpack.c.h.b16 %v1682
        %v2164 = vunpack.c.l.b16 %v1683
        %v2165 = vunpack.c.l.b16 %v1684
        %v2166 = vunpack.c.h.b16 %v1684
        %v2167 = vunpack.c.l.b16 %v1685
        %v2168 = vunpack.c.l.b16 %v1686
        %v2169 = vunpack.c.h.b16 %v1686
        %v2170 = vunpack.c.l.b16 %v1687
        %v2171 = vunpack.c.l.b16 %v1688
        %v2172 = vunpack.c.h.b16 %v1688
        %v2173 = vunpack.c.l.b16 %v1689
        %v2174 = vunpack.c.l.b16 %v1690
        %v2175 = vunpack.c.h.b16 %v1690
        %v2176 = vunpack.c.l.b16 %v1691
        %v2177 = vunpack.c.l.b16 %v1692
        %v2178 = vunpack.c.h.b16 %v1692
        %v2179 = vunpack.c.l.b16 %v1693
        %v2180 = vunpack.c.l.b16 %v1694
        %v2181 = vunpack.c.h.b16 %v1694
        %v2182 = vunpack.c.l.b16 %v1695
        %v2183 = vunpack.c.l.b16 %v1696
        %v2184 = vunpack.c.h.b16 %v1696
        %v2185 = vunpack.c.l.b16 %v1697
        %v2186 = vunpack.c.l.b16 %v1698
        %v2187 = vunpack.c.h.b16 %v1698
        %v2188 = vunpack.c.l.b16 %v1699
        %v2189 = vunpack.c.l.b16 %v1700
        %v2190 = vunpack.c.h.b16 %v1700
        %v2191 = vunpack.c.l.b16 %v1701
        %v2192 = vunpack.c.l.b16 %v1702
        %v2193 = vunpack.c.h.b16 %v1702
        %v2194 = vunpack.c.l.b16 %v1703
        %v2195 = vunpack.c.l.b16 %v1704
        %v2196 = vunpack.c.h.b16 %v1704
        %v2197 = vunpack.c.l.b16 %v1705
        %v2198 = vunpack.c.l.b16 %v1706
        %v2199 = vunpack.c.h.b16 %v1706
        %v2200 = vunpack.c.l.b16 %v1707
        %v2201 = vunpack.c.l.b16 %v1708
        %v2202 = vunpack.c.h.b16 %v1708
        %v2203 = vunpack.c.l.b16 %v1709
        %v2204 = vunpack.c.l.b16 %v1710
        %v2205 = vunpack.c.h.b16 %v1710
        %v2206 = vunpack.c.l.b16 %v1711
        %v2207 = vunpack.c.l.b16 %v1712
        %v2208 = vunpack.c.h.b16 %v1712
        %v2209 = vunpack.c.l.b16 %v1713
        %v2210 = vunpack.c.l.b16 %v1714
        %v2211 = vunpack.c.h.b16 %v1714
        %v2212 = vunpack.c.l.b16 %v1715
        %v2213 = vpack.c.b16 %v1928, %v1925
        %v2214 = vpack.c.b16 %v1929, %v1926
        %v2215 = vpack.c.b16 %v1930, %v1927
        %v2216 = vpack.c.b16 %v1934, %v1931
        %v2217 = vpack.c.b16 %v1935, %v1932
        %v2218 = vpack.c.b16 %v1936, %v1933
        %v2219 = vpack.c.b16 %v1940, %v1937
        %v2220 = vpack.c.b16 %v1941, %v1938
        %v2221 = vpack.c.b16 %v1942, %v1939
        %v2222 = vpack.c.b16 %v1946, %v1943
        %v2223 = vpack.c.b16 %v1947, %v1944
        %v2224 = vpack.c.b16 %v1948, %v1945
        %v2225 = vpack.c.b16 %v1952, %v1949
        %v2226 = vpack.c.b16 %v1953, %v1950
        %v2227 = vpack.c.b16 %v1954, %v1951
        %v2228 = vpack.c.b16 %v1958, %v1955
        %v2229 = vpack.c.b16 %v1959, %v1956
        %v2230 = vpack.c.b16 %v1960, %v1957
        %v2231 = vpack.c.b16 %v1964, %v1961
        %v2232 = vpack.c.b16 %v1965, %v1962
        %v2233 = vpack.c.b16 %v1966, %v1963
        %v2234 = vpack.c.b16 %v1970, %v1967
        %v2235 = vpack.c.b16 %v1971, %v1968
        %v2236 = vpack.c.b16 %v1972, %v1969
        %v2237 = vpack.c.b16 %v1976, %v1973
        %v2238 = vpack.c.b16 %v1977, %v1974
        %v2239 = vpack.c.b16 %v1978, %v1975
        %v2240 = vpack.c.b16 %v1982, %v1979
        %v2241 = vpack.c.b16 %v1983, %v1980
        %v2242 = vpack.c.b16 %v1984, %v1981
        %v2243 = vpack.c.b16 %v1988, %v1985
        %v2244 = vpack.c.b16 %v1989, %v1986
        %v2245 = vpack.c.b16 %v1990, %v1987
        %v2246 = vpack.c.b16 %v1994, %v1991
        %v2247 = vpack.c.b16 %v1995, %v1992
        %v2248 = vpack.c.b16 %v1996, %v1993
        %v2249 = vpack.c.b16 %v2000, %v1997
        %v2250 = vpack.c.b16 %v2001, %v1998
        %v2251 = vpack.c.b16 %v2002, %v1999
        %v2252 = vpack.c.b16 %v2006, %v2003
        %v2253 = vpack.c.b16 %v2007, %v2004
        %v2254 = vpack.c.b16 %v2008, %v2005
        %v2255 = vpack.c.b16 %v2012, %v2009
        %v2256 = vpack.c.b16 %v2013, %v2010
        %v2257 = vpack.c.b16 %v2014, %v2011
        %v2258 = vpack.c.b16 %v2018, %v2015
        %v2259 = vpack.c.b16 %v2019, %v2016
        %v2260 = vpack.c.b16 %v2020, %v2017
        %v2261 = vpack.c.b16 %v2024, %v2021
        %v2262 = vpack.c.b16 %v2025, %v2022
        %v2263 = vpack.c.b16 %v2026, %v2023
        %v2264 = vpack.c.b16 %v2030, %v2027
        %v2265 = vpack.c.b16 %v2031, %v2028
        %v2266 = vpack.c.b16 %v2032, %v2029
        %v2267 = vpack.c.b16 %v2036, %v2033
        %v2268 = vpack.c.b16 %v2037, %v2034
        %v2269 = vpack.c.b16 %v2038, %v2035
        %v2270 = vpack.c.b16 %v2042, %v2039
        %v2271 = vpack.c.b16 %v2043, %v2040
        %v2272 = vpack.c.b16 %v2044, %v2041
        %v2273 = vpack.c.b16 %v2048, %v2045
        %v2274 = vpack.c.b16 %v2049, %v2046
        %v2275 = vpack.c.b16 %v2050, %v2047
        %v2276 = vpack.c.b16 %v2054, %v2051
        %v2277 = vpack.c.b16 %v2055, %v2052
        %v2278 = vpack.c.b16 %v2056, %v2053
        %v2279 = vpack.c.b16 %v2060, %v2057
        %v2280 = vpack.c.b16 %v2061, %v2058
        %v2281 = vpack.c.b16 %v2062, %v2059
        %v2282 = vpack.c.b16 %v2066, %v2063
        %v2283 = vpack.c.b16 %v2067, %v2064
        %v2284 = vpack.c.b16 %v2068, %v2065
        %v2285 = vpack.c.b16 %v2072, %v2069
        %v2286 = vpack.c.b16 %v2073, %v2070
        %v2287 = vpack.c.b16 %v2074, %v2071
        %v2288 = vpack.c.b16 %v2078, %v2075
        %v2289 = vpack.c.b16 %v2079, %v2076
        %v2290 = vpack.c.b16 %v2080, %v2077
        %v2291 = vpack.c.b16 %v2084, %v2081
        %v2292 = vpack.c.b16 %v2085, %v2082
        %v2293 = vpack.c.b16 %v2086, %v2083
        %v2294 = vpack.c.b16 %v2090, %v2087
        %v2295 = vpack.c.b16 %v2091, %v2088
        %v2296 = vpack.c.b16 %v2092, %v2089
        %v2297 = vpack.c.b16 %v2096, %v2093
        %v2298 = vpack.c.b16 %v2097, %v2094
        %v2299 = vpack.c.b16 %v2098, %v2095
        %v2300 = vpack.c.b16 %v2102, %v2099
        %v2301 = vpack.c.b16 %v2103, %v2100
        %v2302 = vpack.c.b16 %v2104, %v2101
        %v2303 = vpack.c.b16 %v2108, %v2105
        %v2304 = vpack.c.b16 %v2109, %v2106
        %v2305 = vpack.c.b16 %v2110, %v2107
        %v2306 = vpack.c.b16 %v2114, %v2111
        %v2307 = vpack.c.b16 %v2115, %v2112
        %v2308 = vpack.c.b16 %v2116, %v2113
        %v2309 = vpack.c.b16 %v2120, %v2117
        %v2310 = vpack.c.b16 %v2121, %v2118
        %v2311 = vpack.c.b16 %v2122, %v2119
        %v2312 = vpack.c.b16 %v2126, %v2123
        %v2313 = vpack.c.b16 %v2127, %v2124
        %v2314 = vpack.c.b16 %v2128, %v2125
        %v2315 = vpack.c.b16 %v2132, %v2129
        %v2316 = vpack.c.b16 %v2133, %v2130
        %v2317 = vpack.c.b16 %v2134, %v2131
        %v2318 = vpack.c.b16 %v2138, %v2135
        %v2319 = vpack.c.b16 %v2139, %v2136
        %v2320 = vpack.c.b16 %v2140, %v2137
        %v2321 = vpack.c.b16 %v2144, %v2141
        %v2322 = vpack.c.b16 %v2145, %v2142
        %v2323 = vpack.c.b16 %v2146, %v2143
        %v2324 = vpack.c.b16 %v2150, %v2147
        %v2325 = vpack.c.b16 %v2151, %v2148
        %v2326 = vpack.c.b16 %v2152, %v2149
        %v2327 = vpack.c.b16 %v2156, %v2153
        %v2328 = vpack.c.b16 %v2157, %v2154
        %v2329 = vpack.c.b16 %v2158, %v2155
        %v2330 = vpack.c.b16 %v2162, %v2159
        %v2331 = vpack.c.b16 %v2163, %v2160
        %v2332 = vpack.c.b16 %v2164, %v2161
        %v2333 = vpack.c.b16 %v2168, %v2165
        %v2334 = vpack.c.b16 %v2169, %v2166
        %v2335 = vpack.c.b16 %v2170, %v2167
        %v2336 = vpack.c.b16 %v2174, %v2171
        %v2337 = vpack.c.b16 %v2175, %v2172
        %v2338 = vpack.c.b16 %v2176, %v2173
        %v2339 = vpack.c.b16 %v2180, %v2177
        %v2340 = vpack.c.b16 %v2181, %v2178
        %v2341 = vpack.c.b16 %v2182, %v2179
        %v2342 = vpack.c.b16 %v2186, %v2183
        %v2343 = vpack.c.b16 %v2187, %v2184
        %v2344 = vpack.c.b16 %v2188, %v2185
        %v2345 = vpack.c.b16 %v2192, %v2189
        %v2346 = vpack.c.b16 %v2193, %v2190
        %v2347 = vpack.c.b16 %v2194, %v2191
        %v2348 = vpack.c.b16 %v2198, %v2195
        %v2349 = vpack.c.b16 %v2199, %v2196
        %v2350 = vpack.c.b16 %v2200, %v2197
        %v2351 = vpack.c.b16 %v2204, %v2201
        %v2352 = vpack.c.b16 %v2205, %v2202
        %v2353 = vpack.c.b16 %v2206, %v2203
        %v2354 = vpack.c.b16 %v2210, %v2207
        %v2355 = vpack.c.b16 %v2211, %v2208
        %v2356 = vpack.c.b16 %v2212, %v2209
        %2501 = vmatprep.subr.bf16.mxu0 %v2214
        %2502 = vmatpush1.bf16.msra.mxu0 %v2213
        %2503 = vmatprep.subr.bf16.mxu0 %v2217
        %2504 = vmatpush1.bf16.msra.mxu0 %v2216
        %2505 = vmatprep.subr.bf16.mxu0 %v2220
        %2506 = vmatpush1.bf16.msra.mxu0 %v2219
        %2507 = vmatprep.subr.bf16.mxu0 %v2223
        %2508 = vmatpush1.bf16.msra.mxu0 %v2222
        %2509 = vmatprep.subr.bf16.mxu0 %v2226
        %2510 = vmatpush1.bf16.msra.mxu0 %v2225
        %2511 = vmatprep.subr.bf16.mxu0 %v2229
        %2512 = vmatpush1.bf16.msra.mxu0 %v2228
        %2513 = vmatprep.subr.bf16.mxu0 %v2232
        %2514 = vmatpush1.bf16.msra.mxu0 %v2231
        %2515 = vmatprep.subr.bf16.mxu0 %v2235
        %2516 = vmatpush1.bf16.msra.mxu0 %v2234
        %2517 = vmatprep.subr.bf16.mxu0 %v2238
        %2518 = vmatpush1.bf16.msra.mxu0 %v2237
        %2519 = vmatprep.subr.bf16.mxu0 %v2241
        %2520 = vmatpush1.bf16.msra.mxu0 %v2240
        %2521 = vmatprep.subr.bf16.mxu0 %v2244
        %2522 = vmatpush1.bf16.msra.mxu0 %v2243
        %2523 = vmatprep.subr.bf16.mxu0 %v2247
        %2524 = vmatpush1.bf16.msra.mxu0 %v2246
        %2525 = vmatprep.subr.bf16.mxu0 %v2250
        %2526 = vmatpush1.bf16.msra.mxu0 %v2249
        %2527 = vmatprep.subr.bf16.mxu0 %v2253
        %2528 = vmatpush1.bf16.msra.mxu0 %v2252
        %2529 = vmatprep.subr.bf16.mxu0 %v2256
        %2530 = vmatpush1.bf16.msra.mxu0 %v2255
        %2531 = vmatprep.subr.bf16.mxu0 %v2259
        %2532 = vmatpush1.bf16.msra.mxu0 %v2258
        %2533 = vmatprep.mubr.bf16.mxu0 %v1503
        %2534 = vmatmul.mubr.bf16.gmra.mrb[0].mxu0 %v1502
        %v2535 = vpop.f32.mrb[0].mxu0
        %v2536 = vadd.f32 %v1721, %v2535
        %v2537 = vpop.f32.mrb[0].mxu0
        %v2538 = vadd.f32 %v1725, %v2537
        %v2539 = vpop.f32.mrb[0].mxu0
        %v2540 = vadd.f32 %v1721, %v2539
        %v2541 = vpop.f32.mrb[0].mxu0
        %v2542 = vadd.f32 %v1725, %v2541
        %2543 = vmatprep.mubr.bf16.mxu0 %v1507
        %2544 = vmatmul.mubr.bf16.gmra.mrb[0].mxu0 %v1506
        %v2545 = vpop.f32.mrb[0].mxu0
        %v2546 = vadd.f32 %v1721, %v2545
        %v2547 = vpop.f32.mrb[0].mxu0
        %v2548 = vadd.f32 %v1725, %v2547
        %v2549 = vpop.f32.mrb[0].mxu0
        %v2550 = vadd.f32 %v1721, %v2549
        %v2551 = vpop.f32.mrb[0].mxu0
        %v2552 = vadd.f32 %v1725, %v2551
        %2553 = vmatprep.mubr.bf16.mxu0 %v1511
        %2554 = vmatmul.mubr.bf16.gmra.mrb[0].mxu0 %v1510
        %v2555 = vpop.f32.mrb[0].mxu0
        %v2556 = vadd.f32 %v1721, %v2555
        %v2557 = vpop.f32.mrb[0].mxu0
        %v2558 = vadd.f32 %v1725, %v2557
        %v2559 = vpop.f32.mrb[0].mxu0
        %v2560 = vadd.f32 %v1721, %v2559
        %v2561 = vpop.f32.mrb[0].mxu0
        %v2562 = vadd.f32 %v1725, %v2561
        %2563 = vmatprep.mubr.bf16.mxu0 %v1515
        %2564 = vmatmul.mubr.bf16.gmra.mrb[0].mxu0 %v1514
        %v2565 = vpop.f32.mrb[0].mxu0
        %v2566 = vadd.f32 %v1721, %v2565
        %v2567 = vpop.f32.mrb[0].mxu0
        %v2568 = vadd.f32 %v1725, %v2567
        %v2569 = vpop.f32.mrb[0].mxu0
        %v2570 = vadd.f32 %v1721, %v2569
        %v2571 = vpop.f32.mrb[0].mxu0
        %v2572 = vadd.f32 %v1725, %v2571
        %2573 = vmatprep.mubr.bf16.mxu0 %v1519
        %2574 = vmatmul.mubr.bf16.gmra.mrb[0].mxu0 %v1518
        %v2575 = vpop.f32.mrb[0].mxu0
        %v2576 = vadd.f32 %v1721, %v2575
        %v2577 = vpop.f32.mrb[0].mxu0
        %v2578 = vadd.f32 %v1725, %v2577
        %v2579 = vpop.f32.mrb[0].mxu0
        %v2580 = vadd.f32 %v1721, %v2579
        %v2581 = vpop.f32.mrb[0].mxu0
        %v2582 = vadd.f32 %v1725, %v2581
        %2583 = vdwg.mxu0
        %2584 = vmatprep.subr.bf16.mxu0 %v2262
        %2585 = vmatpush1.bf16.msra.mxu0 %v2261
        %2586 = vmatprep.subr.bf16.mxu0 %v2265
        %2587 = vmatpush1.bf16.msra.mxu0 %v2264
        %2588 = vmatprep.subr.bf16.mxu0 %v2268
        %2589 = vmatpush1.bf16.msra.mxu0 %v2267
        %2590 = vmatprep.subr.bf16.mxu0 %v2271
        %2591 = vmatpush1.bf16.msra.mxu0 %v2270
        %2592 = vmatprep.subr.bf16.mxu0 %v2274
        %2593 = vmatpush1.bf16.msra.mxu0 %v2273
        %2594 = vmatprep.subr.bf16.mxu0 %v2277
        %2595 = vmatpush1.bf16.msra.mxu0 %v2276
        %2596 = vmatprep.subr.bf16.mxu0 %v2280
        %2597 = vmatpush1.bf16.msra.mxu0 %v2279
        %2598 = vmatprep.subr.bf16.mxu0 %v2283
        %2599 = vmatpush1.bf16.msra.mxu0 %v2282
        %2600 = vmatprep.subr.bf16.mxu0 %v2286
        %2601 = vmatpush1.bf16.msra.mxu0 %v2285
        %2602 = vmatprep.subr.bf16.mxu0 %v2289
        %2603 = vmatpush1.bf16.msra.mxu0 %v2288
        %2604 = vmatprep.subr.bf16.mxu0 %v2292
        %2605 = vmatpush1.bf16.msra.mxu0 %v2291
        %2606 = vmatprep.subr.bf16.mxu0 %v2295
        %2607 = vmatpush1.bf16.msra.mxu0 %v2294
        %2608 = vmatprep.subr.bf16.mxu0 %v2298
        %2609 = vmatpush1.bf16.msra.mxu0 %v2297
        %2610 = vmatprep.subr.bf16.mxu0 %v2301
        %2611 = vmatpush1.bf16.msra.mxu0 %v2300
        %2612 = vmatprep.subr.bf16.mxu0 %v2304
        %2613 = vmatpush1.bf16.msra.mxu0 %v2303
        %2614 = vmatprep.subr.bf16.mxu0 %v2307
        %2615 = vmatpush1.bf16.msra.mxu0 %v2306
        %2616 = vmatprep.mubr.bf16.mxu0 %v1505
        %2617 = vmatmul.mubr.bf16.gmra.mrb[0].mxu0 %v1504
        %v2618 = vpop.f32.mrb[0].mxu0
        %v2619 = vadd.f32 %v2536, %v2618
        %v2620 = vpop.f32.mrb[0].mxu0
        %v2621 = vadd.f32 %v2538, %v2620
        %v2622 = vpop.f32.mrb[0].mxu0
        %v2623 = vadd.f32 %v2540, %v2622
        %v2624 = vpop.f32.mrb[0].mxu0
        %v2625 = vadd.f32 %v2542, %v2624
        %2626 = vmatprep.mubr.bf16.mxu0 %v1509
        %2627 = vmatmul.mubr.bf16.gmra.mrb[0].mxu0 %v1508
        %v2628 = vpop.f32.mrb[0].mxu0
        %v2629 = vadd.f32 %v2546, %v2628
        %v2630 = vpop.f32.mrb[0].mxu0
        %v2631 = vadd.f32 %v2548, %v2630
        %v2632 = vpop.f32.mrb[0].mxu0
        %v2633 = vadd.f32 %v2550, %v2632
        %v2634 = vpop.f32.mrb[0].mxu0
        %v2635 = vadd.f32 %v2552, %v2634
        %2636 = vmatprep.mubr.bf16.mxu0 %v1513
        %2637 = vmatmul.mubr.bf16.gmra.mrb[0].mxu0 %v1512
        %v2638 = vpop.f32.mrb[0].mxu0
        %v2639 = vadd.f32 %v2556, %v2638
        %v2640 = vpop.f32.mrb[0].mxu0
        %v2641 = vadd.f32 %v2558, %v2640
        %v2642 = vpop.f32.mrb[0].mxu0
        %v2643 = vadd.f32 %v2560, %v2642
        %v2644 = vpop.f32.mrb[0].mxu0
        %v2645 = vadd.f32 %v2562, %v2644
        %2646 = vmatprep.mubr.bf16.mxu0 %v1517
        %2647 = vmatmul.mubr.bf16.gmra.mrb[0].mxu0 %v1516
        %v2648 = vpop.f32.mrb[0].mxu0
        %v2649 = vadd.f32 %v2566, %v2648
        %v2650 = vpop.f32.mrb[0].mxu0
        %v2651 = vadd.f32 %v2568, %v2650
        %v2652 = vpop.f32.mrb[0].mxu0
        %v2653 = vadd.f32 %v2570, %v2652
        %v2654 = vpop.f32.mrb[0].mxu0
        %v2655 = vadd.f32 %v2572, %v2654
        %2656 = vmatprep.mubr.bf16.mxu0 %v1521
        %2657 = vmatmul.mubr.bf16.gmra.mrb[0].mxu0 %v1520
        %v2658 = vpop.f32.mrb[0].mxu0
        %v2659 = vadd.f32 %v2576, %v2658
        %v2660 = vpop.f32.mrb[0].mxu0
        %v2661 = vadd.f32 %v2578, %v2660
        %v2662 = vpop.f32.mrb[0].mxu0
        %v2663 = vadd.f32 %v2580, %v2662
        %v2664 = vpop.f32.mrb[0].mxu0
        %v2665 = vadd.f32 %v2582, %v2664
        %2666 = vdwg.mxu0
        %2667 = vmatprep.subr.bf16.mxu0 %v2310
        %2668 = vmatpush1.bf16.msra.mxu0 %v2309
        %2669 = vmatprep.subr.bf16.mxu0 %v2313
        %2670 = vmatpush1.bf16.msra.mxu0 %v2312
        %2671 = vmatprep.subr.bf16.mxu0 %v2316
        %2672 = vmatpush1.bf16.msra.mxu0 %v2315
        %2673 = vmatprep.subr.bf16.mxu0 %v2319
        %2674 = vmatpush1.bf16.msra.mxu0 %v2318
        %2675 = vmatprep.subr.bf16.mxu0 %v2322
        %2676 = vmatpush1.bf16.msra.mxu0 %v2321
        %2677 = vmatprep.subr.bf16.mxu0 %v2325
        %2678 = vmatpush1.bf16.msra.mxu0 %v2324
        %2679 = vmatprep.subr.bf16.mxu0 %v2328
        %2680 = vmatpush1.bf16.msra.mxu0 %v2327
        %2681 = vmatprep.subr.bf16.mxu0 %v2331
        %2682 = vmatpush1.bf16.msra.mxu0 %v2330
        %2683 = vmatprep.subr.bf16.mxu0 %v2334
        %2684 = vmatpush1.bf16.msra.mxu0 %v2333
        %2685 = vmatprep.subr.bf16.mxu0 %v2337
        %2686 = vmatpush1.bf16.msra.mxu0 %v2336
        %2687 = vmatprep.subr.bf16.mxu0 %v2340
        %2688 = vmatpush1.bf16.msra.mxu0 %v2339
        %2689 = vmatprep.subr.bf16.mxu0 %v2343
        %2690 = vmatpush1.bf16.msra.mxu0 %v2342
        %2691 = vmatprep.subr.bf16.mxu0 %v2346
        %2692 = vmatpush1.bf16.msra.mxu0 %v2345
        %2693 = vmatprep.subr.bf16.mxu0 %v2349
        %2694 = vmatpush1.bf16.msra.mxu0 %v2348
        %2695 = vmatprep.subr.bf16.mxu0 %v2352
        %2696 = vmatpush1.bf16.msra.mxu0 %v2351
        %2697 = vmatprep.subr.bf16.mxu0 %v2355
        %2698 = vmatpush1.bf16.msra.mxu0 %v2354
        %2699 = vmatprep.mubr.bf16.mxu0 %v1507
        %2700 = vmatmul.mubr.bf16.gmra.mrb[0].mxu0 %v1506
        %v2701 = vpop.f32.mrb[0].mxu0
        %v2702 = vadd.f32 %v2619, %v2701
        %v2703 = vpop.f32.mrb[0].mxu0
        %v2704 = vadd.f32 %v2621, %v2703
        %v2705 = vpop.f32.mrb[0].mxu0
        %v2706 = vadd.f32 %v2623, %v2705
        %v2707 = vpop.f32.mrb[0].mxu0
        %v2708 = vadd.f32 %v2625, %v2707
        %2709 = vmatprep.mubr.bf16.mxu0 %v1511
        %2710 = vmatmul.mubr.bf16.gmra.mrb[0].mxu0 %v1510
        %v2711 = vpop.f32.mrb[0].mxu0
        %v2712 = vadd.f32 %v2629, %v2711
        %v2713 = vpop.f32.mrb[0].mxu0
        %v2714 = vadd.f32 %v2631, %v2713
        %v2715 = vpop.f32.mrb[0].mxu0
        %v2716 = vadd.f32 %v2633, %v2715
        %v2717 = vpop.f32.mrb[0].mxu0
        %v2718 = vadd.f32 %v2635, %v2717
        %2719 = vmatprep.mubr.bf16.mxu0 %v1515
        %2720 = vmatmul.mubr.bf16.gmra.mrb[0].mxu0 %v1514
        %v2721 = vpop.f32.mrb[0].mxu0
        %v2722 = vadd.f32 %v2639, %v2721
        %v2723 = vpop.f32.mrb[0].mxu0
        %v2724 = vadd.f32 %v2641, %v2723
        %v2725 = vpop.f32.mrb[0].mxu0
        %v2726 = vadd.f32 %v2643, %v2725
        %v2727 = vpop.f32.mrb[0].mxu0
        %v2728 = vadd.f32 %v2645, %v2727
        %2729 = vmatprep.mubr.bf16.mxu0 %v1519
        %2730 = vmatmul.mubr.bf16.gmra.mrb[0].mxu0 %v1518
        %v2731 = vpop.f32.mrb[0].mxu0
        %v2732 = vadd.f32 %v2649, %v2731
        %v2733 = vpop.f32.mrb[0].mxu0
        %v2734 = vadd.f32 %v2651, %v2733
        %v2735 = vpop.f32.mrb[0].mxu0
        %v2736 = vadd.f32 %v2653, %v2735
        %v2737 = vpop.f32.mrb[0].mxu0
        %v2738 = vadd.f32 %v2655, %v2737
        %2739 = vmatprep.mubr.bf16.mxu0 %v1523
        %2740 = vmatmul.mubr.bf16.gmra.mrb[0].mxu0 %v1522
        %v2741 = vpop.f32.mrb[0].mxu0
        %v2742 = vadd.f32 %v2659, %v2741
        %v2743 = vpop.f32.mrb[0].mxu0
        %v2744 = vadd.f32 %v2661, %v2743
        %v2745 = vpop.f32.mrb[0].mxu0
        %v2746 = vadd.f32 %v2663, %v2745
        %v2747 = vpop.f32.mrb[0].mxu0
        %v2748 = vadd.f32 %v2665, %v2747
        %2749 = vdwg.mxu0
        %2750 = vmatprep.subr.bf16.mxu0 0
        %2751 = vmatpush1.bf16.msra.mxu0 %v2215
        %2752 = vmatprep.subr.bf16.mxu0 0
        %2753 = vmatpush1.bf16.msra.mxu0 %v2218
        %2754 = vmatprep.subr.bf16.mxu0 0
        %2755 = vmatpush1.bf16.msra.mxu0 %v2221
        %2756 = vmatprep.subr.bf16.mxu0 0
        %2757 = vmatpush1.bf16.msra.mxu0 %v2224
        %2758 = vmatprep.subr.bf16.mxu0 0
        %2759 = vmatpush1.bf16.msra.mxu0 %v2227
        %2760 = vmatprep.subr.bf16.mxu0 0
        %2761 = vmatpush1.bf16.msra.mxu0 %v2230
        %2762 = vmatprep.subr.bf16.mxu0 0
        %2763 = vmatpush1.bf16.msra.mxu0 %v2233
        %2764 = vmatprep.subr.bf16.mxu0 0
        %2765 = vmatpush1.bf16.msra.mxu0 %v2236
        %2766 = vmatprep.subr.bf16.mxu0 0
        %2767 = vmatpush1.bf16.msra.mxu0 %v2239
        %2768 = vmatprep.subr.bf16.mxu0 0
        %2769 = vmatpush1.bf16.msra.mxu0 %v2242
        %2770 = vmatprep.subr.bf16.mxu0 0
        %2771 = vmatpush1.bf16.msra.mxu0 %v2245
        %2772 = vmatprep.subr.bf16.mxu0 0
        %2773 = vmatpush1.bf16.msra.mxu0 %v2248
        %2774 = vmatprep.subr.bf16.mxu0 0
        %2775 = vmatpush1.bf16.msra.mxu0 %v2251
        %2776 = vmatprep.subr.bf16.mxu0 0
        %2777 = vmatpush1.bf16.msra.mxu0 %v2254
        %2778 = vmatprep.subr.bf16.mxu0 0
        %2779 = vmatpush1.bf16.msra.mxu0 %v2257
        %2780 = vmatprep.subr.bf16.mxu0 0
        %2781 = vmatpush1.bf16.msra.mxu0 %v2260
        %2782 = vmatprep.mubr.bf16.mxu0 %v1503
        %2783 = vmatmul.mubr.bf16.gmra.mrb[0].mxu0 %v1502
        %v2784 = vpop.f32.mrb[0].mxu0
        %v2785 = vadd.f32 %v1729, %v2784
        %v2786 = vpop.f32.mrb[0].mxu0
        %v2787 = vpop.f32.mrb[0].mxu0
        %v2788 = vadd.f32 %v1729, %v2787
        %v2789 = vpop.f32.mrb[0].mxu0
        %2790 = vmatprep.mubr.bf16.mxu0 %v1507
        %2791 = vmatmul.mubr.bf16.gmra.mrb[0].mxu0 %v1506
        %v2792 = vpop.f32.mrb[0].mxu0
        %v2793 = vadd.f32 %v1729, %v2792
        %v2794 = vpop.f32.mrb[0].mxu0
        %v2795 = vpop.f32.mrb[0].mxu0
        %v2796 = vadd.f32 %v1729, %v2795
        %v2797 = vpop.f32.mrb[0].mxu0
        %2798 = vmatprep.mubr.bf16.mxu0 %v1511
        %2799 = vmatmul.mubr.bf16.gmra.mrb[0].mxu0 %v1510
        %v2800 = vpop.f32.mrb[0].mxu0
        %v2801 = vadd.f32 %v1729, %v2800
        %v2802 = vpop.f32.mrb[0].mxu0
        %v2803 = vpop.f32.mrb[0].mxu0
        %v2804 = vadd.f32 %v1729, %v2803
        %v2805 = vpop.f32.mrb[0].mxu0
        %2806 = vmatprep.mubr.bf16.mxu0 %v1515
        %2807 = vmatmul.mubr.bf16.gmra.mrb[0].mxu0 %v1514
        %v2808 = vpop.f32.mrb[0].mxu0
        %v2809 = vadd.f32 %v1729, %v2808
        %v2810 = vpop.f32.mrb[0].mxu0
        %v2811 = vpop.f32.mrb[0].mxu0
        %v2812 = vadd.f32 %v1729, %v2811
        %v2813 = vpop.f32.mrb[0].mxu0
        %2814 = vmatprep.mubr.bf16.mxu0 %v1519
        %2815 = vmatmul.mubr.bf16.gmra.mrb[0].mxu0 %v1518
        %v2816 = vpop.f32.mrb[0].mxu0
        %v2817 = vadd.f32 %v1729, %v2816
        %v2818 = vpop.f32.mrb[0].mxu0
        %v2819 = vpop.f32.mrb[0].mxu0
        %v2820 = vadd.f32 %v1729, %v2819
        %v2821 = vpop.f32.mrb[0].mxu0
        %2822 = vdwg.mxu0
        %2823 = vmatprep.subr.bf16.mxu0 0
        %2824 = vmatpush1.bf16.msra.mxu0 %v2263
        %2825 = vmatprep.subr.bf16.mxu0 0
        %2826 = vmatpush1.bf16.msra.mxu0 %v2266
        %2827 = vmatprep.subr.bf16.mxu0 0
        %2828 = vmatpush1.bf16.msra.mxu0 %v2269
        %2829 = vmatprep.subr.bf16.mxu0 0
        %2830 = vmatpush1.bf16.msra.mxu0 %v2272
        %2831 = vmatprep.subr.bf16.mxu0 0
        %2832 = vmatpush1.bf16.msra.mxu0 %v2275
        %2833 = vmatprep.subr.bf16.mxu0 0
        %2834 = vmatpush1.bf16.msra.mxu0 %v2278
        %2835 = vmatprep.subr.bf16.mxu0 0
        %2836 = vmatpush1.bf16.msra.mxu0 %v2281
        %2837 = vmatprep.subr.bf16.mxu0 0
        %2838 = vmatpush1.bf16.msra.mxu0 %v2284
        %2839 = vmatprep.subr.bf16.mxu0 0
        %2840 = vmatpush1.bf16.msra.mxu0 %v2287
        %2841 = vmatprep.subr.bf16.mxu0 0
        %2842 = vmatpush1.bf16.msra.mxu0 %v2290
        %2843 = vmatprep.subr.bf16.mxu0 0
        %2844 = vmatpush1.bf16.msra.mxu0 %v2293
        %2845 = vmatprep.subr.bf16.mxu0 0
        %2846 = vmatpush1.bf16.msra.mxu0 %v2296
        %2847 = vmatprep.subr.bf16.mxu0 0
        %2848 = vmatpush1.bf16.msra.mxu0 %v2299
        %2849 = vmatprep.subr.bf16.mxu0 0
        %2850 = vmatpush1.bf16.msra.mxu0 %v2302
        %2851 = vmatprep.subr.bf16.mxu0 0
        %2852 = vmatpush1.bf16.msra.mxu0 %v2305
        %2853 = vmatprep.subr.bf16.mxu0 0
        %2854 = vmatpush1.bf16.msra.mxu0 %v2308
        %2855 = vmatprep.mubr.bf16.mxu0 %v1505
        %2856 = vmatmul.mubr.bf16.gmra.mrb[0].mxu0 %v1504
        %v2857 = vpop.f32.mrb[0].mxu0
        %v2858 = vadd.f32 %v2785, %v2857
        %v2859 = vpop.f32.mrb[0].mxu0
        %v2860 = vpop.f32.mrb[0].mxu0
        %v2861 = vadd.f32 %v2788, %v2860
        %v2862 = vpop.f32.mrb[0].mxu0
        %2863 = vmatprep.mubr.bf16.mxu0 %v1509
        %2864 = vmatmul.mubr.bf16.gmra.mrb[0].mxu0 %v1508
        %v2865 = vpop.f32.mrb[0].mxu0
        %v2866 = vadd.f32 %v2793, %v2865
        %v2867 = vpop.f32.mrb[0].mxu0
        %v2868 = vpop.f32.mrb[0].mxu0
        %v2869 = vadd.f32 %v2796, %v2868
        %v2870 = vpop.f32.mrb[0].mxu0
        %2871 = vmatprep.mubr.bf16.mxu0 %v1513
        %2872 = vmatmul.mubr.bf16.gmra.mrb[0].mxu0 %v1512
        %v2873 = vpop.f32.mrb[0].mxu0
        %v2874 = vadd.f32 %v2801, %v2873
        %v2875 = vpop.f32.mrb[0].mxu0
        %v2876 = vpop.f32.mrb[0].mxu0
        %v2877 = vadd.f32 %v2804, %v2876
        %v2878 = vpop.f32.mrb[0].mxu0
        %2879 = vmatprep.mubr.bf16.mxu0 %v1517
        %2880 = vmatmul.mubr.bf16.gmra.mrb[0].mxu0 %v1516
        %v2881 = vpop.f32.mrb[0].mxu0
        %v2882 = vadd.f32 %v2809, %v2881
        %v2883 = vpop.f32.mrb[0].mxu0
        %v2884 = vpop.f32.mrb[0].mxu0
        %v2885 = vadd.f32 %v2812, %v2884
        %v2886 = vpop.f32.mrb[0].mxu0
        %2887 = vmatprep.mubr.bf16.mxu0 %v1521
        %2888 = vmatmul.mubr.bf16.gmra.mrb[0].mxu0 %v1520
        %v2889 = vpop.f32.mrb[0].mxu0
        %v2890 = vadd.f32 %v2817, %v2889
        %v2891 = vpop.f32.mrb[0].mxu0
        %v2892 = vpop.f32.mrb[0].mxu0
        %v2893 = vadd.f32 %v2820, %v2892
        %v2894 = vpop.f32.mrb[0].mxu0
        %2895 = vdwg.mxu0
        %2896 = vmatprep.subr.bf16.mxu0 0
        %2897 = vmatpush1.bf16.msra.mxu0 %v2311
        %2898 = vmatprep.subr.bf16.mxu0 0
        %2899 = vmatpush1.bf16.msra.mxu0 %v2314
        %2900 = vmatprep.subr.bf16.mxu0 0
        %2901 = vmatpush1.bf16.msra.mxu0 %v2317
        %2902 = vmatprep.subr.bf16.mxu0 0
        %2903 = vmatpush1.bf16.msra.mxu0 %v2320
        %2904 = vmatprep.subr.bf16.mxu0 0
        %2905 = vmatpush1.bf16.msra.mxu0 %v2323
        %2906 = vmatprep.subr.bf16.mxu0 0
        %2907 = vmatpush1.bf16.msra.mxu0 %v2326
        %2908 = vmatprep.subr.bf16.mxu0 0
        %2909 = vmatpush1.bf16.msra.mxu0 %v2329
        %2910 = vmatprep.subr.bf16.mxu0 0
        %2911 = vmatpush1.bf16.msra.mxu0 %v2332
        %2912 = vmatprep.subr.bf16.mxu0 0
        %2913 = vmatpush1.bf16.msra.mxu0 %v2335
        %2914 = vmatprep.subr.bf16.mxu0 0
        %2915 = vmatpush1.bf16.msra.mxu0 %v2338
        %2916 = vmatprep.subr.bf16.mxu0 0
        %2917 = vmatpush1.bf16.msra.mxu0 %v2341
        %2918 = vmatprep.subr.bf16.mxu0 0
        %2919 = vmatpush1.bf16.msra.mxu0 %v2344
        %2920 = vmatprep.subr.bf16.mxu0 0
        %2921 = vmatpush1.bf16.msra.mxu0 %v2347
        %2922 = vmatprep.subr.bf16.mxu0 0
        %2923 = vmatpush1.bf16.msra.mxu0 %v2350
        %2924 = vmatprep.subr.bf16.mxu0 0
        %2925 = vmatpush1.bf16.msra.mxu0 %v2353
        %2926 = vmatprep.subr.bf16.mxu0 0
        %2927 = vmatpush1.bf16.msra.mxu0 %v2356
        %2928 = vmatprep.mubr.bf16.mxu0 %v1507
        %2929 = vmatmul.mubr.bf16.gmra.mrb[0].mxu0 %v1506
        %v2930 = vpop.f32.mrb[0].mxu0
        %v2931 = vadd.f32 %v2858, %v2930
        %v2932 = vpop.f32.mrb[0].mxu0
        %v2933 = vpop.f32.mrb[0].mxu0
        %v2934 = vadd.f32 %v2861, %v2933
        %v2935 = vpop.f32.mrb[0].mxu0
        %2936 = vmatprep.mubr.bf16.mxu0 %v1511
        %2937 = vmatmul.mubr.bf16.gmra.mrb[0].mxu0 %v1510
        %v2938 = vpop.f32.mrb[0].mxu0
        %v2939 = vadd.f32 %v2866, %v2938
        %v2940 = vpop.f32.mrb[0].mxu0
        %v2941 = vpop.f32.mrb[0].mxu0
        %v2942 = vadd.f32 %v2869, %v2941
        %v2943 = vpop.f32.mrb[0].mxu0
        %2944 = vmatprep.mubr.bf16.mxu0 %v1515
        %2945 = vmatmul.mubr.bf16.gmra.mrb[0].mxu0 %v1514
        %v2946 = vpop.f32.mrb[0].mxu0
        %v2947 = vadd.f32 %v2874, %v2946
        %v2948 = vpop.f32.mrb[0].mxu0
        %v2949 = vpop.f32.mrb[0].mxu0
        %v2950 = vadd.f32 %v2877, %v2949
        %v2951 = vpop.f32.mrb[0].mxu0
        %2952 = vmatprep.mubr.bf16.mxu0 %v1519
        %2953 = vmatmul.mubr.bf16.gmra.mrb[0].mxu0 %v1518
        %v2954 = vpop.f32.mrb[0].mxu0
        %v2955 = vadd.f32 %v2882, %v2954
        %v2956 = vpop.f32.mrb[0].mxu0
        %v2957 = vpop.f32.mrb[0].mxu0
        %v2958 = vadd.f32 %v2885, %v2957
        %v2959 = vpop.f32.mrb[0].mxu0
        %2960 = vmatprep.mubr.bf16.mxu0 %v1523
        %2961 = vmatmul.mubr.bf16.gmra.mrb[0].mxu0 %v1522
        %v2962 = vpop.f32.mrb[0].mxu0
        %v2963 = vadd.f32 %v2890, %v2962
        %v2964 = vpop.f32.mrb[0].mxu0
        %v2965 = vpop.f32.mrb[0].mxu0
        %v2966 = vadd.f32 %v2893, %v2965
        %v2967 = vpop.f32.mrb[0].mxu0
        %2968 = vdwg.mxu0
        %v2969 = vmax.f32 %v2702, 0.0
        %v2970 = vmax.f32 %v2704, 0.0
        %v2971 = vmax.f32 %v2931, 0.0
        %v2972 = vmax.f32 %v2706, 0.0
        %v2973 = vmax.f32 %v2708, 0.0
        %v2974 = vmax.f32 %v2934, 0.0
        %v2975 = vmax.f32 %v2712, 0.0
        %v2976 = vmax.f32 %v2714, 0.0
        %v2977 = vmax.f32 %v2939, 0.0
        %v2978 = vmax.f32 %v2716, 0.0
        %v2979 = vmax.f32 %v2718, 0.0
        %v2980 = vmax.f32 %v2942, 0.0
        %v2981 = vmax.f32 %v2722, 0.0
        %v2982 = vmax.f32 %v2724, 0.0
        %v2983 = vmax.f32 %v2947, 0.0
        %v2984 = vmax.f32 %v2726, 0.0
        %v2985 = vmax.f32 %v2728, 0.0
        %v2986 = vmax.f32 %v2950, 0.0
        %v2987 = vmax.f32 %v2732, 0.0
        %v2988 = vmax.f32 %v2734, 0.0
        %v2989 = vmax.f32 %v2955, 0.0
        %v2990 = vmax.f32 %v2736, 0.0
        %v2991 = vmax.f32 %v2738, 0.0
        %v2992 = vmax.f32 %v2958, 0.0
        %v2993 = vmax.f32 %v2742, 0.0
        %v2994 = vmax.f32 %v2744, 0.0
        %v2995 = vmax.f32 %v2963, 0.0
        %v2996 = vmax.f32 %v2746, 0.0
        %v2997 = vmax.f32 %v2748, 0.0
        %v2998 = vmax.f32 %v2966, 0.0
        %v2999 = vadd.f32 %v2969, %v2972
        %v3000 = vadd.f32 %v2970, %v2973
        %v3001 = vadd.f32 %v2971, %v2974
        %v3002 = vadd.f32 %v2975, %v2978
        %v3003 = vadd.f32 %v2976, %v2979
        %v3004 = vadd.f32 %v2977, %v2980
        %v3005 = vadd.f32 %v2981, %v2984
        %v3006 = vadd.f32 %v2982, %v2985
        %v3007 = vadd.f32 %v2983, %v2986
        %v3008 = vadd.f32 %v2987, %v2990
        %v3009 = vadd.f32 %v2988, %v2991
        %v3010 = vadd.f32 %v2989, %v2992
        %v3011 = vadd.f32 %v2993, %v2996
        %v3012 = vadd.f32 %v2994, %v2997
        %v3013 = vadd.f32 %v2995, %v2998
        %v3014 = vpack.c.bf16 %v2999, %v2999
        %v3015 = vpack.c.bf16 %v3000, %v3000
        %v3016 = vpack.c.bf16 %v3001, %v3001
        %v3017 = vpack.c.bf16 %v3002, %v3002
        %v3018 = vpack.c.bf16 %v3003, %v3003
        %v3019 = vpack.c.bf16 %v3004, %v3004
        %v3020 = vpack.c.bf16 %v3005, %v3005
        %v3021 = vpack.c.bf16 %v3006, %v3006
        %v3022 = vpack.c.bf16 %v3007, %v3007
        %v3023 = vpack.c.bf16 %v3008, %v3008
        %v3024 = vpack.c.bf16 %v3009, %v3009
        %v3025 = vpack.c.bf16 %v3010, %v3010
        %v3026 = vpack.c.bf16 %v3011, %v3011
        %v3027 = vpack.c.bf16 %v3012, %v3012
        %v3028 = vpack.c.bf16 %v3013, %v3013
        %v3029 = vld [vmem:[#allocation10] sm:$0xf]
        %v3030 = vld [vmem:[#allocation10 + $0x4] sm:$0xf]
        %v3031 = vld [vmem:[#allocation10 + $0x8] sm:$0xf]
        %v3032 = vld [vmem:[#allocation10 + $0xc] sm:$0xf]
        %v3033 = vld [vmem:[#allocation10 + $0x10] sm:$0xf]
        %v3034 = vld [vmem:[#allocation10 + $0x14] sm:$0xf]
        %v3035 = vld [vmem:[#allocation10 + $0x18] sm:$0xf]
        %v3036 = vld [vmem:[#allocation10 + $0x1c] sm:$0xf]
        %v3037 = vld [vmem:[#allocation10 + $0x20] sm:$0xf]
        %v3038 = vld [vmem:[#allocation10 + $0x24] sm:$0xf]
        %v3039 = vld [vmem:[#allocation10 + $0x28] sm:$0xf]
        %v3040 = vld [vmem:[#allocation10 + $0x2c] sm:$0xf]
        %v3041 = vld [vmem:[#allocation10 + $0x30] sm:$0xf]
        %v3042 = vld [vmem:[#allocation10 + $0x34] sm:$0xf]
        %v3043 = vld [vmem:[#allocation10 + $0x38] sm:$0xf]
        %v3044 = vld [vmem:[#allocation10 + $0x3c] sm:$0xf]
        %v3045 = vld [vmem:[#allocation10 + $0x40] sm:$0xf]
        %v3046 = vld [vmem:[#allocation10 + $0x44] sm:$0xf]
        %v3047 = vld [vmem:[#allocation10 + $0x48] sm:$0xf]
        %v3048 = vld [vmem:[#allocation10 + $0x4c] sm:$0xf]
        %v3049 = vld [vmem:[#allocation10 + $0x50] sm:$0xf]
        %v3050 = vld [vmem:[#allocation10 + $0x54] sm:$0xf]
        %v3051 = vld [vmem:[#allocation10 + $0x58] sm:$0xf]
        %v3052 = vld [vmem:[#allocation10 + $0x5c] sm:$0xf]
        %v3053 = vld [vmem:[#allocation10 + $0x60] sm:$0xf]
        %v3054 = vld [vmem:[#allocation10 + $0x64] sm:$0xf]
        %v3055 = vld [vmem:[#allocation10 + $0x68] sm:$0xf]
        %v3056 = vld [vmem:[#allocation10 + $0x6c] sm:$0xf]
        %v3057 = vld [vmem:[#allocation10 + $0x70] sm:$0xf]
        %v3058 = vld [vmem:[#allocation10 + $0x74] sm:$0xf]
        %v3059 = vld [vmem:[#allocation10 + $0x78] sm:$0xf]
        %v3060 = vld [vmem:[#allocation10 + $0x7c] sm:$0xf]
        %v3061 = vld [vmem:[#allocation10 + $0x80] sm:$0xf]
        %v3062 = vld [vmem:[#allocation10 + $0x84] sm:$0xf]
        %v3063 = vld [vmem:[#allocation10 + $0x88] sm:$0xf]
        %v3064 = vld [vmem:[#allocation10 + $0x8c] sm:$0xf]
        %v3065 = vld [vmem:[#allocation10 + $0x90] sm:$0xf]
        %v3066 = vld [vmem:[#allocation10 + $0x94] sm:$0xf]
        %v3067 = vld [vmem:[#allocation10 + $0x98] sm:$0xf]
        %v3068 = vld [vmem:[#allocation10 + $0x9c] sm:$0xf]
        %v3069 = vld [vmem:[#allocation10 + $0xa0] sm:$0xf]
        %v3070 = vld [vmem:[#allocation10 + $0xa4] sm:$0xf]
        %v3071 = vld [vmem:[#allocation10 + $0xa8] sm:$0xf]
        %v3072 = vld [vmem:[#allocation10 + $0xac] sm:$0xf]
        %v3073 = vld [vmem:[#allocation10 + $0xb0] sm:$0xf]
        %v3074 = vld [vmem:[#allocation10 + $0xb4] sm:$0xf]
        %v3075 = vld [vmem:[#allocation10 + $0xb8] sm:$0xf]
        %v3076 = vld [vmem:[#allocation10 + $0xbc] sm:$0xf]
        %v3077 = vld [vmem:[#allocation10 + $0xc0] sm:$0xf]
        %v3078 = vld [vmem:[#allocation10 + $0xc4] sm:$0xf]
        %v3079 = vld [vmem:[#allocation10 + $0xc8] sm:$0xf]
        %v3080 = vld [vmem:[#allocation10 + $0xcc] sm:$0xf]
        %v3081 = vld [vmem:[#allocation10 + $0xd0] sm:$0xf]
        %v3082 = vld [vmem:[#allocation10 + $0xd4] sm:$0xf]
        %v3083 = vld [vmem:[#allocation10 + $0xd8] sm:$0xf]
        %v3084 = vld [vmem:[#allocation10 + $0xdc] sm:$0xf]
        %v3085 = vld [vmem:[#allocation10 + $0xe0] sm:$0xf]
        %v3086 = vld [vmem:[#allocation10 + $0xe4] sm:$0xf]
        %v3087 = vld [vmem:[#allocation10 + $0xe8] sm:$0xf]
        %v3088 = vld [vmem:[#allocation10 + $0xec] sm:$0xf]
        %v3089 = vld [vmem:[#allocation10 + $0xf0] sm:$0xf]
        %v3090 = vld [vmem:[#allocation10 + $0xf4] sm:$0xf]
        %v3091 = vld [vmem:[#allocation10 + $0xf8] sm:$0xf]
        %v3092 = vld [vmem:[#allocation10 + $0xfc] sm:$0xf]
        %v3093 = vld [vmem:[#allocation10 + $0x100] sm:$0xf]
        %v3094 = vld [vmem:[#allocation10 + $0x104] sm:$0xf]
        %v3095 = vld [vmem:[#allocation10 + $0x108] sm:$0xf]
        %v3096 = vld [vmem:[#allocation10 + $0x10c] sm:$0xf]
        %v3097 = vld [vmem:[#allocation10 + $0x110] sm:$0xf]
        %v3098 = vld [vmem:[#allocation10 + $0x114] sm:$0xf]
        %v3099 = vld [vmem:[#allocation10 + $0x118] sm:$0xf]
        %v3100 = vld [vmem:[#allocation10 + $0x11c] sm:$0xf]
        %v3101 = vld [vmem:[#allocation10 + $0x120] sm:$0xf]
        %v3102 = vld [vmem:[#allocation10 + $0x124] sm:$0xf]
        %v3103 = vld [vmem:[#allocation10 + $0x128] sm:$0xf]
        %v3104 = vld [vmem:[#allocation10 + $0x12c] sm:$0xf]
        %v3105 = vld [vmem:[#allocation10 + $0x130] sm:$0xf]
        %v3106 = vld [vmem:[#allocation10 + $0x134] sm:$0xf]
        %v3107 = vld [vmem:[#allocation10 + $0x138] sm:$0xf]
        %v3108 = vld [vmem:[#allocation10 + $0x13c] sm:$0xf]
        %v3109 = vld [vmem:[#allocation10 + $0x140] sm:$0xf]
        %v3110 = vld [vmem:[#allocation10 + $0x144] sm:$0xf]
        %v3111 = vld [vmem:[#allocation10 + $0x148] sm:$0xf]
        %v3112 = vld [vmem:[#allocation10 + $0x14c] sm:$0xf]
        %v3113 = vld [vmem:[#allocation10 + $0x150] sm:$0xf]
        %v3114 = vld [vmem:[#allocation10 + $0x154] sm:$0xf]
        %v3115 = vld [vmem:[#allocation10 + $0x158] sm:$0xf]
        %v3116 = vld [vmem:[#allocation10 + $0x15c] sm:$0xf]
        %v3117 = vld [vmem:[#allocation10 + $0x160] sm:$0xf]
        %v3118 = vld [vmem:[#allocation10 + $0x164] sm:$0xf]
        %v3119 = vld [vmem:[#allocation10 + $0x168] sm:$0xf]
        %v3120 = vld [vmem:[#allocation10 + $0x16c] sm:$0xf]
        %v3121 = vld [vmem:[#allocation10 + $0x170] sm:$0xf]
        %v3122 = vld [vmem:[#allocation10 + $0x174] sm:$0xf]
        %v3123 = vld [vmem:[#allocation10 + $0x178] sm:$0xf]
        %v3124 = vld [vmem:[#allocation10 + $0x17c] sm:$0xf]
        %v3125 = vld [vmem:[#allocation10 + $0x180] sm:$0xf]
        %v3126 = vld [vmem:[#allocation10 + $0x184] sm:$0xf]
        %v3127 = vld [vmem:[#allocation10 + $0x188] sm:$0xf]
        %v3128 = vld [vmem:[#allocation10 + $0x18c] sm:$0xf]
        %v3129 = vld [vmem:[#allocation10 + $0x190] sm:$0xf]
        %v3130 = vld [vmem:[#allocation10 + $0x194] sm:$0xf]
        %v3131 = vld [vmem:[#allocation10 + $0x198] sm:$0xf]
        %v3132 = vld [vmem:[#allocation10 + $0x19c] sm:$0xf]
        %v3133 = vld [vmem:[#allocation10 + $0x1a0] sm:$0xf]
        %v3134 = vld [vmem:[#allocation10 + $0x1a4] sm:$0xf]
        %v3135 = vld [vmem:[#allocation10 + $0x1a8] sm:$0xf]
        %v3136 = vld [vmem:[#allocation10 + $0x1ac] sm:$0xf]
        %v3137 = vld [vmem:[#allocation10 + $0x1b0] sm:$0xf]
        %v3138 = vld [vmem:[#allocation10 + $0x1b4] sm:$0xf]
        %v3139 = vld [vmem:[#allocation10 + $0x1b8] sm:$0xf]
        %v3140 = vld [vmem:[#allocation10 + $0x1bc] sm:$0xf]
        %v3141 = vld [vmem:[#allocation10 + $0x1c0] sm:$0xf]
        %v3142 = vld [vmem:[#allocation10 + $0x1c4] sm:$0xf]
        %v3143 = vld [vmem:[#allocation10 + $0x1c8] sm:$0xf]
        %v3144 = vld [vmem:[#allocation10 + $0x1cc] sm:$0xf]
        %v3145 = vld [vmem:[#allocation10 + $0x1d0] sm:$0xf]
        %v3146 = vld [vmem:[#allocation10 + $0x1d4] sm:$0xf]
        %v3147 = vld [vmem:[#allocation10 + $0x1d8] sm:$0xf]
        %v3148 = vld [vmem:[#allocation10 + $0x1dc] sm:$0xf]
        %v3149 = vld [vmem:[#allocation10 + $0x1e0] sm:$0xf]
        %v3150 = vld [vmem:[#allocation10 + $0x1e4] sm:$0xf]
        %v3151 = vld [vmem:[#allocation10 + $0x1e8] sm:$0xf]
        %v3152 = vld [vmem:[#allocation10 + $0x1ec] sm:$0xf]
        %v3153 = vld [vmem:[#allocation10 + $0x1f0] sm:$0xf]
        %v3154 = vld [vmem:[#allocation10 + $0x1f4] sm:$0xf]
        %v3155 = vld [vmem:[#allocation10 + $0x1f8] sm:$0xf]
        %v3156 = vld [vmem:[#allocation10 + $0x1fc] sm:$0xf]
        %v3157 = vld [vmem:[#allocation10 + $0x200] sm:$0xf]
        %v3158 = vld [vmem:[#allocation10 + $0x204] sm:$0xf]
        %v3159 = vld [vmem:[#allocation10 + $0x208] sm:$0xf]
        %v3160 = vld [vmem:[#allocation10 + $0x20c] sm:$0xf]
        %v3161 = vld [vmem:[#allocation10 + $0x210] sm:$0xf]
        %v3162 = vld [vmem:[#allocation10 + $0x214] sm:$0xf]
        %v3163 = vld [vmem:[#allocation10 + $0x218] sm:$0xf]
        %v3164 = vld [vmem:[#allocation10 + $0x21c] sm:$0xf]
        %v3165 = vld [vmem:[#allocation10 + $0x220] sm:$0xf]
        %v3166 = vld [vmem:[#allocation10 + $0x224] sm:$0xf]
        %v3167 = vld [vmem:[#allocation10 + $0x228] sm:$0xf]
        %v3168 = vld [vmem:[#allocation10 + $0x22c] sm:$0xf]
        %v3169 = vld [vmem:[#allocation10 + $0x230] sm:$0xf]
        %v3170 = vld [vmem:[#allocation10 + $0x234] sm:$0xf]
        %v3171 = vld [vmem:[#allocation10 + $0x238] sm:$0xf]
        %v3172 = vld [vmem:[#allocation10 + $0x23c] sm:$0xf]
        %v3173 = vld [vmem:[#allocation10 + $0x240] sm:$0xf]
        %v3174 = vld [vmem:[#allocation10 + $0x244] sm:$0xf]
        %v3175 = vld [vmem:[#allocation10 + $0x248] sm:$0xf]
        %v3176 = vld [vmem:[#allocation10 + $0x24c] sm:$0xf]
        %v3177 = vld [vmem:[#allocation10 + $0x250] sm:$0xf]
        %v3178 = vld [vmem:[#allocation10 + $0x254] sm:$0xf]
        %v3179 = vld [vmem:[#allocation10 + $0x258] sm:$0xf]
        %v3180 = vld [vmem:[#allocation10 + $0x25c] sm:$0xf]
        %v3181 = vld [vmem:[#allocation10 + $0x260] sm:$0xf]
        %v3182 = vld [vmem:[#allocation10 + $0x264] sm:$0xf]
        %v3183 = vld [vmem:[#allocation10 + $0x268] sm:$0xf]
        %v3184 = vld [vmem:[#allocation10 + $0x26c] sm:$0xf]
        %v3185 = vld [vmem:[#allocation10 + $0x270] sm:$0xf]
        %v3186 = vld [vmem:[#allocation10 + $0x274] sm:$0xf]
        %v3187 = vld [vmem:[#allocation10 + $0x278] sm:$0xf]
        %v3188 = vld [vmem:[#allocation10 + $0x27c] sm:$0xf]
        %v3189 = vld [vmem:[#allocation10 + $0x280] sm:$0xf]
        %v3190 = vld [vmem:[#allocation10 + $0x284] sm:$0xf]
        %v3191 = vld [vmem:[#allocation10 + $0x288] sm:$0xf]
        %v3192 = vld [vmem:[#allocation10 + $0x28c] sm:$0xf]
        %v3193 = vld [vmem:[#allocation10 + $0x290] sm:$0xf]
        %v3194 = vld [vmem:[#allocation10 + $0x294] sm:$0xf]
        %v3195 = vld [vmem:[#allocation10 + $0x298] sm:$0xf]
        %v3196 = vld [vmem:[#allocation10 + $0x29c] sm:$0xf]
        %v3197 = vld [vmem:[#allocation10 + $0x2a0] sm:$0xf]
        %v3198 = vld [vmem:[#allocation10 + $0x2a4] sm:$0xf]
        %v3199 = vld [vmem:[#allocation10 + $0x2a8] sm:$0xf]
        %v3200 = vld [vmem:[#allocation10 + $0x2ac] sm:$0xf]
        %v3201 = vld [vmem:[#allocation10 + $0x2b0] sm:$0xf]
        %v3202 = vld [vmem:[#allocation10 + $0x2b4] sm:$0xf]
        %v3203 = vld [vmem:[#allocation10 + $0x2b8] sm:$0xf]
        %v3204 = vld [vmem:[#allocation10 + $0x2bc] sm:$0xf]
        %v3205 = vld [vmem:[#allocation10 + $0x2c0] sm:$0xf]
        %v3206 = vld [vmem:[#allocation10 + $0x2c4] sm:$0xf]
        %v3207 = vld [vmem:[#allocation10 + $0x2c8] sm:$0xf]
        %v3208 = vld [vmem:[#allocation10 + $0x2cc] sm:$0xf]
        %v3209 = vld [vmem:[#allocation10 + $0x2d0] sm:$0xf]
        %v3210 = vld [vmem:[#allocation10 + $0x2d4] sm:$0xf]
        %v3211 = vld [vmem:[#allocation10 + $0x2d8] sm:$0xf]
        %v3212 = vld [vmem:[#allocation10 + $0x2dc] sm:$0xf]
        %v3213 = vld [vmem:[#allocation10 + $0x2e0] sm:$0xf]
        %v3214 = vld [vmem:[#allocation10 + $0x2e4] sm:$0xf]
        %v3215 = vld [vmem:[#allocation10 + $0x2e8] sm:$0xf]
        %v3216 = vld [vmem:[#allocation10 + $0x2ec] sm:$0xf]
        %v3217 = vld [vmem:[#allocation10 + $0x2f0] sm:$0xf]
        %v3218 = vld [vmem:[#allocation10 + $0x2f4] sm:$0xf]
        %v3219 = vld [vmem:[#allocation10 + $0x2f8] sm:$0xf]
        %v3220 = vld [vmem:[#allocation10 + $0x2fc] sm:$0xf]
        %v3221 = vld [vmem:[#allocation10 + $0x300] sm:$0xf]
        %v3222 = vld [vmem:[#allocation10 + $0x304] sm:$0xf]
        %v3223 = vld [vmem:[#allocation10 + $0x308] sm:$0xf]
        %v3224 = vld [vmem:[#allocation10 + $0x30c] sm:$0xf]
        %v3225 = vld [vmem:[#allocation10 + $0x310] sm:$0xf]
        %v3226 = vld [vmem:[#allocation10 + $0x314] sm:$0xf]
        %v3227 = vld [vmem:[#allocation10 + $0x318] sm:$0xf]
        %v3228 = vld [vmem:[#allocation10 + $0x31c] sm:$0xf]
        %v3229 = vld [vmem:[#allocation10 + $0x320] sm:$0xf]
        %v3230 = vld [vmem:[#allocation10 + $0x324] sm:$0xf]
        %v3231 = vld [vmem:[#allocation10 + $0x328] sm:$0xf]
        %v3232 = vld [vmem:[#allocation10 + $0x32c] sm:$0xf]
        %v3233 = vld [vmem:[#allocation10 + $0x330] sm:$0xf]
        %v3234 = vld [vmem:[#allocation10 + $0x334] sm:$0xf]
        %v3235 = vld [vmem:[#allocation10 + $0x338] sm:$0xf]
        %v3236 = vld [vmem:[#allocation10 + $0x33c] sm:$0xf]
        %v3237 = vld [vmem:[#allocation10 + $0x340] sm:$0xf]
        %v3238 = vld [vmem:[#allocation10 + $0x344] sm:$0xf]
        %v3239 = vld [vmem:[#allocation10 + $0x348] sm:$0xf]
        %v3240 = vld [vmem:[#allocation10 + $0x34c] sm:$0xf]
        %v3241 = vld [vmem:[#allocation10 + $0x350] sm:$0xf]
        %v3242 = vld [vmem:[#allocation10 + $0x354] sm:$0xf]
        %v3243 = vld [vmem:[#allocation10 + $0x358] sm:$0xf]
        %v3244 = vld [vmem:[#allocation10 + $0x35c] sm:$0xf]
        %v3245 = vld [vmem:[#allocation10 + $0x360] sm:$0xf]
        %v3246 = vld [vmem:[#allocation10 + $0x364] sm:$0xf]
        %v3247 = vld [vmem:[#allocation10 + $0x368] sm:$0xf]
        %v3248 = vld [vmem:[#allocation10 + $0x36c] sm:$0xf]
        %v3249 = vld [vmem:[#allocation10 + $0x370] sm:$0xf]
        %v3250 = vld [vmem:[#allocation10 + $0x374] sm:$0xf]
        %v3251 = vld [vmem:[#allocation10 + $0x378] sm:$0xf]
        %v3252 = vld [vmem:[#allocation10 + $0x37c] sm:$0xf]
        %v3253 = vld [vmem:[#allocation10 + $0x380] sm:$0xf]
        %v3254 = vld [vmem:[#allocation10 + $0x384] sm:$0xf]
        %v3255 = vld [vmem:[#allocation10 + $0x388] sm:$0xf]
        %v3256 = vld [vmem:[#allocation10 + $0x38c] sm:$0xf]
        %v3257 = vld [vmem:[#allocation10 + $0x390] sm:$0xf]
        %v3258 = vld [vmem:[#allocation10 + $0x394] sm:$0xf]
        %v3259 = vld [vmem:[#allocation10 + $0x398] sm:$0xf]
        %v3260 = vld [vmem:[#allocation10 + $0x39c] sm:$0xf]
        %v3261 = vld [vmem:[#allocation10 + $0x3a0] sm:$0xf]
        %v3262 = vld [vmem:[#allocation10 + $0x3a4] sm:$0xf]
        %v3263 = vld [vmem:[#allocation10 + $0x3a8] sm:$0xf]
        %v3264 = vld [vmem:[#allocation10 + $0x3ac] sm:$0xf]
        %v3265 = vld [vmem:[#allocation10 + $0x3b0] sm:$0xf]
        %v3266 = vld [vmem:[#allocation10 + $0x3b4] sm:$0xf]
        %v3267 = vld [vmem:[#allocation10 + $0x3b8] sm:$0xf]
        %v3268 = vld [vmem:[#allocation10 + $0x3bc] sm:$0xf]
        %v3269 = vld [vmem:[%s6] sm:$0x1]
        %v3271 = vlaneseq
        %v3272 = vshrl.u32 %v3271, 7
        %v3273 = vsub.s32 0, %v3272
        %v3274 = vrot.slane %v3269, %v3273
        %v3516 = vunpack.c.l.b16 %v3029
        %v3517 = vunpack.c.l.b16 %v3030
        %v3518 = vunpack.c.l.b16 %v3031
        %v3519 = vunpack.c.l.b16 %v3032
        %v3520 = vunpack.c.l.b16 %v3033
        %v3521 = vunpack.c.l.b16 %v3034
        %v3522 = vunpack.c.l.b16 %v3035
        %v3523 = vunpack.c.l.b16 %v3036
        %v3524 = vunpack.c.l.b16 %v3037
        %v3525 = vunpack.c.l.b16 %v3038
        %v3526 = vunpack.c.l.b16 %v3039
        %v3527 = vunpack.c.l.b16 %v3040
        %v3528 = vunpack.c.l.b16 %v3041
        %v3529 = vunpack.c.l.b16 %v3042
        %v3530 = vunpack.c.l.b16 %v3043
        %v3531 = vunpack.c.l.b16 %v3044
        %v3532 = vunpack.c.l.b16 %v3045
        %v3533 = vunpack.c.l.b16 %v3046
        %v3534 = vunpack.c.l.b16 %v3047
        %v3535 = vunpack.c.l.b16 %v3048
        %v3536 = vunpack.c.l.b16 %v3049
        %v3537 = vunpack.c.l.b16 %v3050
        %v3538 = vunpack.c.l.b16 %v3051
        %v3539 = vunpack.c.l.b16 %v3052
        %v3540 = vunpack.c.l.b16 %v3053
        %v3541 = vunpack.c.l.b16 %v3054
        %v3542 = vunpack.c.l.b16 %v3055
        %v3543 = vunpack.c.l.b16 %v3056
        %v3544 = vunpack.c.l.b16 %v3057
        %v3545 = vunpack.c.l.b16 %v3058
        %v3546 = vunpack.c.l.b16 %v3059
        %v3547 = vunpack.c.l.b16 %v3060
        %v3548 = vunpack.c.l.b16 %v3061
        %v3549 = vunpack.c.l.b16 %v3062
        %v3550 = vunpack.c.l.b16 %v3063
        %v3551 = vunpack.c.l.b16 %v3064
        %v3552 = vunpack.c.l.b16 %v3065
        %v3553 = vunpack.c.l.b16 %v3066
        %v3554 = vunpack.c.l.b16 %v3067
        %v3555 = vunpack.c.l.b16 %v3068
        %v3556 = vunpack.c.l.b16 %v3069
        %v3557 = vunpack.c.l.b16 %v3070
        %v3558 = vunpack.c.l.b16 %v3071
        %v3559 = vunpack.c.l.b16 %v3072
        %v3560 = vunpack.c.l.b16 %v3073
        %v3561 = vunpack.c.l.b16 %v3074
        %v3562 = vunpack.c.l.b16 %v3075
        %v3563 = vunpack.c.l.b16 %v3076
        %v3564 = vunpack.c.l.b16 %v3077
        %v3565 = vunpack.c.l.b16 %v3078
        %v3566 = vunpack.c.l.b16 %v3079
        %v3567 = vunpack.c.l.b16 %v3080
        %v3568 = vunpack.c.l.b16 %v3081
        %v3569 = vunpack.c.l.b16 %v3082
        %v3570 = vunpack.c.l.b16 %v3083
        %v3571 = vunpack.c.l.b16 %v3084
        %v3572 = vunpack.c.l.b16 %v3085
        %v3573 = vunpack.c.l.b16 %v3086
        %v3574 = vunpack.c.l.b16 %v3087
        %v3575 = vunpack.c.l.b16 %v3088
        %v3576 = vunpack.c.l.b16 %v3089
        %v3577 = vunpack.c.l.b16 %v3090
        %v3578 = vunpack.c.l.b16 %v3091
        %v3579 = vunpack.c.l.b16 %v3092
        %v3580 = vunpack.c.l.b16 %v3093
        %v3581 = vunpack.c.l.b16 %v3094
        %v3582 = vunpack.c.l.b16 %v3095
        %v3583 = vunpack.c.l.b16 %v3096
        %v3584 = vunpack.c.l.b16 %v3097
        %v3585 = vunpack.c.l.b16 %v3098
        %v3586 = vunpack.c.l.b16 %v3099
        %v3587 = vunpack.c.l.b16 %v3100
        %v3588 = vunpack.c.l.b16 %v3101
        %v3589 = vunpack.c.l.b16 %v3102
        %v3590 = vunpack.c.l.b16 %v3103
        %v3591 = vunpack.c.l.b16 %v3104
        %v3592 = vunpack.c.l.b16 %v3105
        %v3593 = vunpack.c.l.b16 %v3106
        %v3594 = vunpack.c.l.b16 %v3107
        %v3595 = vunpack.c.l.b16 %v3108
        %v3596 = vunpack.c.l.b16 %v3109
        %v3597 = vunpack.c.l.b16 %v3110
        %v3598 = vunpack.c.l.b16 %v3111
        %v3599 = vunpack.c.l.b16 %v3112
        %v3600 = vunpack.c.l.b16 %v3113
        %v3601 = vunpack.c.l.b16 %v3114
        %v3602 = vunpack.c.l.b16 %v3115
        %v3603 = vunpack.c.l.b16 %v3116
        %v3604 = vunpack.c.l.b16 %v3117
        %v3605 = vunpack.c.l.b16 %v3118
        %v3606 = vunpack.c.l.b16 %v3119
        %v3607 = vunpack.c.l.b16 %v3120
        %v3608 = vunpack.c.l.b16 %v3121
        %v3609 = vunpack.c.l.b16 %v3122
        %v3610 = vunpack.c.l.b16 %v3123
        %v3611 = vunpack.c.l.b16 %v3124
        %v3612 = vunpack.c.l.b16 %v3125
        %v3613 = vunpack.c.l.b16 %v3126
        %v3614 = vunpack.c.l.b16 %v3127
        %v3615 = vunpack.c.l.b16 %v3128
        %v3616 = vunpack.c.l.b16 %v3129
        %v3617 = vunpack.c.l.b16 %v3130
        %v3618 = vunpack.c.l.b16 %v3131
        %v3619 = vunpack.c.l.b16 %v3132
        %v3620 = vunpack.c.l.b16 %v3133
        %v3621 = vunpack.c.l.b16 %v3134
        %v3622 = vunpack.c.l.b16 %v3135
        %v3623 = vunpack.c.l.b16 %v3136
        %v3624 = vunpack.c.l.b16 %v3137
        %v3625 = vunpack.c.l.b16 %v3138
        %v3626 = vunpack.c.l.b16 %v3139
        %v3627 = vunpack.c.l.b16 %v3140
        %v3628 = vunpack.c.l.b16 %v3141
        %v3629 = vunpack.c.l.b16 %v3142
        %v3630 = vunpack.c.l.b16 %v3143
        %v3631 = vunpack.c.l.b16 %v3144
        %v3632 = vunpack.c.l.b16 %v3145
        %v3633 = vunpack.c.l.b16 %v3146
        %v3634 = vunpack.c.l.b16 %v3147
        %v3635 = vunpack.c.l.b16 %v3148
        %v3636 = vunpack.c.l.b16 %v3149
        %v3637 = vunpack.c.l.b16 %v3150
        %v3638 = vunpack.c.l.b16 %v3151
        %v3639 = vunpack.c.l.b16 %v3152
        %v3640 = vunpack.c.l.b16 %v3153
        %v3641 = vunpack.c.l.b16 %v3154
        %v3642 = vunpack.c.l.b16 %v3155
        %v3643 = vunpack.c.l.b16 %v3156
        %v3644 = vunpack.c.l.b16 %v3157
        %v3645 = vunpack.c.l.b16 %v3158
        %v3646 = vunpack.c.l.b16 %v3159
        %v3647 = vunpack.c.l.b16 %v3160
        %v3648 = vunpack.c.l.b16 %v3161
        %v3649 = vunpack.c.l.b16 %v3162
        %v3650 = vunpack.c.l.b16 %v3163
        %v3651 = vunpack.c.l.b16 %v3164
        %v3652 = vunpack.c.l.b16 %v3165
        %v3653 = vunpack.c.l.b16 %v3166
        %v3654 = vunpack.c.l.b16 %v3167
        %v3655 = vunpack.c.l.b16 %v3168
        %v3656 = vunpack.c.l.b16 %v3169
        %v3657 = vunpack.c.l.b16 %v3170
        %v3658 = vunpack.c.l.b16 %v3171
        %v3659 = vunpack.c.l.b16 %v3172
        %v3660 = vunpack.c.l.b16 %v3173
        %v3661 = vunpack.c.l.b16 %v3174
        %v3662 = vunpack.c.l.b16 %v3175
        %v3663 = vunpack.c.l.b16 %v3176
        %v3664 = vunpack.c.l.b16 %v3177
        %v3665 = vunpack.c.l.b16 %v3178
        %v3666 = vunpack.c.l.b16 %v3179
        %v3667 = vunpack.c.l.b16 %v3180
        %v3668 = vunpack.c.l.b16 %v3181
        %v3669 = vunpack.c.l.b16 %v3182
        %v3670 = vunpack.c.l.b16 %v3183
        %v3671 = vunpack.c.l.b16 %v3184
        %v3672 = vunpack.c.l.b16 %v3185
        %v3673 = vunpack.c.l.b16 %v3186
        %v3674 = vunpack.c.l.b16 %v3187
        %v3675 = vunpack.c.l.b16 %v3188
        %v3676 = vunpack.c.l.b16 %v3189
        %v3677 = vunpack.c.l.b16 %v3190
        %v3678 = vunpack.c.l.b16 %v3191
        %v3679 = vunpack.c.l.b16 %v3192
        %v3680 = vunpack.c.l.b16 %v3193
        %v3681 = vunpack.c.l.b16 %v3194
        %v3682 = vunpack.c.l.b16 %v3195
        %v3683 = vunpack.c.l.b16 %v3196
        %v3684 = vunpack.c.l.b16 %v3197
        %v3685 = vunpack.c.l.b16 %v3198
        %v3686 = vunpack.c.l.b16 %v3199
        %v3687 = vunpack.c.l.b16 %v3200
        %v3688 = vunpack.c.l.b16 %v3201
        %v3689 = vunpack.c.l.b16 %v3202
        %v3690 = vunpack.c.l.b16 %v3203
        %v3691 = vunpack.c.l.b16 %v3204
        %v3692 = vunpack.c.l.b16 %v3205
        %v3693 = vunpack.c.l.b16 %v3206
        %v3694 = vunpack.c.l.b16 %v3207
        %v3695 = vunpack.c.l.b16 %v3208
        %v3696 = vunpack.c.l.b16 %v3209
        %v3697 = vunpack.c.l.b16 %v3210
        %v3698 = vunpack.c.l.b16 %v3211
        %v3699 = vunpack.c.l.b16 %v3212
        %v3700 = vunpack.c.l.b16 %v3213
        %v3701 = vunpack.c.l.b16 %v3214
        %v3702 = vunpack.c.l.b16 %v3215
        %v3703 = vunpack.c.l.b16 %v3216
        %v3704 = vunpack.c.l.b16 %v3217
        %v3705 = vunpack.c.l.b16 %v3218
        %v3706 = vunpack.c.l.b16 %v3219
        %v3707 = vunpack.c.l.b16 %v3220
        %v3708 = vunpack.c.l.b16 %v3221
        %v3709 = vunpack.c.l.b16 %v3222
        %v3710 = vunpack.c.l.b16 %v3223
        %v3711 = vunpack.c.l.b16 %v3224
        %v3712 = vunpack.c.l.b16 %v3225
        %v3713 = vunpack.c.l.b16 %v3226
        %v3714 = vunpack.c.l.b16 %v3227
        %v3715 = vunpack.c.l.b16 %v3228
        %v3716 = vunpack.c.l.b16 %v3229
        %v3717 = vunpack.c.l.b16 %v3230
        %v3718 = vunpack.c.l.b16 %v3231
        %v3719 = vunpack.c.l.b16 %v3232
        %v3720 = vunpack.c.l.b16 %v3233
        %v3721 = vunpack.c.l.b16 %v3234
        %v3722 = vunpack.c.l.b16 %v3235
        %v3723 = vunpack.c.l.b16 %v3236
        %v3724 = vunpack.c.l.b16 %v3237
        %v3725 = vunpack.c.l.b16 %v3238
        %v3726 = vunpack.c.l.b16 %v3239
        %v3727 = vunpack.c.l.b16 %v3240
        %v3728 = vunpack.c.l.b16 %v3241
        %v3729 = vunpack.c.l.b16 %v3242
        %v3730 = vunpack.c.l.b16 %v3243
        %v3731 = vunpack.c.l.b16 %v3244
        %v3732 = vunpack.c.l.b16 %v3245
        %v3733 = vunpack.c.l.b16 %v3246
        %v3734 = vunpack.c.l.b16 %v3247
        %v3735 = vunpack.c.l.b16 %v3248
        %v3736 = vunpack.c.l.b16 %v3249
        %v3737 = vunpack.c.l.b16 %v3250
        %v3738 = vunpack.c.l.b16 %v3251
        %v3739 = vunpack.c.l.b16 %v3252
        %v3740 = vunpack.c.l.b16 %v3253
        %v3741 = vunpack.c.l.b16 %v3254
        %v3742 = vunpack.c.l.b16 %v3255
        %v3743 = vunpack.c.l.b16 %v3256
        %v3744 = vunpack.c.l.b16 %v3257
        %v3745 = vunpack.c.l.b16 %v3258
        %v3746 = vunpack.c.l.b16 %v3259
        %v3747 = vunpack.c.l.b16 %v3260
        %v3748 = vunpack.c.l.b16 %v3261
        %v3749 = vunpack.c.l.b16 %v3262
        %v3750 = vunpack.c.l.b16 %v3263
        %v3751 = vunpack.c.l.b16 %v3264
        %v3752 = vunpack.c.l.b16 %v3265
        %v3753 = vunpack.c.l.b16 %v3266
        %v3754 = vunpack.c.l.b16 %v3267
        %v3755 = vunpack.c.l.b16 %v3268
        %v3756 = vpack.c.b16 %v3517, %v3516
        %v3757 = vpack.c.b16 %v3519, %v3518
        %v3758 = vpack.c.b16 %v3521, %v3520
        %v3759 = vpack.c.b16 %v3523, %v3522
        %v3760 = vpack.c.b16 %v3525, %v3524
        %v3761 = vpack.c.b16 %v3527, %v3526
        %v3762 = vpack.c.b16 %v3529, %v3528
        %v3763 = vpack.c.b16 %v3531, %v3530
        %v3764 = vpack.c.b16 %v3533, %v3532
        %v3765 = vpack.c.b16 %v3535, %v3534
        %v3766 = vpack.c.b16 %v3537, %v3536
        %v3767 = vpack.c.b16 %v3539, %v3538
        %v3768 = vpack.c.b16 %v3541, %v3540
        %v3769 = vpack.c.b16 %v3543, %v3542
        %v3770 = vpack.c.b16 %v3545, %v3544
        %v3771 = vpack.c.b16 %v3547, %v3546
        %v3772 = vpack.c.b16 %v3549, %v3548
        %v3773 = vpack.c.b16 %v3551, %v3550
        %v3774 = vpack.c.b16 %v3553, %v3552
        %v3775 = vpack.c.b16 %v3555, %v3554
        %v3776 = vpack.c.b16 %v3557, %v3556
        %v3777 = vpack.c.b16 %v3559, %v3558
        %v3778 = vpack.c.b16 %v3561, %v3560
        %v3779 = vpack.c.b16 %v3563, %v3562
        %v3780 = vpack.c.b16 %v3565, %v3564
        %v3781 = vpack.c.b16 %v3567, %v3566
        %v3782 = vpack.c.b16 %v3569, %v3568
        %v3783 = vpack.c.b16 %v3571, %v3570
        %v3784 = vpack.c.b16 %v3573, %v3572
        %v3785 = vpack.c.b16 %v3575, %v3574
        %v3786 = vpack.c.b16 %v3577, %v3576
        %v3787 = vpack.c.b16 %v3579, %v3578
        %v3788 = vpack.c.b16 %v3581, %v3580
        %v3789 = vpack.c.b16 %v3583, %v3582
        %v3790 = vpack.c.b16 %v3585, %v3584
        %v3791 = vpack.c.b16 %v3587, %v3586
        %v3792 = vpack.c.b16 %v3589, %v3588
        %v3793 = vpack.c.b16 %v3591, %v3590
        %v3794 = vpack.c.b16 %v3593, %v3592
        %v3795 = vpack.c.b16 %v3595, %v3594
        %v3796 = vpack.c.b16 %v3597, %v3596
        %v3797 = vpack.c.b16 %v3599, %v3598
        %v3798 = vpack.c.b16 %v3601, %v3600
        %v3799 = vpack.c.b16 %v3603, %v3602
        %v3800 = vpack.c.b16 %v3605, %v3604
        %v3801 = vpack.c.b16 %v3607, %v3606
        %v3802 = vpack.c.b16 %v3609, %v3608
        %v3803 = vpack.c.b16 %v3611, %v3610
        %v3804 = vpack.c.b16 %v3613, %v3612
        %v3805 = vpack.c.b16 %v3615, %v3614
        %v3806 = vpack.c.b16 %v3617, %v3616
        %v3807 = vpack.c.b16 %v3619, %v3618
        %v3808 = vpack.c.b16 %v3621, %v3620
        %v3809 = vpack.c.b16 %v3623, %v3622
        %v3810 = vpack.c.b16 %v3625, %v3624
        %v3811 = vpack.c.b16 %v3627, %v3626
        %v3812 = vpack.c.b16 %v3629, %v3628
        %v3813 = vpack.c.b16 %v3631, %v3630
        %v3814 = vpack.c.b16 %v3633, %v3632
        %v3815 = vpack.c.b16 %v3635, %v3634
        %v3816 = vpack.c.b16 %v3637, %v3636
        %v3817 = vpack.c.b16 %v3639, %v3638
        %v3818 = vpack.c.b16 %v3641, %v3640
        %v3819 = vpack.c.b16 %v3643, %v3642
        %v3820 = vpack.c.b16 %v3645, %v3644
        %v3821 = vpack.c.b16 %v3647, %v3646
        %v3822 = vpack.c.b16 %v3649, %v3648
        %v3823 = vpack.c.b16 %v3651, %v3650
        %v3824 = vpack.c.b16 %v3653, %v3652
        %v3825 = vpack.c.b16 %v3655, %v3654
        %v3826 = vpack.c.b16 %v3657, %v3656
        %v3827 = vpack.c.b16 %v3659, %v3658
        %v3828 = vpack.c.b16 %v3661, %v3660
        %v3829 = vpack.c.b16 %v3663, %v3662
        %v3830 = vpack.c.b16 %v3665, %v3664
        %v3831 = vpack.c.b16 %v3667, %v3666
        %v3832 = vpack.c.b16 %v3669, %v3668
        %v3833 = vpack.c.b16 %v3671, %v3670
        %v3834 = vpack.c.b16 %v3673, %v3672
        %v3835 = vpack.c.b16 %v3675, %v3674
        %v3836 = vpack.c.b16 %v3677, %v3676
        %v3837 = vpack.c.b16 %v3679, %v3678
        %v3838 = vpack.c.b16 %v3681, %v3680
        %v3839 = vpack.c.b16 %v3683, %v3682
        %v3840 = vpack.c.b16 %v3685, %v3684
        %v3841 = vpack.c.b16 %v3687, %v3686
        %v3842 = vpack.c.b16 %v3689, %v3688
        %v3843 = vpack.c.b16 %v3691, %v3690
        %v3844 = vpack.c.b16 %v3693, %v3692
        %v3845 = vpack.c.b16 %v3695, %v3694
        %v3846 = vpack.c.b16 %v3697, %v3696
        %v3847 = vpack.c.b16 %v3699, %v3698
        %v3848 = vpack.c.b16 %v3701, %v3700
        %v3849 = vpack.c.b16 %v3703, %v3702
        %v3850 = vpack.c.b16 %v3705, %v3704
        %v3851 = vpack.c.b16 %v3707, %v3706
        %v3852 = vpack.c.b16 %v3709, %v3708
        %v3853 = vpack.c.b16 %v3711, %v3710
        %v3854 = vpack.c.b16 %v3713, %v3712
        %v3855 = vpack.c.b16 %v3715, %v3714
        %v3856 = vpack.c.b16 %v3717, %v3716
        %v3857 = vpack.c.b16 %v3719, %v3718
        %v3858 = vpack.c.b16 %v3721, %v3720
        %v3859 = vpack.c.b16 %v3723, %v3722
        %v3860 = vpack.c.b16 %v3725, %v3724
        %v3861 = vpack.c.b16 %v3727, %v3726
        %v3862 = vpack.c.b16 %v3729, %v3728
        %v3863 = vpack.c.b16 %v3731, %v3730
        %v3864 = vpack.c.b16 %v3733, %v3732
        %v3865 = vpack.c.b16 %v3735, %v3734
        %v3866 = vpack.c.b16 %v3737, %v3736
        %v3867 = vpack.c.b16 %v3739, %v3738
        %v3868 = vpack.c.b16 %v3741, %v3740
        %v3869 = vpack.c.b16 %v3743, %v3742
        %v3870 = vpack.c.b16 %v3745, %v3744
        %v3871 = vpack.c.b16 %v3747, %v3746
        %v3872 = vpack.c.b16 %v3749, %v3748
        %v3873 = vpack.c.b16 %v3751, %v3750
        %v3874 = vpack.c.b16 %v3753, %v3752
        %v3875 = vpack.c.b16 %v3755, %v3754
        %3996 = vmatprep.subr.bf16.mxu0 0
        %3997 = vmatpush1.bf16.msra.mxu0 %v3756
        %3998 = vmatprep.subr.bf16.mxu0 0
        %3999 = vmatpush1.bf16.msra.mxu0 %v3757
        %4000 = vmatprep.subr.bf16.mxu0 0
        %4001 = vmatpush1.bf16.msra.mxu0 %v3758
        %4002 = vmatprep.subr.bf16.mxu0 0
        %4003 = vmatpush1.bf16.msra.mxu0 %v3759
        %4004 = vmatprep.subr.bf16.mxu0 0
        %4005 = vmatpush1.bf16.msra.mxu0 %v3760
        %4006 = vmatprep.subr.bf16.mxu0 0
        %4007 = vmatpush1.bf16.msra.mxu0 %v3761
        %4008 = vmatprep.subr.bf16.mxu0 0
        %4009 = vmatpush1.bf16.msra.mxu0 %v3762
        %4010 = vmatprep.subr.bf16.mxu0 0
        %4011 = vmatpush1.bf16.msra.mxu0 %v3763
        %4012 = vmatprep.subr.bf16.mxu0 0
        %4013 = vmatpush1.bf16.msra.mxu0 %v3764
        %4014 = vmatprep.subr.bf16.mxu0 0
        %4015 = vmatpush1.bf16.msra.mxu0 %v3765
        %4016 = vmatprep.subr.bf16.mxu0 0
        %4017 = vmatpush1.bf16.msra.mxu0 %v3766
        %4018 = vmatprep.subr.bf16.mxu0 0
        %4019 = vmatpush1.bf16.msra.mxu0 %v3767
        %4020 = vmatprep.subr.bf16.mxu0 0
        %4021 = vmatpush1.bf16.msra.mxu0 %v3768
        %4022 = vmatprep.subr.bf16.mxu0 0
        %4023 = vmatpush1.bf16.msra.mxu0 %v3769
        %4024 = vmatprep.subr.bf16.mxu0 0
        %4025 = vmatpush1.bf16.msra.mxu0 %v3770
        %4026 = vmatprep.subr.bf16.mxu0 0
        %4027 = vmatpush1.bf16.msra.mxu0 %v3771
        %4028 = vmatprep.mubr.bf16.mxu0 %v3015
        %4029 = vmatmul.mubr.bf16.gmra.mrb[0].mxu0 %v3014
        %v4030 = vpop.f32.mrb[0].mxu0
        %v4031 = vadd.f32 %v3274, %v4030
        %v4032 = vpop.f32.mrb[0].mxu0
        %v4033 = vpop.f32.mrb[0].mxu0
        %v4034 = vpop.f32.mrb[0].mxu0
        %4035 = vdwg.mxu0
        %4036 = vmatprep.subr.bf16.mxu0 0
        %4037 = vmatpush1.bf16.msra.mxu0 %v3772
        %4038 = vmatprep.subr.bf16.mxu0 0
        %4039 = vmatpush1.bf16.msra.mxu0 %v3773
        %4040 = vmatprep.subr.bf16.mxu0 0
        %4041 = vmatpush1.bf16.msra.mxu0 %v3774
        %4042 = vmatprep.subr.bf16.mxu0 0
        %4043 = vmatpush1.bf16.msra.mxu0 %v3775
        %4044 = vmatprep.subr.bf16.mxu0 0
        %4045 = vmatpush1.bf16.msra.mxu0 %v3776
        %4046 = vmatprep.subr.bf16.mxu0 0
        %4047 = vmatpush1.bf16.msra.mxu0 %v3777
        %4048 = vmatprep.subr.bf16.mxu0 0
        %4049 = vmatpush1.bf16.msra.mxu0 %v3778
        %4050 = vmatprep.subr.bf16.mxu0 0
        %4051 = vmatpush1.bf16.msra.mxu0 %v3779
        %4052 = vmatprep.subr.bf16.mxu0 0
        %4053 = vmatpush1.bf16.msra.mxu0 %v3780
        %4054 = vmatprep.subr.bf16.mxu0 0
        %4055 = vmatpush1.bf16.msra.mxu0 %v3781
        %4056 = vmatprep.subr.bf16.mxu0 0
        %4057 = vmatpush1.bf16.msra.mxu0 %v3782
        %4058 = vmatprep.subr.bf16.mxu0 0
        %4059 = vmatpush1.bf16.msra.mxu0 %v3783
        %4060 = vmatprep.subr.bf16.mxu0 0
        %4061 = vmatpush1.bf16.msra.mxu0 %v3784
        %4062 = vmatprep.subr.bf16.mxu0 0
        %4063 = vmatpush1.bf16.msra.mxu0 %v3785
        %4064 = vmatprep.subr.bf16.mxu0 0
        %4065 = vmatpush1.bf16.msra.mxu0 %v3786
        %4066 = vmatprep.subr.bf16.mxu0 0
        %4067 = vmatpush1.bf16.msra.mxu0 %v3787
        %4068 = vmatprep.mubr.bf16.mxu0 %v3017
        %4069 = vmatmul.mubr.bf16.gmra.mrb[0].mxu0 %v3016
        %v4070 = vpop.f32.mrb[0].mxu0
        %v4071 = vadd.f32 %v4031, %v4070
        %v4072 = vpop.f32.mrb[0].mxu0
        %v4073 = vpop.f32.mrb[0].mxu0
        %v4074 = vpop.f32.mrb[0].mxu0
        %4075 = vdwg.mxu0
        %4076 = vmatprep.subr.bf16.mxu0 0
        %4077 = vmatpush1.bf16.msra.mxu0 %v3788
        %4078 = vmatprep.subr.bf16.mxu0 0
        %4079 = vmatpush1.bf16.msra.mxu0 %v3789
        %4080 = vmatprep.subr.bf16.mxu0 0
        %4081 = vmatpush1.bf16.msra.mxu0 %v3790
        %4082 = vmatprep.subr.bf16.mxu0 0
        %4083 = vmatpush1.bf16.msra.mxu0 %v3791
        %4084 = vmatprep.subr.bf16.mxu0 0
        %4085 = vmatpush1.bf16.msra.mxu0 %v3792
        %4086 = vmatprep.subr.bf16.mxu0 0
        %4087 = vmatpush1.bf16.msra.mxu0 %v3793
        %4088 = vmatprep.subr.bf16.mxu0 0
        %4089 = vmatpush1.bf16.msra.mxu0 %v3794
        %4090 = vmatprep.subr.bf16.mxu0 0
        %4091 = vmatpush1.bf16.msra.mxu0 %v3795
        %4092 = vmatprep.subr.bf16.mxu0 0
        %4093 = vmatpush1.bf16.msra.mxu0 %v3796
        %4094 = vmatprep.subr.bf16.mxu0 0
        %4095 = vmatpush1.bf16.msra.mxu0 %v3797
        %4096 = vmatprep.subr.bf16.mxu0 0
        %4097 = vmatpush1.bf16.msra.mxu0 %v3798
        %4098 = vmatprep.subr.bf16.mxu0 0
        %4099 = vmatpush1.bf16.msra.mxu0 %v3799
        %4100 = vmatprep.subr.bf16.mxu0 0
        %4101 = vmatpush1.bf16.msra.mxu0 %v3800
        %4102 = vmatprep.subr.bf16.mxu0 0
        %4103 = vmatpush1.bf16.msra.mxu0 %v3801
        %4104 = vmatprep.subr.bf16.mxu0 0
        %4105 = vmatpush1.bf16.msra.mxu0 %v3802
        %4106 = vmatprep.subr.bf16.mxu0 0
        %4107 = vmatpush1.bf16.msra.mxu0 %v3803
        %4108 = vmatprep.mubr.bf16.mxu0 %v3019
        %4109 = vmatmul.mubr.bf16.gmra.mrb[0].mxu0 %v3018
        %v4110 = vpop.f32.mrb[0].mxu0
        %v4111 = vadd.f32 %v4071, %v4110
        %v4112 = vpop.f32.mrb[0].mxu0
        %v4113 = vpop.f32.mrb[0].mxu0
        %v4114 = vpop.f32.mrb[0].mxu0
        %4115 = vdwg.mxu0
        %4116 = vmatprep.subr.bf16.mxu0 0
        %4117 = vmatpush1.bf16.msra.mxu0 %v3804
        %4118 = vmatprep.subr.bf16.mxu0 0
        %4119 = vmatpush1.bf16.msra.mxu0 %v3805
        %4120 = vmatprep.subr.bf16.mxu0 0
        %4121 = vmatpush1.bf16.msra.mxu0 %v3806
        %4122 = vmatprep.subr.bf16.mxu0 0
        %4123 = vmatpush1.bf16.msra.mxu0 %v3807
        %4124 = vmatprep.subr.bf16.mxu0 0
        %4125 = vmatpush1.bf16.msra.mxu0 %v3808
        %4126 = vmatprep.subr.bf16.mxu0 0
        %4127 = vmatpush1.bf16.msra.mxu0 %v3809
        %4128 = vmatprep.subr.bf16.mxu0 0
        %4129 = vmatpush1.bf16.msra.mxu0 %v3810
        %4130 = vmatprep.subr.bf16.mxu0 0
        %4131 = vmatpush1.bf16.msra.mxu0 %v3811
        %4132 = vmatprep.subr.bf16.mxu0 0
        %4133 = vmatpush1.bf16.msra.mxu0 %v3812
        %4134 = vmatprep.subr.bf16.mxu0 0
        %4135 = vmatpush1.bf16.msra.mxu0 %v3813
        %4136 = vmatprep.subr.bf16.mxu0 0
        %4137 = vmatpush1.bf16.msra.mxu0 %v3814
        %4138 = vmatprep.subr.bf16.mxu0 0
        %4139 = vmatpush1.bf16.msra.mxu0 %v3815
        %4140 = vmatprep.subr.bf16.mxu0 0
        %4141 = vmatpush1.bf16.msra.mxu0 %v3816
        %4142 = vmatprep.subr.bf16.mxu0 0
        %4143 = vmatpush1.bf16.msra.mxu0 %v3817
        %4144 = vmatprep.subr.bf16.mxu0 0
        %4145 = vmatpush1.bf16.msra.mxu0 %v3818
        %4146 = vmatprep.subr.bf16.mxu0 0
        %4147 = vmatpush1.bf16.msra.mxu0 %v3819
        %4148 = vmatprep.mubr.bf16.mxu0 %v3021
        %4149 = vmatmul.mubr.bf16.gmra.mrb[0].mxu0 %v3020
        %v4150 = vpop.f32.mrb[0].mxu0
        %v4151 = vadd.f32 %v4111, %v4150
        %v4152 = vpop.f32.mrb[0].mxu0
        %v4153 = vpop.f32.mrb[0].mxu0
        %v4154 = vpop.f32.mrb[0].mxu0
        %4155 = vdwg.mxu0
        %4156 = vmatprep.subr.bf16.mxu0 0
        %4157 = vmatpush1.bf16.msra.mxu0 %v3820
        %4158 = vmatprep.subr.bf16.mxu0 0
        %4159 = vmatpush1.bf16.msra.mxu0 %v3821
        %4160 = vmatprep.subr.bf16.mxu0 0
        %4161 = vmatpush1.bf16.msra.mxu0 %v3822
        %4162 = vmatprep.subr.bf16.mxu0 0
        %4163 = vmatpush1.bf16.msra.mxu0 %v3823
        %4164 = vmatprep.subr.bf16.mxu0 0
        %4165 = vmatpush1.bf16.msra.mxu0 %v3824
        %4166 = vmatprep.subr.bf16.mxu0 0
        %4167 = vmatpush1.bf16.msra.mxu0 %v3825
        %4168 = vmatprep.subr.bf16.mxu0 0
        %4169 = vmatpush1.bf16.msra.mxu0 %v3826
        %4170 = vmatprep.subr.bf16.mxu0 0
        %4171 = vmatpush1.bf16.msra.mxu0 %v3827
        %4172 = vmatprep.subr.bf16.mxu0 0
        %4173 = vmatpush1.bf16.msra.mxu0 %v3828
        %4174 = vmatprep.subr.bf16.mxu0 0
        %4175 = vmatpush1.bf16.msra.mxu0 %v3829
        %4176 = vmatprep.subr.bf16.mxu0 0
        %4177 = vmatpush1.bf16.msra.mxu0 %v3830
        %4178 = vmatprep.subr.bf16.mxu0 0
        %4179 = vmatpush1.bf16.msra.mxu0 %v3831
        %4180 = vmatprep.subr.bf16.mxu0 0
        %4181 = vmatpush1.bf16.msra.mxu0 %v3832
        %4182 = vmatprep.subr.bf16.mxu0 0
        %4183 = vmatpush1.bf16.msra.mxu0 %v3833
        %4184 = vmatprep.subr.bf16.mxu0 0
        %4185 = vmatpush1.bf16.msra.mxu0 %v3834
        %4186 = vmatprep.subr.bf16.mxu0 0
        %4187 = vmatpush1.bf16.msra.mxu0 %v3835
        %4188 = vmatprep.mubr.bf16.mxu0 %v3023
        %4189 = vmatmul.mubr.bf16.gmra.mrb[0].mxu0 %v3022
        %v4190 = vpop.f32.mrb[0].mxu0
        %v4191 = vadd.f32 %v4151, %v4190
        %v4192 = vpop.f32.mrb[0].mxu0
        %v4193 = vpop.f32.mrb[0].mxu0
        %v4194 = vpop.f32.mrb[0].mxu0
        %4195 = vdwg.mxu0
        %4196 = vmatprep.subr.bf16.mxu0 0
        %4197 = vmatpush1.bf16.msra.mxu0 %v3836
        %4198 = vmatprep.subr.bf16.mxu0 0
        %4199 = vmatpush1.bf16.msra.mxu0 %v3837
        %4200 = vmatprep.subr.bf16.mxu0 0
        %4201 = vmatpush1.bf16.msra.mxu0 %v3838
        %4202 = vmatprep.subr.bf16.mxu0 0
        %4203 = vmatpush1.bf16.msra.mxu0 %v3839
        %4204 = vmatprep.subr.bf16.mxu0 0
        %4205 = vmatpush1.bf16.msra.mxu0 %v3840
        %4206 = vmatprep.subr.bf16.mxu0 0
        %4207 = vmatpush1.bf16.msra.mxu0 %v3841
        %4208 = vmatprep.subr.bf16.mxu0 0
        %4209 = vmatpush1.bf16.msra.mxu0 %v3842
        %4210 = vmatprep.subr.bf16.mxu0 0
        %4211 = vmatpush1.bf16.msra.mxu0 %v3843
        %4212 = vmatprep.subr.bf16.mxu0 0
        %4213 = vmatpush1.bf16.msra.mxu0 %v3844
        %4214 = vmatprep.subr.bf16.mxu0 0
        %4215 = vmatpush1.bf16.msra.mxu0 %v3845
        %4216 = vmatprep.subr.bf16.mxu0 0
        %4217 = vmatpush1.bf16.msra.mxu0 %v3846
        %4218 = vmatprep.subr.bf16.mxu0 0
        %4219 = vmatpush1.bf16.msra.mxu0 %v3847
        %4220 = vmatprep.subr.bf16.mxu0 0
        %4221 = vmatpush1.bf16.msra.mxu0 %v3848
        %4222 = vmatprep.subr.bf16.mxu0 0
        %4223 = vmatpush1.bf16.msra.mxu0 %v3849
        %4224 = vmatprep.subr.bf16.mxu0 0
        %4225 = vmatpush1.bf16.msra.mxu0 %v3850
        %4226 = vmatprep.subr.bf16.mxu0 0
        %4227 = vmatpush1.bf16.msra.mxu0 %v3851
        %4228 = vmatprep.mubr.bf16.mxu0 %v3025
        %4229 = vmatmul.mubr.bf16.gmra.mrb[0].mxu0 %v3024
        %v4230 = vpop.f32.mrb[0].mxu0
        %v4231 = vadd.f32 %v4191, %v4230
        %v4232 = vpop.f32.mrb[0].mxu0
        %v4233 = vpop.f32.mrb[0].mxu0
        %v4234 = vpop.f32.mrb[0].mxu0
        %4235 = vdwg.mxu0
        %4236 = vmatprep.subr.bf16.mxu0 0
        %4237 = vmatpush1.bf16.msra.mxu0 %v3852
        %4238 = vmatprep.subr.bf16.mxu0 0
        %4239 = vmatpush1.bf16.msra.mxu0 %v3853
        %4240 = vmatprep.subr.bf16.mxu0 0
        %4241 = vmatpush1.bf16.msra.mxu0 %v3854
        %4242 = vmatprep.subr.bf16.mxu0 0
        %4243 = vmatpush1.bf16.msra.mxu0 %v3855
        %4244 = vmatprep.subr.bf16.mxu0 0
        %4245 = vmatpush1.bf16.msra.mxu0 %v3856
        %4246 = vmatprep.subr.bf16.mxu0 0
        %4247 = vmatpush1.bf16.msra.mxu0 %v3857
        %4248 = vmatprep.subr.bf16.mxu0 0
        %4249 = vmatpush1.bf16.msra.mxu0 %v3858
        %4250 = vmatprep.subr.bf16.mxu0 0
        %4251 = vmatpush1.bf16.msra.mxu0 %v3859
        %4252 = vmatprep.subr.bf16.mxu0 0
        %4253 = vmatpush1.bf16.msra.mxu0 %v3860
        %4254 = vmatprep.subr.bf16.mxu0 0
        %4255 = vmatpush1.bf16.msra.mxu0 %v3861
        %4256 = vmatprep.subr.bf16.mxu0 0
        %4257 = vmatpush1.bf16.msra.mxu0 %v3862
        %4258 = vmatprep.subr.bf16.mxu0 0
        %4259 = vmatpush1.bf16.msra.mxu0 %v3863
        %4260 = vmatprep.subr.bf16.mxu0 0
        %4261 = vmatpush1.bf16.msra.mxu0 %v3864
        %4262 = vmatprep.subr.bf16.mxu0 0
        %4263 = vmatpush1.bf16.msra.mxu0 %v3865
        %4264 = vmatprep.subr.bf16.mxu0 0
        %4265 = vmatpush1.bf16.msra.mxu0 %v3866
        %4266 = vmatprep.subr.bf16.mxu0 0
        %4267 = vmatpush1.bf16.msra.mxu0 %v3867
        %4268 = vmatprep.mubr.bf16.mxu0 %v3027
        %4269 = vmatmul.mubr.bf16.gmra.mrb[0].mxu0 %v3026
        %v4270 = vpop.f32.mrb[0].mxu0
        %v4271 = vadd.f32 %v4231, %v4270
        %v4272 = vpop.f32.mrb[0].mxu0
        %v4273 = vpop.f32.mrb[0].mxu0
        %v4274 = vpop.f32.mrb[0].mxu0
        %4275 = vdwg.mxu0
        %4276 = vmatprep.subr.bf16.mxu0 0
        %4277 = vmatpush1.bf16.msra.mxu0 %v3868
        %4278 = vmatprep.subr.bf16.mxu0 0
        %4279 = vmatpush1.bf16.msra.mxu0 %v3869
        %4280 = vmatprep.subr.bf16.mxu0 0
        %4281 = vmatpush1.bf16.msra.mxu0 %v3870
        %4282 = vmatprep.subr.bf16.mxu0 0
        %4283 = vmatpush1.bf16.msra.mxu0 %v3871
        %4284 = vmatprep.subr.bf16.mxu0 0
        %4285 = vmatpush1.bf16.msra.mxu0 %v3872
        %4286 = vmatprep.subr.bf16.mxu0 0
        %4287 = vmatpush1.bf16.msra.mxu0 %v3873
        %4288 = vmatprep.subr.bf16.mxu0 0
        %4289 = vmatpush1.bf16.msra.mxu0 %v3874
        %4290 = vmatprep.subr.bf16.mxu0 0
        %4291 = vmatpush1.bf16.msra.mxu0 %v3875
        %4292 = vmatprep.subr.bf16.mxu0 0
        %4293 = vmatpush1.bf16.msra.mxu0 0
        %4294 = vmatprep.subr.bf16.mxu0 0
        %4295 = vmatpush1.bf16.msra.mxu0 0
        %4296 = vmatprep.subr.bf16.mxu0 0
        %4297 = vmatpush1.bf16.msra.mxu0 0
        %4298 = vmatprep.subr.bf16.mxu0 0
        %4299 = vmatpush1.bf16.msra.mxu0 0
        %4300 = vmatprep.subr.bf16.mxu0 0
        %4301 = vmatpush1.bf16.msra.mxu0 0
        %4302 = vmatprep.subr.bf16.mxu0 0
        %4303 = vmatpush1.bf16.msra.mxu0 0
        %4304 = vmatprep.subr.bf16.mxu0 0
        %4305 = vmatpush1.bf16.msra.mxu0 0
        %4306 = vmatprep.subr.bf16.mxu0 0
        %4307 = vmatpush1.bf16.msra.mxu0 0
        %4308 = vmatprep.mubr.bf16.mxu0 0
        %4309 = vmatmul.mubr.bf16.gmra.mrb[0].mxu0 %v3028
        %v4310 = vpop.f32.mrb[0].mxu0
        %v4311 = vadd.f32 %v4271, %v4310
        %v4312 = vpop.f32.mrb[0].mxu0
        %v4313 = vpop.f32.mrb[0].mxu0
        %v4314 = vpop.f32.mrb[0].mxu0
        %4315 = vdwg.mxu0
        %v4316 = vmax.f32 %v4311, 0.0
        %v4317 = vpack.c.bf16 %v4316, %v4316
        %v4318 = vld [vmem:[#allocation11] sm:$0xff]
        %v4319 = vld [vmem:[#allocation11 + $0x8] sm:$0xff]
        %v4320 = vld [vmem:[#allocation11 + $0x10] sm:$0xff]
        %v4321 = vld [vmem:[#allocation11 + $0x18] sm:$0xff]
        %v4322 = vld [vmem:[#allocation11 + $0x20] sm:$0xff]
        %v4323 = vld [vmem:[#allocation11 + $0x28] sm:$0xff]
        %v4324 = vld [vmem:[#allocation11 + $0x30] sm:$0xff]
        %v4325 = vld [vmem:[#allocation11 + $0x38] sm:$0xff]
        %v4326 = vld [vmem:[#allocation11 + $0x40] sm:$0xff]
        %v4327 = vld [vmem:[#allocation11 + $0x48] sm:$0xff]
        %v4328 = vld [vmem:[#allocation11 + $0x50] sm:$0xff]
        %v4329 = vld [vmem:[#allocation11 + $0x58] sm:$0xff]
        %v4330 = vld [vmem:[#allocation11 + $0x60] sm:$0xff]
        %v4331 = vld [vmem:[#allocation11 + $0x68] sm:$0xff]
        %v4332 = vld [vmem:[#allocation11 + $0x70] sm:$0xff]
        %v4333 = vld [vmem:[#allocation11 + $0x78] sm:$0xff]
        %v4334 = vld [vmem:[%s8] sm:$0x3]
        %v4336 = vlaneseq
        %v4337 = vshrl.u32 %v4336, 7
        %v4338 = vsub.s32 0, %v4337
        %v4339 = vrot.slane %v4334, %v4338
        %v4340 = vlaneseq
        %v4341 = vshrl.u32 %v4340, 7
        %v4342 = vsub.s32 1, %v4341
        %v4343 = vrot.slane %v4334, %v4342
        %v4362 = vunpack.c.l.b16 %v4318
        %v4363 = vunpack.c.h.b16 %v4318
        %v4364 = vunpack.c.l.b16 %v4319
        %v4365 = vunpack.c.h.b16 %v4319
        %v4366 = vunpack.c.l.b16 %v4320
        %v4367 = vunpack.c.h.b16 %v4320
        %v4368 = vunpack.c.l.b16 %v4321
        %v4369 = vunpack.c.h.b16 %v4321
        %v4370 = vunpack.c.l.b16 %v4322
        %v4371 = vunpack.c.h.b16 %v4322
        %v4372 = vunpack.c.l.b16 %v4323
        %v4373 = vunpack.c.h.b16 %v4323
        %v4374 = vunpack.c.l.b16 %v4324
        %v4375 = vunpack.c.h.b16 %v4324
        %v4376 = vunpack.c.l.b16 %v4325
        %v4377 = vunpack.c.h.b16 %v4325
        %v4378 = vunpack.c.l.b16 %v4326
        %v4379 = vunpack.c.h.b16 %v4326
        %v4380 = vunpack.c.l.b16 %v4327
        %v4381 = vunpack.c.h.b16 %v4327
        %v4382 = vunpack.c.l.b16 %v4328
        %v4383 = vunpack.c.h.b16 %v4328
        %v4384 = vunpack.c.l.b16 %v4329
        %v4385 = vunpack.c.h.b16 %v4329
        %v4386 = vunpack.c.l.b16 %v4330
        %v4387 = vunpack.c.h.b16 %v4330
        %v4388 = vunpack.c.l.b16 %v4331
        %v4389 = vunpack.c.h.b16 %v4331
        %v4390 = vunpack.c.l.b16 %v4332
        %v4391 = vunpack.c.h.b16 %v4332
        %v4392 = vunpack.c.l.b16 %v4333
        %v4393 = vunpack.c.h.b16 %v4333
        %v4394 = vpack.c.b16 %v4364, %v4362
        %v4395 = vpack.c.b16 %v4365, %v4363
        %v4396 = vpack.c.b16 %v4368, %v4366
        %v4397 = vpack.c.b16 %v4369, %v4367
        %v4398 = vpack.c.b16 %v4372, %v4370
        %v4399 = vpack.c.b16 %v4373, %v4371
        %v4400 = vpack.c.b16 %v4376, %v4374
        %v4401 = vpack.c.b16 %v4377, %v4375
        %v4402 = vpack.c.b16 %v4380, %v4378
        %v4403 = vpack.c.b16 %v4381, %v4379
        %v4404 = vpack.c.b16 %v4384, %v4382
        %v4405 = vpack.c.b16 %v4385, %v4383
        %v4406 = vpack.c.b16 %v4388, %v4386
        %v4407 = vpack.c.b16 %v4389, %v4387
        %v4408 = vpack.c.b16 %v4392, %v4390
        %v4409 = vpack.c.b16 %v4393, %v4391
        %4426 = vmatprep.subr.bf16.mxu0 %v4395
        %4427 = vmatpush1.bf16.msra.mxu0 %v4394
        %4428 = vmatprep.subr.bf16.mxu0 %v4397
        %4429 = vmatpush1.bf16.msra.mxu0 %v4396
        %4430 = vmatprep.subr.bf16.mxu0 %v4399
        %4431 = vmatpush1.bf16.msra.mxu0 %v4398
        %4432 = vmatprep.subr.bf16.mxu0 %v4401
        %4433 = vmatpush1.bf16.msra.mxu0 %v4400
        %4434 = vmatprep.subr.bf16.mxu0 %v4403
        %4435 = vmatpush1.bf16.msra.mxu0 %v4402
        %4436 = vmatprep.subr.bf16.mxu0 %v4405
        %4437 = vmatpush1.bf16.msra.mxu0 %v4404
        %4438 = vmatprep.subr.bf16.mxu0 %v4407
        %4439 = vmatpush1.bf16.msra.mxu0 %v4406
        %4440 = vmatprep.subr.bf16.mxu0 %v4409
        %4441 = vmatpush1.bf16.msra.mxu0 %v4408
        %4442 = vmatprep.subr.bf16.mxu0 0
        %4443 = vmatpush1.bf16.msra.mxu0 0
        %4444 = vmatprep.subr.bf16.mxu0 0
        %4445 = vmatpush1.bf16.msra.mxu0 0
        %4446 = vmatprep.subr.bf16.mxu0 0
        %4447 = vmatpush1.bf16.msra.mxu0 0
        %4448 = vmatprep.subr.bf16.mxu0 0
        %4449 = vmatpush1.bf16.msra.mxu0 0
        %4450 = vmatprep.subr.bf16.mxu0 0
        %4451 = vmatpush1.bf16.msra.mxu0 0
        %4452 = vmatprep.subr.bf16.mxu0 0
        %4453 = vmatpush1.bf16.msra.mxu0 0
        %4454 = vmatprep.subr.bf16.mxu0 0
        %4455 = vmatpush1.bf16.msra.mxu0 0
        %4456 = vmatprep.subr.bf16.mxu0 0
        %4457 = vmatpush1.bf16.msra.mxu0 0
        %4458 = vmatprep.mubr.bf16.mxu0 0
        %4459 = vmatmul.mubr.bf16.gmra.mrb[0].mxu0 %v4317
        %v4460 = vpop.f32.mrb[0].mxu0
        %v4461 = vadd.f32 %v4339, %v4460
        %v4462 = vpop.f32.mrb[0].mxu0
        %v4463 = vadd.f32 %v4343, %v4462
        %v4464 = vpop.f32.mrb[0].mxu0
        %v4465 = vpop.f32.mrb[0].mxu0
        %4466 = vdwg.mxu0
        %v4467 = vmax.f32 %v4461, 0.0
        %v4468 = vmax.f32 %v4463, 0.0
        %v4469 = vpack.c.bf16 %v4467, %v4467
        %v4470 = vpack.c.bf16 %v4468, %v4468
        %v4471 = vld [vmem:[#allocation13] sm:$0xf]
        %v4472 = vld [vmem:[#allocation13 + $0x4] sm:$0xf]
        %v4473 = vld [vmem:[#allocation13 + $0x8] sm:$0xf]
        %v4474 = vld [vmem:[#allocation13 + $0xc] sm:$0xf]
        %v4475 = vld [vmem:[#allocation13 + $0x10] sm:$0xf]
        %v4476 = vld [vmem:[#allocation13 + $0x14] sm:$0xf]
        %v4477 = vld [vmem:[#allocation13 + $0x18] sm:$0xf]
        %v4478 = vld [vmem:[#allocation13 + $0x1c] sm:$0xf]
        %v4479 = vld [vmem:[#allocation13 + $0x20] sm:$0xf]
        %v4480 = vld [vmem:[#allocation13 + $0x24] sm:$0xf]
        %v4481 = vld [vmem:[#allocation13 + $0x28] sm:$0xf]
        %v4482 = vld [vmem:[#allocation13 + $0x2c] sm:$0xf]
        %v4483 = vld [vmem:[#allocation13 + $0x30] sm:$0xf]
        %v4484 = vld [vmem:[#allocation13 + $0x34] sm:$0xf]
        %v4485 = vld [vmem:[#allocation13 + $0x38] sm:$0xf]
        %v4486 = vld [vmem:[#allocation13 + $0x3c] sm:$0xf]
        %v4487 = vld [vmem:[#allocation13 + $0x40] sm:$0xf]
        %v4488 = vld [vmem:[#allocation13 + $0x44] sm:$0xf]
        %v4489 = vld [vmem:[#allocation13 + $0x48] sm:$0xf]
        %v4490 = vld [vmem:[#allocation13 + $0x4c] sm:$0xf]
        %v4491 = vld [vmem:[#allocation13 + $0x50] sm:$0xf]
        %v4492 = vld [vmem:[#allocation13 + $0x54] sm:$0xf]
        %v4493 = vld [vmem:[#allocation13 + $0x58] sm:$0xf]
        %v4494 = vld [vmem:[#allocation13 + $0x5c] sm:$0xf]
        %v4495 = vld [vmem:[#allocation13 + $0x60] sm:$0xf]
        %v4496 = vld [vmem:[#allocation13 + $0x64] sm:$0xf]
        %v4497 = vld [vmem:[#allocation13 + $0x68] sm:$0xf]
        %v4498 = vld [vmem:[#allocation13 + $0x6c] sm:$0xf]
        %v4499 = vld [vmem:[#allocation13 + $0x70] sm:$0xf]
        %v4500 = vld [vmem:[#allocation13 + $0x74] sm:$0xf]
        %v4501 = vld [vmem:[#allocation13 + $0x78] sm:$0xf]
        %v4502 = vld [vmem:[#allocation13 + $0x7c] sm:$0xf]
        %v4503 = vld [vmem:[%s10] sm:$0x1]
        %v4505 = vlaneseq
        %v4506 = vshrl.u32 %v4505, 7
        %v4507 = vsub.s32 0, %v4506
        %v4508 = vrot.slane %v4503, %v4507
        %v4542 = vunpack.c.l.b16 %v4471
        %v4543 = vunpack.c.l.b16 %v4472
        %v4544 = vunpack.c.l.b16 %v4473
        %v4545 = vunpack.c.l.b16 %v4474
        %v4546 = vunpack.c.l.b16 %v4475
        %v4547 = vunpack.c.l.b16 %v4476
        %v4548 = vunpack.c.l.b16 %v4477
        %v4549 = vunpack.c.l.b16 %v4478
        %v4550 = vunpack.c.l.b16 %v4479
        %v4551 = vunpack.c.l.b16 %v4480
        %v4552 = vunpack.c.l.b16 %v4481
        %v4553 = vunpack.c.l.b16 %v4482
        %v4554 = vunpack.c.l.b16 %v4483
        %v4555 = vunpack.c.l.b16 %v4484
        %v4556 = vunpack.c.l.b16 %v4485
        %v4557 = vunpack.c.l.b16 %v4486
        %v4558 = vunpack.c.l.b16 %v4487
        %v4559 = vunpack.c.l.b16 %v4488
        %v4560 = vunpack.c.l.b16 %v4489
        %v4561 = vunpack.c.l.b16 %v4490
        %v4562 = vunpack.c.l.b16 %v4491
        %v4563 = vunpack.c.l.b16 %v4492
        %v4564 = vunpack.c.l.b16 %v4493
        %v4565 = vunpack.c.l.b16 %v4494
        %v4566 = vunpack.c.l.b16 %v4495
        %v4567 = vunpack.c.l.b16 %v4496
        %v4568 = vunpack.c.l.b16 %v4497
        %v4569 = vunpack.c.l.b16 %v4498
        %v4570 = vunpack.c.l.b16 %v4499
        %v4571 = vunpack.c.l.b16 %v4500
        %v4572 = vunpack.c.l.b16 %v4501
        %v4573 = vunpack.c.l.b16 %v4502
        %v4574 = vpack.c.b16 %v4543, %v4542
        %v4575 = vpack.c.b16 %v4545, %v4544
        %v4576 = vpack.c.b16 %v4547, %v4546
        %v4577 = vpack.c.b16 %v4549, %v4548
        %v4578 = vpack.c.b16 %v4551, %v4550
        %v4579 = vpack.c.b16 %v4553, %v4552
        %v4580 = vpack.c.b16 %v4555, %v4554
        %v4581 = vpack.c.b16 %v4557, %v4556
        %v4582 = vpack.c.b16 %v4559, %v4558
        %v4583 = vpack.c.b16 %v4561, %v4560
        %v4584 = vpack.c.b16 %v4563, %v4562
        %v4585 = vpack.c.b16 %v4565, %v4564
        %v4586 = vpack.c.b16 %v4567, %v4566
        %v4587 = vpack.c.b16 %v4569, %v4568
        %v4588 = vpack.c.b16 %v4571, %v4570
        %v4589 = vpack.c.b16 %v4573, %v4572
        %4606 = vmatprep.subr.bf16.mxu0 0
        %4607 = vmatpush1.bf16.msra.mxu0 %v4574
        %4608 = vmatprep.subr.bf16.mxu0 0
        %4609 = vmatpush1.bf16.msra.mxu0 %v4575
        %4610 = vmatprep.subr.bf16.mxu0 0
        %4611 = vmatpush1.bf16.msra.mxu0 %v4576
        %4612 = vmatprep.subr.bf16.mxu0 0
        %4613 = vmatpush1.bf16.msra.mxu0 %v4577
        %4614 = vmatprep.subr.bf16.mxu0 0
        %4615 = vmatpush1.bf16.msra.mxu0 %v4578
        %4616 = vmatprep.subr.bf16.mxu0 0
        %4617 = vmatpush1.bf16.msra.mxu0 %v4579
        %4618 = vmatprep.subr.bf16.mxu0 0
        %4619 = vmatpush1.bf16.msra.mxu0 %v4580
        %4620 = vmatprep.subr.bf16.mxu0 0
        %4621 = vmatpush1.bf16.msra.mxu0 %v4581
        %4622 = vmatprep.subr.bf16.mxu0 0
        %4623 = vmatpush1.bf16.msra.mxu0 %v4582
        %4624 = vmatprep.subr.bf16.mxu0 0
        %4625 = vmatpush1.bf16.msra.mxu0 %v4583
        %4626 = vmatprep.subr.bf16.mxu0 0
        %4627 = vmatpush1.bf16.msra.mxu0 %v4584
        %4628 = vmatprep.subr.bf16.mxu0 0
        %4629 = vmatpush1.bf16.msra.mxu0 %v4585
        %4630 = vmatprep.subr.bf16.mxu0 0
        %4631 = vmatpush1.bf16.msra.mxu0 %v4586
        %4632 = vmatprep.subr.bf16.mxu0 0
        %4633 = vmatpush1.bf16.msra.mxu0 %v4587
        %4634 = vmatprep.subr.bf16.mxu0 0
        %4635 = vmatpush1.bf16.msra.mxu0 %v4588
        %4636 = vmatprep.subr.bf16.mxu0 0
        %4637 = vmatpush1.bf16.msra.mxu0 %v4589
        %4638 = vmatprep.mubr.bf16.mxu0 %v4470
        %4639 = vmatmul.mubr.bf16.gmra.mrb[0].mxu0 %v4469
        %v4640 = vpop.f32.mrb[0].mxu0
        %v4641 = vadd.f32 %v4508, %v4640
        %v4642 = vpop.f32.mrb[0].mxu0
        %v4643 = vpop.f32.mrb[0].mxu0
        %v4644 = vpop.f32.mrb[0].mxu0
        %4645 = vdwg.mxu0
        %4646 = vst [vmem:[%s489] sm:$0xff] %v4641
        %s4647 = sand.u32 %s275, 1
        %s4648 = scalar_lea.sflag [#allocation4], %s4647
        %s4649 = sand.u32 %s275, 1
        %s4650 = smul.addr %s4649, 8
        %s4651 = scalar_lea.vmem [#allocation14], %s4650
        // Predicated region
        $region93: #{tpu_custom_call.1} parent=63 // pred_check
          %p4652 = pneg %p285
        $region94: #{tpu_custom_call.1} parent=63 // pred_check_branch
          %4654 = sbr.rel (%p4652) target = $region96
        $region95: #{tpu_custom_call.1} parent=63 // pred_region
          %s4656 = ssub.s32 128, 128
          %4657 = vsyncadd %s4648, %s4656
          %s4658 = smul.addr %s31, 128
          %s4659 = scalar_lea.hbm %s11, %s4658
          %s4661 = sshll.u32 %s4651, 4
          %s4662 = int_to_ptr.vmem [resolvable:$true] %s4661
          %4664 = dma.vmem_to_hbm [thread:$0]  %s4662, 128, %s4659, %s4648
        $region96: #{tpu_custom_call.1} parent=63 // pred_fallthru
          _
      $region64: #{tpu_custom_call.1} parent=5 // pred_fallthru
        _
      %p4665 = scmp.le.s32.totalorder 2, %s26
      // Predicated region
      $region97: #{tpu_custom_call.1} parent=5 // pred_check
        %p4666 = pneg %p4665
      $region98: #{tpu_custom_call.1} parent=5 // pred_check_branch
        %4668 = sbr.rel (%p4666) target = $region100
      $region99: #{tpu_custom_call.1} parent=5 // pred_region
        %s4669 = ssub.s32 %s26, 2
        // Predicated region
        $region101: #{tpu_custom_call.1} parent=99 // pred_check
          %p4670 = pneg %p291
        $region102: #{tpu_custom_call.1} parent=99 // pred_check_branch
          %4672 = sbr.rel (%p4670) target = $region104
        $region103: #{tpu_custom_call.1} parent=99 // pred_region
          %s4673 = sand.u32 %s276, 1
          %s4674 = scalar_lea.sflag [#allocation4], %s4673
          %s4675 = sand.u32 %s276, 1
          %s4676 = smul.addr %s4675, 8
          %s4677 = scalar_lea.vmem [#allocation14], %s4676
          %4678 = dma.done %s4674, 128
        $region104: #{tpu_custom_call.1} parent=99 // pred_fallthru
          _
      $region100: #{tpu_custom_call.1} parent=5 // pred_fallthru
        _
    $region6: #{tpu_custom_call.1} parent=1 // loop_footer
      %s30 = sadd.s32 1, %s26
    $region7: #{tpu_custom_call.1} parent=1 // loop_footer_branch
      %25 = sbr.rel target = $region3
    $region8: #{tpu_custom_call.1} parent=1 // loop_exit
      _
    %4679 = vsyncpa [#allocation3], 1
    %s4680 = scalar_lea.sflag [#allocation3], 1
    %4681 = vsyncpa %s4680, 1
    %4682 = vsyncpa [#allocation6], 1
    %4683 = vsyncpa [#allocation9], 1
    %4684 = vsyncpa [#allocation12], 1
    %4685 = vsyncpa [#allocation4], 1
    %s4686 = scalar_lea.sflag [#allocation4], 1
    %4687 = vsyncpa %s4686, 1

</llo_original>
